<compile_context>
chip_gen: v7x
topology: tpu7x:2x2x1
jax: 0.10.0
libtpu: 0.0.40
codegen_flags: <defaults>
</compile_context>

<pallas_src>
import functools

import jax
import jax.numpy as jnp
from jax.experimental import pallas as pl
from jax.experimental.pallas import tpu as pltpu


def _round_up(x, m):
    return ((x + m - 1) // m) * m


def _vmem_limit_bytes():
    cap = 64 * 1024 * 1024
    try:
        cap = int(pltpu.get_tpu_info().vmem_capacity_bytes)
    except Exception:
        pass
    return max(32 * 1024 * 1024, min((cap * 3) // 4, 96 * 1024 * 1024))


_VMEM_LIMIT = _vmem_limit_bytes()


def _pick_h_tile(h, bytes_per_row, budget):
    """Largest divisor of h whose double-buffered block fits the byte budget."""
    best = 1
    for t in range(1, h + 1):
        if h % t == 0 and 2 * t * bytes_per_row <= budget:
            best = t
    return best


# ----------------------------------------------------------------------------
# Fused mlp_shared (Conv3x3+ReLU) + mlp_gamma|mlp_beta (Conv3x3) kernel
# ----------------------------------------------------------------------------

def _spade_conv_kernel(seg_ref, mask_ref, w1_ref, b1_ref, w2_ref, b2_ref,
                       o_ref, *, wp, mc, lm):
    # seg_ref : (1, Lin, K1)    bf16  im2col'ed segmap over the padded domain
    # mask_ref: (Lin, 1)        f32   1.0 on valid pixels, 0.0 on the pad ring
    # w1_ref  : (K1, nh)        bf16
    # b1_ref  : (1, nh)         f32
    # w2_ref  : (3, 3*nh, TCo)  bf16  dx taps packed along K, one slab per dy
    # b2_ref  : (1, TCo)        f32
    # o_ref   : (1, Mc, TCo)    bf16  [gamma|beta|0-pad] in padded-width layout
    tco = o_ref.shape[2]

    # mlp_shared: one deep matmul + bias + ReLU; actv pad ring forced to zero.
    z = jnp.dot(seg_ref[0], w1_ref[...], preferred_element_type=jnp.float32)
    actv = (jnp.maximum(z + b1_ref[...], 0.0) * mask_ref[...]
            ).astype(jnp.bfloat16)                               # (Lin, nh)

    # dx-unfold built once: x3[m, dx*nh + c] = actv[m + dx, c].
    x3 = jnp.concatenate(
        [actv[0:lm], actv[1:1 + lm], actv[2:2 + lm]], axis=-1)   # (Lm, 3*nh)

    # gamma|beta conv: 3 K=3*nh matmuls; dy*wp offsets are sublane-aligned.
    acc = jnp.zeros((mc, tco), jnp.float32) + b2_ref[...]        # bias folded
    for dy in range(3):                                          # static unroll
        off = dy * wp
        acc = acc + jnp.dot(x3[off:off + mc, :], w2_ref[dy],
                            preferred_element_type=jnp.float32)
    o_ref[0] = acc.astype(o_ref.dtype)


def spade_convs(seg_r, shared_w, shared_b, gamma_w, gamma_b, beta_w, beta_b):
    """Fused ReLU(Conv3x3(seg)) -> Conv3x3 -> [gamma|beta] (stride 1, pad 1).

    Returns (N, H, Wp, Cp) bf16 with Cp = round_up(2*norm_nc, 128); lanes
    [0, nc) = gamma, [nc, 2nc) = beta, rest zero padding; columns [W, Wp) are
    junk and never read by the consumer.
    """
    N, H, W, label_nc = seg_r.shape
    nh = shared_w.shape[-1]
    nc = gamma_w.shape[-1]

    wp = _round_up(W + 2, 8)       # padded width (sublane-aligned dy offsets)
    lin = (H + 3) * wp             # rows of the flattened padded domain
    mc = H * wp                    # rows the kernel computes
    lm = (H + 2) * wp              # rows of the dx-unfolded view

    # gamma|beta weights fused and zero-padded to a lane-dense Cout.
    cp = _round_up(2 * nc, 128)
    w2 = jnp.concatenate([gamma_w, beta_w], axis=-1)             # (3,3,nh,2nc)
    w2 = jnp.pad(w2, ((0, 0), (0, 0), (0, 0), (0, cp - 2 * nc)))
    b2 = jnp.pad(jnp.concatenate([gamma_b, beta_b]), (0, cp - 2 * nc))
    w2p = w2.astype(jnp.bfloat16).reshape(3, 3 * nh, cp)         # dx packed in K
    b2p = b2.astype(jnp.float32).reshape(1, cp)

    # Shared conv as a dense matmul: im2col the tiny segmap on the XLA side and
    # lay it out over the padded-width domain the second conv needs.
    k1 = 9 * label_nc
    k1p = _round_up(k1, 8)
    seg_pad = jnp.pad(seg_r.astype(jnp.bfloat16),
                      ((0, 0), (1, 1), (1, 1), (0, 0)))
    patches = jnp.concatenate(
        [seg_pad[:, dy:dy + H, dx:dx + W, :]
         for dy in range(3) for dx in range(3)], axis=-1)        # (N,H,W,k1)
    patches = jnp.pad(patches, ((0, 0), (0, 0), (0, 0), (0, k1p - k1)))
    seg_cols = jnp.pad(patches, ((0, 0), (1, 2), (1, wp - W - 1), (0, 0)))
    seg_cols = seg_cols.reshape(N, lin, k1p)

    w1p = shared_w.astype(jnp.bfloat16).reshape(k1, nh)
    w1p = jnp.pad(w1p, ((0, k1p - k1), (0, 0)))
    b1p = shared_b.astype(jnp.float32).reshape(1, nh)

    # Validity mask of the padded domain (zeroes relu(bias) on the pad ring).
    rr = jnp.arange(H + 3)
    qq = jnp.arange(wp)
    mask = (((rr >= 1) & (rr <= H)).astype(jnp.float32)[:, None]
            * ((qq >= 1) & (qq <= W)).astype(jnp.float32)[None, :])
    mask = mask.reshape(lin, 1)

    tco = 256 if cp % 256 == 0 else 128
    n_co = cp // tco
    # NOTE: actv is recomputed per Cout tile; only happens when 2*norm_nc > 256
    # and the shared conv is a small fraction of the gamma/beta FLOPs.

    kernel = functools.partial(_spade_conv_kernel, wp=wp, mc=mc, lm=lm)
    out = pl.pallas_call(
        kernel,
        out_shape=jax.ShapeDtypeStruct((N, mc, cp), jnp.bfloat16),
        grid_spec=pl.GridSpec(
            grid=(N, n_co),
            in_specs=[
                pl.BlockSpec((1, lin, k1p), lambda n, c: (n, 0, 0)),
                pl.BlockSpec((lin, 1), lambda n, c: (0, 0)),
                pl.BlockSpec((k1p, nh), lambda n, c: (0, 0)),
                pl.BlockSpec((1, nh), lambda n, c: (0, 0)),
                pl.BlockSpec((3, 3 * nh, tco), lambda n, c: (0, 0, c)),
                pl.BlockSpec((1, tco), lambda n, c: (0, c)),
            ],
            out_specs=pl.BlockSpec((1, mc, tco), lambda n, c: (n, 0, c)),
        ),
        compiler_params=pltpu.CompilerParams(
            dimension_semantics=("parallel", "parallel"),
            vmem_limit_bytes=_VMEM_LIMIT),
    )(seg_cols, mask, w1p, b1p, w2p, b2p)
    return out.reshape(N, H, wp, cp)


# ----------------------------------------------------------------------------
# InstanceNorm statistics: tiled reduction over H (accumulator-in-output)
# ----------------------------------------------------------------------------

def _in_stats_kernel(x_ref, s_ref, q_ref):
    @pl.when(pl.program_id(1) == 0)
    def _():
        s_ref[...] = jnp.zeros_like(s_ref)
        q_ref[...] = jnp.zeros_like(q_ref)
    xv = x_ref[...].astype(jnp.float32)                    # (1, th, W, C)
    s_ref[...] += jnp.sum(xv, axis=(1, 2), keepdims=True)
    q_ref[...] += jnp.sum(xv * xv, axis=(1, 2), keepdims=True)


def instance_norm_stats(x):
    """Per-(n, c) sum and sum-of-squares over (H, W).  x: (N,H,W,C)."""
    N, H, W, C = x.shape
    th = _pick_h_tile(H, W * C * 4, _VMEM_LIMIT // 4)
    stat_shape = jax.ShapeDtypeStruct((N, 1, 1, C), jnp.float32)
    stat_spec = pl.BlockSpec((1, 1, 1, C), lambda n, j: (n, 0, 0, 0))
    return pl.pallas_call(
        _in_stats_kernel,
        out_shape=(stat_shape, stat_shape),
        grid_spec=pl.GridSpec(
            grid=(N, H // th),
            in_specs=[pl.BlockSpec((1, th, W, C), lambda n, j: (n, j, 0, 0))],
            out_specs=(stat_spec, stat_spec),
        ),
        compiler_params=pltpu.CompilerParams(
            dimension_semantics=("parallel", "arbitrary"),
            vmem_limit_bytes=_VMEM_LIMIT),
    )(x.astype(jnp.float32))


# ----------------------------------------------------------------------------
# Fused InstanceNorm-apply + SPADE modulation: (x-mean)*rsqrt(var)*(1+g)+b
# ----------------------------------------------------------------------------

def _spade_apply_kernel(x_ref, gb_ref, s_ref, q_ref, o_ref, *,
                        inv_count, eps, nc, w_crop):
    x = x_ref[...]                                         # (1, th, W, C) f32
    mean = s_ref[...] * inv_count                          # (1, 1, 1, C)
    var = jnp.maximum(q_ref[...] * inv_count - mean * mean, 0.0)
    inv = jax.lax.rsqrt(var + eps)
    gb = gb_ref[...].astype(jnp.float32)
    if w_crop is not None:                                 # only when W % 8 != 0
        gb = gb[:, :, :w_crop, :]
    gamma = gb[..., :nc]
    beta = gb[..., nc:2 * nc]
    o_ref[...] = ((x - mean) * inv * (1.0 + gamma) + beta).astype(o_ref.dtype)


def spade_apply(x, gb, s, q, eps=1e-5, out_dtype=None):
    """x: (N,H,W,C); gb: (N,H,Wp,Cp) bf16 from spade_convs."""
    N, H, W, C = x.shape
    wp, cp = gb.shape[2], gb.shape[3]
    out_dtype = out_dtype or x.dtype

    # Read only the valid gb columns when the (8,128) block rule allows it.
    gb_w = W if W % 8 == 0 else wp
    w_crop = None if gb_w == W else W

    bpr = W * C * 4 + gb_w * cp * 2 + W * C * jnp.dtype(out_dtype).itemsize
    th = _pick_h_tile(H, bpr, _VMEM_LIMIT // 4)

    kernel = functools.partial(_spade_apply_kernel, inv_count=1.0 / (H * W),
                               eps=eps, nc=C, w_crop=w_crop)
    stat_spec = pl.BlockSpec((1, 1, 1, C), lambda n, j: (n, 0, 0, 0))
    return pl.pallas_call(
        kernel,
        out_shape=jax.ShapeDtypeStruct((N, H, W, C), out_dtype),
        grid_spec=pl.GridSpec(
            grid=(N, H // th),
            in_specs=[
                pl.BlockSpec((1, th, W, C), lambda n, j: (n, j, 0, 0)),
                pl.BlockSpec((1, th, gb_w, cp), lambda n, j: (n, j, 0, 0)),
                stat_spec, stat_spec,
            ],
            out_specs=pl.BlockSpec((1, th, W, C), lambda n, j: (n, j, 0, 0)),
        ),
        compiler_params=pltpu.CompilerParams(
            dimension_semantics=("parallel", "parallel"),
            vmem_limit_bytes=_VMEM_LIMIT),
    )(x.astype(jnp.float32), gb, s, q)


# ----------------------------------------------------------------------------
# Glue (pure indexing) + module forward
# ----------------------------------------------------------------------------

def nearest_resize(seg, H, W):
    """F.interpolate(mode='nearest'): src = floor(dst * in/out)."""
    # TODO(synk): 'nearest-exact' (half-pixel offsets) would need +0.5 here.
    N, Hs, Ws, C = seg.shape
    if (Hs, Ws) == (H, W):
        return seg
    hi = (jnp.arange(H) * Hs) // H
    wi = (jnp.arange(W) * Ws) // W
    return jnp.take(jnp.take(seg, hi, axis=1), wi, axis=2)


def spade_forward(params, x, segmap, eps=1e-5, out_dtype=None):
    N, H, W, C = x.shape
    seg_r = nearest_resize(segmap, H, W)

    # 1) InstanceNorm statistics of x (tiled H reduction, f32 accumulators).
    s, q = instance_norm_stats(x)

    # 2) Fused mlp_shared + mlp_gamma|mlp_beta convs (actv never leaves VMEM).
    gb = spade_convs(seg_r, params["shared_w"], params["shared_b"],
                     params["gamma_w"], params["gamma_b"],
                     params["beta_w"], params["beta_b"])

    # 3) Fused InstanceNorm-apply + SPADE modulation.
    return spade_apply(x, gb, s, q, eps=eps, out_dtype=out_dtype)


# ----------------------------------------------------------------------------
# Pure-JAX reference with the same bf16/f32 dtype policy (for verification)
# ----------------------------------------------------------------------------

def spade_reference(params, x, segmap, eps=1e-5):
    N, H, W, C = x.shape
    seg_r = nearest_resize(segmap, H, W)

    def conv_ref(inp, w, b, relu):
        out = jax.lax.conv_general_dilated(
            inp.astype(jnp.bfloat16), w.astype(jnp.bfloat16),
            window_strides=(1, 1), padding="SAME",
            dimension_numbers=("NHWC", "HWIO", "NHWC"),
            preferred_element_type=jnp.float32) + b.astype(jnp.float32)
        if relu:
            out = jnp.maximum(out, 0.0)
        return out.astype(jnp.bfloat16)

    actv = conv_ref(seg_r, params["shared_w"], params["shared_b"], True)
    gamma = conv_ref(actv, params["gamma_w"], params["gamma_b"],
                     False).astype(jnp.float32)
    beta = conv_ref(actv, params["beta_w"], params["beta_b"],
                    False).astype(jnp.float32)

    xf = x.astype(jnp.float32)
    mean = jnp.mean(xf, axis=(1, 2), keepdims=True)
    var = jnp.mean(jnp.square(xf - mean), axis=(1, 2), keepdims=True)
    normed = (xf - mean) * jax.lax.rsqrt(var + eps)
    return normed * (1.0 + gamma) + beta


# ----------------------------------------------------------------------------
# Deterministic parameter init (mirrors the PyTorch module's convs)
# ----------------------------------------------------------------------------

def init_spade_params(key, norm_nc, label_nc, nhidden=128):
    k1, k2, k3, k4, k5, k6 = jax.random.split(key, 6)

    def conv_w(k, cin, cout):
        return jax.random.normal(k, (3, 3, cin, cout),
                                 jnp.float32) * (2.0 / (9 * cin)) ** 0.5

    def conv_b(k, cout):
        return jax.random.normal(k, (cout,), jnp.float32) * 0.01

    return dict(
        shared_w=conv_w(k1, label_nc, nhidden), shared_b=conv_b(k2, nhidden),
        gamma_w=conv_w(k3, nhidden, norm_nc), gamma_b=conv_b(k4, norm_nc),
        beta_w=conv_w(k5, nhidden, norm_nc), beta_b=conv_b(k6, norm_nc),
    )


# ----------------------------------------------------------------------------
# Main
# ----------------------------------------------------------------------------

if __name__ == "__main__":
    key = jax.random.PRNGKey(0)
    pkey, xkey, skey = jax.random.split(key, 3)

    N, H, W = 2, 16, 16
    norm_nc, label_nc = 32, 3

    params = init_spade_params(pkey, norm_nc, label_nc)

    # NHWC inputs (equivalent to PyTorch NCHW x:[2,32,16,16], seg:[2,3,32,32]).
    x = jax.random.normal(xkey, (N, H, W, norm_nc), jnp.float32)
    segmap = jax.random.normal(skey, (N, 2 * H, 2 * W, label_nc), jnp.float32)

    fwd = jax.jit(spade_forward)
    out = jax.block_until_ready(fwd(params, x, segmap))

    ref = jax.block_until_ready(jax.jit(spade_reference)(params, x, segmap))

    assert out.shape == (N, H, W, norm_nc)
    assert bool(jnp.all(jnp.isfinite(out)))
    max_err = float(jnp.max(jnp.abs(out - ref)))
    assert bool(jnp.allclose(out, ref, rtol=0.1, atol=0.1)), \
        f"mismatch vs reference, max abs err = {max_err}"
    print("KERNEL_OK")
</pallas_src>

<mosaic_0001>
module attributes {stable_mosaic.version = 11 : i64} {
  func.func @_spade_apply_kernel(%arg0: i32, %arg1: i32, %arg2: memref<1x16x16x32xf32, #tpu.memory_space<vmem>>, %arg3: memref<1x16x16x128xbf16, #tpu.memory_space<vmem>>, %arg4: memref<1x1x1x32xf32, #tpu.memory_space<vmem>>, %arg5: memref<1x1x1x32xf32, #tpu.memory_space<vmem>>, %arg6: memref<1x16x16x32xf32, #tpu.memory_space<vmem>>) attributes {dimension_semantics = [#tpu.dimension_semantics<parallel>, #tpu.dimension_semantics<parallel>], iteration_bounds = array<i64: 2, 1>, scalar_prefetch = 0 : i64, scratch_operands = 0 : i64, tpu.core_type = #tpu.core_type<tc>, window_params = [{transform_indices = @transform_0, window_bounds = array<i64: 1, 16, 16, 32>}, {transform_indices = @transform_1, window_bounds = array<i64: 1, 16, 16, 128>}, {transform_indices = @transform_2, window_bounds = array<i64: 1, 1, 1, 32>}, {transform_indices = @transform_3, window_bounds = array<i64: 1, 1, 1, 32>}, {transform_indices = @transform_4, window_bounds = array<i64: 1, 16, 16, 32>}]} {
    %c0 = arith.constant 0 : index
    %c0_0 = arith.constant 0 : index
    %c0_1 = arith.constant 0 : index
    %c0_2 = arith.constant 0 : index
    %0 = vector.load %arg2[%c0, %c0_0, %c0_1, %c0_2] : memref<1x16x16x32xf32, #tpu.memory_space<vmem>>, vector<1x16x16x32xf32>
    %c0_3 = arith.constant 0 : index
    %c0_4 = arith.constant 0 : index
    %c0_5 = arith.constant 0 : index
    %c0_6 = arith.constant 0 : index
    %1 = vector.load %arg4[%c0_3, %c0_4, %c0_5, %c0_6] : memref<1x1x1x32xf32, #tpu.memory_space<vmem>>, vector<1x1x1x32xf32>
    %cst = arith.constant 3.906250e-03 : f32
    %2 = vector.broadcast %cst : f32 to vector<1x1x1x32xf32>
    %3 = arith.mulf %1, %2 : vector<1x1x1x32xf32>
    %c0_7 = arith.constant 0 : index
    %c0_8 = arith.constant 0 : index
    %c0_9 = arith.constant 0 : index
    %c0_10 = arith.constant 0 : index
    %4 = vector.load %arg5[%c0_7, %c0_8, %c0_9, %c0_10] : memref<1x1x1x32xf32, #tpu.memory_space<vmem>>, vector<1x1x1x32xf32>
    %cst_11 = arith.constant 3.906250e-03 : f32
    %5 = vector.broadcast %cst_11 : f32 to vector<1x1x1x32xf32>
    %6 = arith.mulf %4, %5 : vector<1x1x1x32xf32>
    %7 = arith.mulf %3, %3 : vector<1x1x1x32xf32>
    %8 = arith.subf %6, %7 : vector<1x1x1x32xf32>
    %cst_12 = arith.constant 0.000000e+00 : f32
    %9 = vector.broadcast %cst_12 : f32 to vector<1x1x1x32xf32>
    %10 = arith.maximumf %8, %9 : vector<1x1x1x32xf32>
    %cst_13 = arith.constant 9.99999974E-6 : f32
    %11 = vector.broadcast %cst_13 : f32 to vector<1x1x1x32xf32>
    %12 = arith.addf %10, %11 : vector<1x1x1x32xf32>
    %13 = math.rsqrt %12 : vector<1x1x1x32xf32>
    %c0_14 = arith.constant 0 : index
    %c0_15 = arith.constant 0 : index
    %c0_16 = arith.constant 0 : index
    %c0_17 = arith.constant 0 : index
    %14 = vector.load %arg3[%c0_14, %c0_15, %c0_16, %c0_17] : memref<1x16x16x128xbf16, #tpu.memory_space<vmem>>, vector<1x16x16x128xbf16>
    %15 = arith.extf %14 : vector<1x16x16x128xbf16> to vector<1x16x16x128xf32>
    %16 = vector.extract_strided_slice %15 {offsets = [0, 0, 0, 0], sizes = [1, 16, 16, 32], strides = [1, 1, 1, 1]} : vector<1x16x16x128xf32> to vector<1x16x16x32xf32>
    %17 = vector.extract_strided_slice %15 {offsets = [0, 0, 0, 32], sizes = [1, 16, 16, 32], strides = [1, 1, 1, 1]} : vector<1x16x16x128xf32> to vector<1x16x16x32xf32>
    %18 = vector.broadcast %3 : vector<1x1x1x32xf32> to vector<1x16x16x32xf32>
    %19 = arith.subf %0, %18 : vector<1x16x16x32xf32>
    %20 = vector.broadcast %13 : vector<1x1x1x32xf32> to vector<1x16x16x32xf32>
    %21 = arith.mulf %19, %20 : vector<1x16x16x32xf32>
    %cst_18 = arith.constant 1.000000e+00 : f32
    %22 = vector.broadcast %cst_18 : f32 to vector<1x16x16x32xf32>
    %23 = arith.addf %22, %16 : vector<1x16x16x32xf32>
    %24 = arith.mulf %21, %23 : vector<1x16x16x32xf32>
    %25 = arith.addf %24, %17 : vector<1x16x16x32xf32>
    %c0_19 = arith.constant 0 : index
    %c0_20 = arith.constant 0 : index
    %c0_21 = arith.constant 0 : index
    %c0_22 = arith.constant 0 : index
    %26 = vector.load %arg6[%c0_19, %c0_20, %c0_21, %c0_22] : memref<1x16x16x32xf32, #tpu.memory_space<vmem>>, vector<1x16x16x32xf32>
    tpu.vector_store %arg6[%c0_19, %c0_20, %c0_21, %c0_22], %25 {strides = array<i32>} : memref<1x16x16x32xf32, #tpu.memory_space<vmem>>, vector<1x16x16x32xf32>,
    return
  }
  func.func @transform_0(%arg0: i32, %arg1: i32) -> (i32, i32, i32, i32) {
    %c0_i32 = arith.constant 0 : i32
    %c0_i32_0 = arith.constant 0 : i32
    %c0_i32_1 = arith.constant 0 : i32
    return %arg0, %arg1, %c0_i32, %c0_i32_0 : i32, i32, i32, i32
  }
  func.func @transform_1(%arg0: i32, %arg1: i32) -> (i32, i32, i32, i32) {
    %c0_i32 = arith.constant 0 : i32
    %c0_i32_0 = arith.constant 0 : i32
    %c0_i32_1 = arith.constant 0 : i32
    return %arg0, %arg1, %c0_i32, %c0_i32_0 : i32, i32, i32, i32
  }
  func.func @transform_2(%arg0: i32, %arg1: i32) -> (i32, i32, i32, i32) {
    %c0_i32 = arith.constant 0 : i32
    %c0_i32_0 = arith.constant 0 : i32
    %c0_i32_1 = arith.constant 0 : i32
    %c0_i32_2 = arith.constant 0 : i32
    return %arg0, %c0_i32, %c0_i32_0, %c0_i32_1 : i32, i32, i32, i32
  }
  func.func @transform_3(%arg0: i32, %arg1: i32) -> (i32, i32, i32, i32) {
    %c0_i32 = arith.constant 0 : i32
    %c0_i32_0 = arith.constant 0 : i32
    %c0_i32_1 = arith.constant 0 : i32
    %c0_i32_2 = arith.constant 0 : i32
    return %arg0, %c0_i32, %c0_i32_0, %c0_i32_1 : i32, i32, i32, i32
  }
  func.func @transform_4(%arg0: i32, %arg1: i32) -> (i32, i32, i32, i32) {
    %c0_i32 = arith.constant 0 : i32
    %c0_i32_0 = arith.constant 0 : i32
    %c0_i32_1 = arith.constant 0 : i32
    return %arg0, %arg1, %c0_i32, %c0_i32_0 : i32, i32, i32, i32
  }
}

module attributes {stable_mosaic.version = 11 : i64} {
  func.func @_in_stats_kernel(%arg0: i32, %arg1: i32, %arg2: memref<1x16x16x32xf32, #tpu.memory_space<vmem>>, %arg3: memref<1x1x1x32xf32, #tpu.memory_space<vmem>>, %arg4: memref<1x1x1x32xf32, #tpu.memory_space<vmem>>) attributes {dimension_semantics = [#tpu.dimension_semantics<parallel>, #tpu.dimension_semantics<arbitrary>], iteration_bounds = array<i64: 2, 1>, scalar_prefetch = 0 : i64, scratch_operands = 0 : i64, tpu.core_type = #tpu.core_type<tc>, window_params = [{transform_indices = @transform_0, window_bounds = array<i64: 1, 16, 16, 32>}, {transform_indices = @transform_1, window_bounds = array<i64: 1, 1, 1, 32>}, {transform_indices = @transform_2, window_bounds = array<i64: 1, 1, 1, 32>}]} {
    %c0_i32 = arith.constant 0 : i32
    %0 = arith.cmpi eq, %arg1, %c0_i32 : i32
    %1 = arith.extui %0 : i1 to i32
    %c0_i32_0 = arith.constant 0 : i32
    %2 = arith.cmpi ne, %1, %c0_i32_0 : i32
    scf.if %2 {
      %cst_21 = arith.constant 0.000000e+00 : f32
      %15 = vector.broadcast %cst_21 : f32 to vector<1x1x1x32xf32>
      %c0_22 = arith.constant 0 : index
      %c0_23 = arith.constant 0 : index
      %c0_24 = arith.constant 0 : index
      %c0_25 = arith.constant 0 : index
      %16 = vector.load %arg3[%c0_22, %c0_23, %c0_24, %c0_25] : memref<1x1x1x32xf32, #tpu.memory_space<vmem>>, vector<1x1x1x32xf32>
      tpu.vector_store %arg3[%c0_22, %c0_23, %c0_24, %c0_25], %15 {strides = array<i32>} : memref<1x1x1x32xf32, #tpu.memory_space<vmem>>, vector<1x1x1x32xf32>,
      %cst_26 = arith.constant 0.000000e+00 : f32
      %17 = vector.broadcast %cst_26 : f32 to vector<1x1x1x32xf32>
      %c0_27 = arith.constant 0 : index
      %c0_28 = arith.constant 0 : index
      %c0_29 = arith.constant 0 : index
      %c0_30 = arith.constant 0 : index
      %18 = vector.load %arg4[%c0_27, %c0_28, %c0_29, %c0_30] : memref<1x1x1x32xf32, #tpu.memory_space<vmem>>, vector<1x1x1x32xf32>
      tpu.vector_store %arg4[%c0_27, %c0_28, %c0_29, %c0_30], %17 {strides = array<i32>} : memref<1x1x1x32xf32, #tpu.memory_space<vmem>>, vector<1x1x1x32xf32>,
    } else {
    }
    %c0 = arith.constant 0 : index
    %c0_1 = arith.constant 0 : index
    %c0_2 = arith.constant 0 : index
    %c0_3 = arith.constant 0 : index
    %3 = vector.load %arg2[%c0, %c0_1, %c0_2, %c0_3] : memref<1x16x16x32xf32, #tpu.memory_space<vmem>>, vector<1x16x16x32xf32>
    %c0_4 = arith.constant 0 : index
    %c0_5 = arith.constant 0 : index
    %c0_6 = arith.constant 0 : index
    %c0_7 = arith.constant 0 : index
    %4 = vector.load %arg3[%c0_4, %c0_5, %c0_6, %c0_7] : memref<1x1x1x32xf32, #tpu.memory_space<vmem>>, vector<1x1x1x32xf32>
    %cst = arith.constant dense<0.000000e+00> : vector<1x32xf32>
    %5 = vector.multi_reduction <add>, %3, %cst [1, 2] : vector<1x16x16x32xf32> to vector<1x32xf32>
    %6 = vector.shape_cast %5 : vector<1x32xf32> to vector<1x1x1x32xf32>
    %7 = arith.addf %4, %6 : vector<1x1x1x32xf32>
    %c0_8 = arith.constant 0 : index
    %c0_9 = arith.constant 0 : index
    %c0_10 = arith.constant 0 : index
    %c0_11 = arith.constant 0 : index
    %8 = vector.load %arg3[%c0_8, %c0_9, %c0_10, %c0_11] : memref<1x1x1x32xf32, #tpu.memory_space<vmem>>, vector<1x1x1x32xf32>
    tpu.vector_store %arg3[%c0_8, %c0_9, %c0_10, %c0_11], %7 {strides = array<i32>} : memref<1x1x1x32xf32, #tpu.memory_space<vmem>>, vector<1x1x1x32xf32>,
    %c0_12 = arith.constant 0 : index
    %c0_13 = arith.constant 0 : index
    %c0_14 = arith.constant 0 : index
    %c0_15 = arith.constant 0 : index
    %9 = vector.load %arg4[%c0_12, %c0_13, %c0_14, %c0_15] : memref<1x1x1x32xf32, #tpu.memory_space<vmem>>, vector<1x1x1x32xf32>
    %10 = arith.mulf %3, %3 : vector<1x16x16x32xf32>
    %cst_16 = arith.constant dense<0.000000e+00> : vector<1x32xf32>
    %11 = vector.multi_reduction <add>, %10, %cst_16 [1, 2] : vector<1x16x16x32xf32> to vector<1x32xf32>
    %12 = vector.shape_cast %11 : vector<1x32xf32> to vector<1x1x1x32xf32>
    %13 = arith.addf %9, %12 : vector<1x1x1x32xf32>
    %c0_17 = arith.constant 0 : index
    %c0_18 = arith.constant 0 : index
    %c0_19 = arith.constant 0 : index
    %c0_20 = arith.constant 0 : index
    %14 = vector.load %arg4[%c0_17, %c0_18, %c0_19, %c0_20] : memref<1x1x1x32xf32, #tpu.memory_space<vmem>>, vector<1x1x1x32xf32>
    tpu.vector_store %arg4[%c0_17, %c0_18, %c0_19, %c0_20], %13 {strides = array<i32>} : memref<1x1x1x32xf32, #tpu.memory_space<vmem>>, vector<1x1x1x32xf32>,
    return
  }
  func.func @transform_0(%arg0: i32, %arg1: i32) -> (i32, i32, i32, i32) {
    %c0_i32 = arith.constant 0 : i32
    %c0_i32_0 = arith.constant 0 : i32
    %c0_i32_1 = arith.constant 0 : i32
    return %arg0, %arg1, %c0_i32, %c0_i32_0 : i32, i32, i32, i32
  }
  func.func @transform_1(%arg0: i32, %arg1: i32) -> (i32, i32, i32, i32) {
    %c0_i32 = arith.constant 0 : i32
    %c0_i32_0 = arith.constant 0 : i32
    %c0_i32_1 = arith.constant 0 : i32
    %c0_i32_2 = arith.constant 0 : i32
    return %arg0, %c0_i32, %c0_i32_0, %c0_i32_1 : i32, i32, i32, i32
  }
  func.func @transform_2(%arg0: i32, %arg1: i32) -> (i32, i32, i32, i32) {
    %c0_i32 = arith.constant 0 : i32
    %c0_i32_0 = arith.constant 0 : i32
    %c0_i32_1 = arith.constant 0 : i32
    %c0_i32_2 = arith.constant 0 : i32
    return %arg0, %c0_i32, %c0_i32_0, %c0_i32_1 : i32, i32, i32, i32
  }
}

module attributes {stable_mosaic.version = 11 : i64} {
  func.func @_spade_conv_kernel(%arg0: i32, %arg1: i32, %arg2: memref<1x456x32xbf16, #tpu.memory_space<vmem>>, %arg3: memref<456x1xf32, #tpu.memory_space<vmem>>, %arg4: memref<32x128xbf16, #tpu.memory_space<vmem>>, %arg5: memref<1x128xf32, #tpu.memory_space<vmem>>, %arg6: memref<3x384x128xbf16, #tpu.memory_space<vmem>>, %arg7: memref<1x128xf32, #tpu.memory_space<vmem>>, %arg8: memref<1x384x128xbf16, #tpu.memory_space<vmem>>) attributes {dimension_semantics = [#tpu.dimension_semantics<parallel>, #tpu.dimension_semantics<parallel>], iteration_bounds = array<i64: 2, 1>, scalar_prefetch = 0 : i64, scratch_operands = 0 : i64, tpu.core_type = #tpu.core_type<tc>, window_params = [{transform_indices = @transform_0, window_bounds = array<i64: 1, 456, 32>}, {pipeline_mode = #tpu.pipeline_mode<synchronous>, transform_indices = @transform_1, window_bounds = array<i64: 456, 1>}, {pipeline_mode = #tpu.pipeline_mode<synchronous>, transform_indices = @transform_2, window_bounds = array<i64: 32, 128>}, {pipeline_mode = #tpu.pipeline_mode<synchronous>, transform_indices = @transform_3, window_bounds = array<i64: 1, 128>}, {transform_indices = @transform_4, window_bounds = array<i64: 3, 384, 128>}, {transform_indices = @transform_5, window_bounds = array<i64: 1, 128>}, {transform_indices = @transform_6, window_bounds = array<i64: 1, 384, 128>}]} {
    %c0 = arith.constant 0 : index
    %c0_0 = arith.constant 0 : index
    %c0_1 = arith.constant 0 : index
    %0 = vector.load %arg2[%c0, %c0_0, %c0_1] : memref<1x456x32xbf16, #tpu.memory_space<vmem>>, vector<1x456x32xbf16>
    %1 = vector.shape_cast %0 : vector<1x456x32xbf16> to vector<456x32xbf16>
    %c0_2 = arith.constant 0 : index
    %c0_3 = arith.constant 0 : index
    %2 = vector.load %arg4[%c0_2, %c0_3] : memref<32x128xbf16, #tpu.memory_space<vmem>>, vector<32x128xbf16>
    %cst = arith.constant dense<0.000000e+00> : vector<456x128xf32>
    %3 = tpu.matmul %1, %2, %cst {dimension_numbers = #tpu.dot_dimension_numbers<[1], [0], [0], [1], [0, 0, 1, 1], [], []>} : vector<456x32xbf16>, vector<32x128xbf16>, vector<456x128xf32> -> vector<456x128xf32>
    %c0_4 = arith.constant 0 : index
    %c0_5 = arith.constant 0 : index
    %4 = vector.load %arg5[%c0_4, %c0_5] : memref<1x128xf32, #tpu.memory_space<vmem>>, vector<1x128xf32>
    %5 = vector.broadcast %4 : vector<1x128xf32> to vector<456x128xf32>
    %6 = arith.addf %3, %5 : vector<456x128xf32>
    %cst_6 = arith.constant 0.000000e+00 : f32
    %7 = vector.broadcast %cst_6 : f32 to vector<456x128xf32>
    %8 = arith.maximumf %6, %7 : vector<456x128xf32>
    %c0_7 = arith.constant 0 : index
    %c0_8 = arith.constant 0 : index
    %9 = vector.load %arg3[%c0_7, %c0_8] : memref<456x1xf32, #tpu.memory_space<vmem>>, vector<456x1xf32>
    %10 = vector.broadcast %9 : vector<456x1xf32> to vector<456x128xf32>
    %11 = arith.mulf %8, %10 : vector<456x128xf32>
    %12 = arith.truncf %11 : vector<456x128xf32> to vector<456x128xbf16>
    %13 = vector.extract_strided_slice %12 {offsets = [0, 0], sizes = [432, 128], strides = [1, 1]} : vector<456x128xbf16> to vector<432x128xbf16>
    %14 = vector.extract_strided_slice %12 {offsets = [1, 0], sizes = [432, 128], strides = [1, 1]} : vector<456x128xbf16> to vector<432x128xbf16>
    %15 = vector.extract_strided_slice %12 {offsets = [2, 0], sizes = [432, 128], strides = [1, 1]} : vector<456x128xbf16> to vector<432x128xbf16>
    %16 = tpu.concatenate %13, %14, %15 in 1 : vector<432x128xbf16>, vector<432x128xbf16>, vector<432x128xbf16> -> vector<432x384xbf16>
    %cst_9 = arith.constant 0.000000e+00 : f32
    %17 = vector.broadcast %cst_9 : f32 to vector<384x128xf32>
    %c0_10 = arith.constant 0 : index
    %c0_11 = arith.constant 0 : index
    %18 = vector.load %arg7[%c0_10, %c0_11] : memref<1x128xf32, #tpu.memory_space<vmem>>, vector<1x128xf32>
    %19 = vector.broadcast %18 : vector<1x128xf32> to vector<384x128xf32>
    %20 = arith.addf %17, %19 : vector<384x128xf32>
    %21 = vector.extract_strided_slice %16 {offsets = [0, 0], sizes = [384, 384], strides = [1, 1]} : vector<432x384xbf16> to vector<384x384xbf16>
    %c0_12 = arith.constant 0 : index
    %c0_13 = arith.constant 0 : index
    %c0_14 = arith.constant 0 : index
    %22 = vector.load %arg6[%c0_12, %c0_13, %c0_14] : memref<3x384x128xbf16, #tpu.memory_space<vmem>>, vector<1x384x128xbf16>
    %23 = vector.shape_cast %22 : vector<1x384x128xbf16> to vector<384x128xbf16>
    %cst_15 = arith.constant dense<0.000000e+00> : vector<384x128xf32>
    %24 = tpu.matmul %21, %23, %cst_15 {dimension_numbers = #tpu.dot_dimension_numbers<[1], [0], [0], [1], [0, 0, 1, 1], [], []>} : vector<384x384xbf16>, vector<384x128xbf16>, vector<384x128xf32> -> vector<384x128xf32>
    %25 = arith.addf %20, %24 : vector<384x128xf32>
    %26 = vector.extract_strided_slice %16 {offsets = [24, 0], sizes = [384, 384], strides = [1, 1]} : vector<432x384xbf16> to vector<384x384xbf16>
    %c1 = arith.constant 1 : index
    %c0_16 = arith.constant 0 : index
    %c0_17 = arith.constant 0 : index
    %27 = vector.load %arg6[%c1, %c0_16, %c0_17] : memref<3x384x128xbf16, #tpu.memory_space<vmem>>, vector<1x384x128xbf16>
    %28 = vector.shape_cast %27 : vector<1x384x128xbf16> to vector<384x128xbf16>
    %cst_18 = arith.constant dense<0.000000e+00> : vector<384x128xf32>
    %29 = tpu.matmul %26, %28, %cst_18 {dimension_numbers = #tpu.dot_dimension_numbers<[1], [0], [0], [1], [0, 0, 1, 1], [], []>} : vector<384x384xbf16>, vector<384x128xbf16>, vector<384x128xf32> -> vector<384x128xf32>
    %30 = arith.addf %25, %29 : vector<384x128xf32>
    %31 = vector.extract_strided_slice %16 {offsets = [48, 0], sizes = [384, 384], strides = [1, 1]} : vector<432x384xbf16> to vector<384x384xbf16>
    %c2 = arith.constant 2 : index
    %c0_19 = arith.constant 0 : index
    %c0_20 = arith.constant 0 : index
    %32 = vector.load %arg6[%c2, %c0_19, %c0_20] : memref<3x384x128xbf16, #tpu.memory_space<vmem>>, vector<1x384x128xbf16>
    %33 = vector.shape_cast %32 : vector<1x384x128xbf16> to vector<384x128xbf16>
    %cst_21 = arith.constant dense<0.000000e+00> : vector<384x128xf32>
    %34 = tpu.matmul %31, %33, %cst_21 {dimension_numbers = #tpu.dot_dimension_numbers<[1], [0], [0], [1], [0, 0, 1, 1], [], []>} : vector<384x384xbf16>, vector<384x128xbf16>, vector<384x128xf32> -> vector<384x128xf32>
    %35 = arith.addf %30, %34 : vector<384x128xf32>
    %36 = arith.truncf %35 : vector<384x128xf32> to vector<384x128xbf16>
    %c0_22 = arith.constant 0 : index
    %c0_23 = arith.constant 0 : index
    %c0_24 = arith.constant 0 : index
    %37 = vector.load %arg8[%c0_22, %c0_23, %c0_24] : memref<1x384x128xbf16, #tpu.memory_space<vmem>>, vector<1x384x128xbf16>
    %38 = vector.shape_cast %37 : vector<1x384x128xbf16> to vector<384x128xbf16>
    %39 = vector.shape_cast %36 : vector<384x128xbf16> to vector<1x384x128xbf16>
    tpu.vector_store %arg8[%c0_22, %c0_23, %c0_24], %39 {strides = array<i32>} : memref<1x384x128xbf16, #tpu.memory_space<vmem>>, vector<1x384x128xbf16>,
    return
  }
  func.func @transform_0(%arg0: i32, %arg1: i32) -> (i32, i32, i32) {
    %c0_i32 = arith.constant 0 : i32
    %c0_i32_0 = arith.constant 0 : i32
    %c0_i32_1 = arith.constant 0 : i32
    return %arg0, %c0_i32, %c0_i32_0 : i32, i32, i32
  }
  func.func @transform_1(%arg0: i32, %arg1: i32) -> (i32, i32) {
    %c0_i32 = arith.constant 0 : i32
    %c0_i32_0 = arith.constant 0 : i32
    %c0_i32_1 = arith.constant 0 : i32
    return %c0_i32, %c0_i32_0 : i32, i32
  }
  func.func @transform_2(%arg0: i32, %arg1: i32) -> (i32, i32) {
    %c0_i32 = arith.constant 0 : i32
    %c0_i32_0 = arith.constant 0 : i32
    %c0_i32_1 = arith.constant 0 : i32
    return %c0_i32, %c0_i32_0 : i32, i32
  }
  func.func @transform_3(%arg0: i32, %arg1: i32) -> (i32, i32) {
    %c0_i32 = arith.constant 0 : i32
    %c0_i32_0 = arith.constant 0 : i32
    %c0_i32_1 = arith.constant 0 : i32
    return %c0_i32, %c0_i32_0 : i32, i32
  }
  func.func @transform_4(%arg0: i32, %arg1: i32) -> (i32, i32, i32) {
    %c0_i32 = arith.constant 0 : i32
    %c0_i32_0 = arith.constant 0 : i32
    %c0_i32_1 = arith.constant 0 : i32
    return %c0_i32, %c0_i32_0, %arg1 : i32, i32, i32
  }
  func.func @transform_5(%arg0: i32, %arg1: i32) -> (i32, i32) {
    %c0_i32 = arith.constant 0 : i32
    %c0_i32_0 = arith.constant 0 : i32
    return %c0_i32, %arg1 : i32, i32
  }
  func.func @transform_6(%arg0: i32, %arg1: i32) -> (i32, i32, i32) {
    %c0_i32 = arith.constant 0 : i32
    %c0_i32_0 = arith.constant 0 : i32
    return %arg0, %c0_i32, %arg1 : i32, i32, i32
  }
}

</mosaic_0001>

<llo_original>
// kernel: spade_forward.3
$region0: #{spade_forward.3}
  #allocation0 [shape = 'u32[]', space=smem, size = 0x4, offset = 0x4, fixed_abs, tag = 'smem constant byte address 0x4 - core index']
  #allocation1 [shape = 'u32[144,128]{1,0:T(1,128)}', space=vmem, size = 0x12000, scoped, tag = 'internal scratch']
  %s0 = inlined_call_operand.vmem [shape: f32[2,16,16,32], index: 0, kind: input, shape index: {}]
  %s1 = inlined_call_operand.vmem [shape: f32[2,1,1,32], index: 1, kind: output, shape index: {0}]
  %s2 = inlined_call_operand.vmem [shape: f32[2,1,1,32], index: 2, kind: output, shape index: {1}]
  %3 = xla_tuple %s1, %s2
  %s4 = sld [smem:[#allocation0]]
  $region49: #{spade_forward.3} parent=0
    _
  %s6 = ssub.s32 1, %s4
  %s7 = scalar_select 0, %s6, %s4
  loop: start=0, step=1, limit=4
  $region2: #{spade_forward.3} parent=0 // loop_pre_header
    _
  $region3: #{spade_forward.3} parent=0 // loop_header
    %s9 = sphi 0, %s13
    %p10 = scmp.ge.s32.totalorder %s9, 4
    %s16 = sphi 0, %s28
    %s17 = sphi 0, %s24
    %s18 = sphi 0, %s16
    %s19 = sphi 0, %s17
    %s20 = sphi 0, %s18
    %s21 = sphi 0, %s19
    %s33 = sphi 0, %s35
    %s36 = sphi 0, %s33
    %s37 = sphi 0, %s36
    %s53 = sphi 0, %s37
    %s59 = sphi 0, %s61
    %s62 = sphi 0, %s59
    %s63 = sphi 0, %s62
    %s79 = sphi 0, %s63
    %s85 = sphi 0, %s87
    %s88 = sphi 0, %s85
    %s89 = sphi 0, %s88
    %s105 = sphi 0, %s89
  $region4: #{spade_forward.3} parent=0 // loop_header_branch
    %12 = sbr.rel (%p10) target = $region8
  $region5: #{spade_forward.3} parent=0 // loop_body
    %s14 = ssub.s32 %s9, 1
    %s15 = ssub.s32 %s9, 2
    %s22 = sadd.s32 1, %s17
    %p23 = scmp.ge.s32.totalorder %s22, 1
    %s24 = scalar_select %p23, 0, %s22
    %s25 = sadd.s32 1, %s16
    %s26 = scalar_select %p23, %s25, %s16
    %p27 = scmp.ge.s32.totalorder %s26, 2
    %s28 = scalar_select %p27, 0, %s26
    %s29 = ssub.s32 %s16, %s28
    %s30 = ssub.s32 %s17, %s24
    %s31 = sor.u32 %s29, %s30
    %p32 = scmp.eq.s32.totalorder %s31, 0
    %s34 = sadd.s32 %s33, 1
    %s35 = scalar_select %p32, %s33, %s34
    %p38 = pneg %p32
    %p39 = scmp.eq.s32.totalorder %s9, 1
    %p40 = por %p38, %p39
    %p41 = scmp.ne.s32.totalorder %s33, %s36
    %p42 = scmp.eq.s32.totalorder %s9, 0
    %p43 = por %p41, %p42
    %p44 = scmp.ne.s32.totalorder %s33, %s36
    %p45 = scmp.eq.s32.totalorder %s14, 1
    %p46 = por %p44, %p45
    %p47 = scmp.ne.s32.totalorder %s36, %s37
    %p48 = scmp.eq.s32.totalorder %s14, 0
    %p49 = por %p47, %p48
    %p50 = scmp.ne.s32.totalorder %s36, %s37
    %p51 = scmp.eq.s32.totalorder %s15, 1
    %p52 = por %p50, %p51
    %p54 = scmp.ne.s32.totalorder %s37, %s53
    %p55 = scmp.eq.s32.totalorder %s15, 0
    %p56 = por %p54, %p55
    %s57 = ssub.s32 %s16, %s28
    %p58 = scmp.eq.s32.totalorder %s57, 0
    %s60 = sadd.s32 %s59, 1
    %s61 = scalar_select %p58, %s59, %s60
    %p64 = pneg %p58
    %p65 = scmp.eq.s32.totalorder %s9, 1
    %p66 = por %p64, %p65
    %p67 = scmp.ne.s32.totalorder %s59, %s62
    %p68 = scmp.eq.s32.totalorder %s9, 0
    %p69 = por %p67, %p68
    %p70 = scmp.ne.s32.totalorder %s59, %s62
    %p71 = scmp.eq.s32.totalorder %s14, 1
    %p72 = por %p70, %p71
    %p73 = scmp.ne.s32.totalorder %s62, %s63
    %p74 = scmp.eq.s32.totalorder %s14, 0
    %p75 = por %p73, %p74
    %p76 = scmp.ne.s32.totalorder %s62, %s63
    %p77 = scmp.eq.s32.totalorder %s15, 1
    %p78 = por %p76, %p77
    %p80 = scmp.ne.s32.totalorder %s63, %s79
    %p81 = scmp.eq.s32.totalorder %s15, 0
    %p82 = por %p80, %p81
    %s83 = ssub.s32 %s16, %s28
    %p84 = scmp.eq.s32.totalorder %s83, 0
    %s86 = sadd.s32 %s85, 1
    %s87 = scalar_select %p84, %s85, %s86
    %p90 = pneg %p84
    %p91 = scmp.eq.s32.totalorder %s9, 1
    %p92 = por %p90, %p91
    %p93 = scmp.ne.s32.totalorder %s85, %s88
    %p94 = scmp.eq.s32.totalorder %s9, 0
    %p95 = por %p93, %p94
    %p96 = scmp.ne.s32.totalorder %s85, %s88
    %p97 = scmp.eq.s32.totalorder %s14, 1
    %p98 = por %p96, %p97
    %p99 = scmp.ne.s32.totalorder %s88, %s89
    %p100 = scmp.eq.s32.totalorder %s14, 0
    %p101 = por %p99, %p100
    %p102 = scmp.ne.s32.totalorder %s88, %s89
    %p103 = scmp.eq.s32.totalorder %s15, 1
    %p104 = por %p102, %p103
    %p106 = scmp.ne.s32.totalorder %s89, %s105
    %p107 = scmp.eq.s32.totalorder %s15, 0
    %p108 = por %p106, %p107
    %p109 = scmp.le.s32.totalorder 1, %s9
    %p110 = scmp.lt.s32.totalorder %s9, 3
    %p111 = pnand %p109, %p110
    %p112 = pneg %p111
    // Predicated region
    $region9: #{spade_forward.3} parent=5 // pred_check
      _
    $region10: #{spade_forward.3} parent=5 // pred_check_branch
      %114 = sbr.rel (%p111) target = $region12
    $region11: #{spade_forward.3} parent=5 // pred_region
      %s115 = ssub.s32 %s9, 1
    $region12: #{spade_forward.3} parent=5 // pred_fallthru
      _
    %p116 = scmp.lt.s32.totalorder %s9, 2
    // Predicated region
    $region13: #{spade_forward.3} parent=5 // pred_check
      %p117 = pneg %p116
    $region14: #{spade_forward.3} parent=5 // pred_check_branch
      %119 = sbr.rel (%p117) target = $region16
    $region15: #{spade_forward.3} parent=5 // pred_region
      // Predicated region
      $region17: #{spade_forward.3} parent=15 // pred_check
        %p120 = pneg %p43
      $region18: #{spade_forward.3} parent=15 // pred_check_branch
        %122 = sbr.rel (%p120) target = $region20
      $region19: #{spade_forward.3} parent=15 // pred_region
        %s123 = smul.u32 16, %s17
        %p124 = scmp.lt.s32.totalorder %s16, 1
        %s125 = scalar_select %p124, %s16, 1
        %p126 = scmp.lt.s32.totalorder %s123, 15
        %s127 = scalar_select %p126, %s123, 15
        %s128 = smul.addr %s127, 2
        %s129 = smul.addr %s125, 32
        %s130 = sadd.s32 %s128, %s129
        %s131 = smul.addr %s130, 8
        %s132 = scalar_lea.vmem %s0, %s131
        %s133 = smul.u32 16, %s17
      $region20: #{spade_forward.3} parent=15 // pred_fallthru
        _
    $region16: #{spade_forward.3} parent=5 // pred_fallthru
      _
    %p134 = scmp.le.s32.totalorder 1, %s9
    %p135 = scmp.lt.s32.totalorder %s9, 3
    %p136 = pnand %p134, %p135
    %p137 = pneg %p136
    // Predicated region
    $region21: #{spade_forward.3} parent=5 // pred_check
      _
    $region22: #{spade_forward.3} parent=5 // pred_check_branch
      %139 = sbr.rel (%p136) target = $region24
    $region23: #{spade_forward.3} parent=5 // pred_region
      %s140 = ssub.s32 %s9, 1
      %s141 = smul.u32 16, %s19
      %p142 = scmp.lt.s32.totalorder %s18, 1
      %s143 = scalar_select %p142, %s18, 1
      %p144 = scmp.lt.s32.totalorder %s141, 15
      %s145 = scalar_select %p144, %s141, 15
      %s146 = smul.addr %s145, 2
      %s147 = smul.addr %s143, 32
      %s148 = sadd.s32 %s146, %s147
      %s149 = smul.addr %s148, 8
      %s150 = scalar_lea.vmem %s0, %s149
      %p151 = pneg %p49
      %p152 = pneg %p46
      %p153 = pneg %p75
      %p154 = pneg %p72
      %p155 = scmp.lt.s32.totalorder %s18, 1
      %s156 = scalar_select %p155, %s18, 1
      %s157 = scalar_lea.vmem %s1, %s156
      %p158 = pneg %p101
      %p159 = pneg %p98
      %p160 = scmp.lt.s32.totalorder %s18, 1
      %s161 = scalar_select %p160, %s18, 1
      %s162 = scalar_lea.vmem %s2, %s161
      %s163 = smul.u32 16, %s19
      %p164 = scmp.lt.s32.totalorder %s18, 1
      %s165 = scalar_select %p164, %s18, 1
      %p166 = scmp.lt.s32.totalorder %s163, 15
      %s167 = scalar_select %p166, %s163, 15
      %s168 = smul.addr %s167, 2
      %s169 = smul.addr %s165, 32
      %s170 = sadd.s32 %s168, %s169
      %s171 = smul.addr %s170, 8
      %s172 = scalar_lea.vmem %s0, %s171
      %s173 = smul.u32 16, %s19
      %p174 = scmp.lt.s32.totalorder %s18, 1
      %s175 = scalar_select %p174, %s18, 1
      %s176 = scalar_lea.vmem %s1, %s175
      %p177 = scmp.lt.s32.totalorder %s18, 1
      %s178 = scalar_select %p177, %s18, 1
      %s179 = scalar_lea.vmem %s2, %s178
      %p180 = scmp.eq.s32.totalorder %s19, 0
      // Predicated region
      $region25: #{spade_forward.3} parent=23 // pred_check
        %p181 = pneg %p180
      $region26: #{spade_forward.3} parent=23 // pred_check_branch
        %183 = sbr.rel (%p181) target = $region28
      $region27: #{spade_forward.3} parent=23 // pred_region
        %vm184 = vcmask 253952
        %185 = vst.msk [vmem:[%s176] sm:$0x1] %vm184, 0.0
        %186 = vst.msk [vmem:[%s179] sm:$0x1] %vm184, 0.0
      $region28: #{spade_forward.3} parent=23 // pred_fallthru
        _
      %v187 = vld [vmem:[%s172] sm:$0xff]
      %v188 = vld [vmem:[%s172 + $0x8] sm:$0xff]
      %v189 = vld [vmem:[%s172 + $0x10] sm:$0xff]
      %v190 = vld [vmem:[%s172 + $0x18] sm:$0xff]
      %v191 = vld [vmem:[%s172 + $0x20] sm:$0xff]
      %v192 = vld [vmem:[%s172 + $0x28] sm:$0xff]
      %v193 = vld [vmem:[%s172 + $0x30] sm:$0xff]
      %v194 = vld [vmem:[%s172 + $0x38] sm:$0xff]
      %v195 = vld [vmem:[%s172 + $0x40] sm:$0xff]
      %v196 = vld [vmem:[%s172 + $0x48] sm:$0xff]
      %v197 = vld [vmem:[%s172 + $0x50] sm:$0xff]
      %v198 = vld [vmem:[%s172 + $0x58] sm:$0xff]
      %v199 = vld [vmem:[%s172 + $0x60] sm:$0xff]
      %v200 = vld [vmem:[%s172 + $0x68] sm:$0xff]
      %v201 = vld [vmem:[%s172 + $0x70] sm:$0xff]
      %v202 = vld [vmem:[%s172 + $0x78] sm:$0xff]
      %v203 = vld [vmem:[%s172 + $0x80] sm:$0xff]
      %v204 = vld [vmem:[%s172 + $0x88] sm:$0xff]
      %v205 = vld [vmem:[%s172 + $0x90] sm:$0xff]
      %v206 = vld [vmem:[%s172 + $0x98] sm:$0xff]
      %v207 = vld [vmem:[%s172 + $0xa0] sm:$0xff]
      %v208 = vld [vmem:[%s172 + $0xa8] sm:$0xff]
      %v209 = vld [vmem:[%s172 + $0xb0] sm:$0xff]
      %v210 = vld [vmem:[%s172 + $0xb8] sm:$0xff]
      %v211 = vld [vmem:[%s172 + $0xc0] sm:$0xff]
      %v212 = vld [vmem:[%s172 + $0xc8] sm:$0xff]
      %v213 = vld [vmem:[%s172 + $0xd0] sm:$0xff]
      %v214 = vld [vmem:[%s172 + $0xd8] sm:$0xff]
      %v215 = vld [vmem:[%s172 + $0xe0] sm:$0xff]
      %v216 = vld [vmem:[%s172 + $0xe8] sm:$0xff]
      %v217 = vld [vmem:[%s172 + $0xf0] sm:$0xff]
      %v218 = vld [vmem:[%s172 + $0xf8] sm:$0xff]
      %v219 = vld [vmem:[%s176] sm:$0x1]
      %vm220 = vcmask 261120
      %v221 = vsel %vm220, %v187, 0.0
      %v222 = vsel %vm220, %v188, 0.0
      %v223 = vadd.f32 %v221, %v222
      %v224 = vsel %vm220, %v189, 0.0
      %v225 = vadd.f32 %v223, %v224
      %v226 = vsel %vm220, %v190, 0.0
      %v227 = vadd.f32 %v225, %v226
      %v228 = vsel %vm220, %v191, 0.0
      %v229 = vadd.f32 %v227, %v228
      %v230 = vsel %vm220, %v192, 0.0
      %v231 = vadd.f32 %v229, %v230
      %v232 = vsel %vm220, %v193, 0.0
      %v233 = vadd.f32 %v231, %v232
      %v234 = vsel %vm220, %v194, 0.0
      %v235 = vadd.f32 %v233, %v234
      %v236 = vsel %vm220, %v195, 0.0
      %v237 = vadd.f32 %v235, %v236
      %v238 = vsel %vm220, %v196, 0.0
      %v239 = vadd.f32 %v237, %v238
      %v240 = vsel %vm220, %v197, 0.0
      %v241 = vadd.f32 %v239, %v240
      %v242 = vsel %vm220, %v198, 0.0
      %v243 = vadd.f32 %v241, %v242
      %v244 = vsel %vm220, %v199, 0.0
      %v245 = vadd.f32 %v243, %v244
      %v246 = vsel %vm220, %v200, 0.0
      %v247 = vadd.f32 %v245, %v246
      %v248 = vsel %vm220, %v201, 0.0
      %v249 = vadd.f32 %v247, %v248
      %v250 = vsel %vm220, %v202, 0.0
      %v251 = vadd.f32 %v249, %v250
      %v252 = vsel %vm220, %v203, 0.0
      %v253 = vadd.f32 %v251, %v252
      %v254 = vsel %vm220, %v204, 0.0
      %v255 = vadd.f32 %v253, %v254
      %v256 = vsel %vm220, %v205, 0.0
      %v257 = vadd.f32 %v255, %v256
      %v258 = vsel %vm220, %v206, 0.0
      %v259 = vadd.f32 %v257, %v258
      %v260 = vsel %vm220, %v207, 0.0
      %v261 = vadd.f32 %v259, %v260
      %v262 = vsel %vm220, %v208, 0.0
      %v263 = vadd.f32 %v261, %v262
      %v264 = vsel %vm220, %v209, 0.0
      %v265 = vadd.f32 %v263, %v264
      %v266 = vsel %vm220, %v210, 0.0
      %v267 = vadd.f32 %v265, %v266
      %v268 = vsel %vm220, %v211, 0.0
      %v269 = vadd.f32 %v267, %v268
      %v270 = vsel %vm220, %v212, 0.0
      %v271 = vadd.f32 %v269, %v270
      %v272 = vsel %vm220, %v213, 0.0
      %v273 = vadd.f32 %v271, %v272
      %v274 = vsel %vm220, %v214, 0.0
      %v275 = vadd.f32 %v273, %v274
      %v276 = vsel %vm220, %v215, 0.0
      %v277 = vadd.f32 %v275, %v276
      %v278 = vsel %vm220, %v216, 0.0
      %v279 = vadd.f32 %v277, %v278
      %v280 = vsel %vm220, %v217, 0.0
      %v281 = vadd.f32 %v279, %v280
      %v282 = vsel %vm220, %v218, 0.0
      %v283 = vadd.f32 %v281, %v282
      %v284 = vrot.slane %v283, 4
      %v285 = vadd.f32 %v283, %v284
      %v286 = vrot.slane %v285, 2
      %v287 = vadd.f32 %v285, %v286
      %v288 = vrot.slane %v287, 1
      %v289 = vadd.f32 %v287, %v288
      %v290 = vadd.f32 %v219, %v289
      %vm291 = vcmask 253952
      %292 = vst.msk [vmem:[%s176] sm:$0x1] %vm291, %v290
      %v293 = vld [vmem:[%s179] sm:$0x1]
      %v294 = vmul.f32 %v187, %v187
      %v295 = vmul.f32 %v188, %v188
      %v296 = vmul.f32 %v189, %v189
      %v297 = vmul.f32 %v190, %v190
      %v298 = vmul.f32 %v191, %v191
      %v299 = vmul.f32 %v192, %v192
      %v300 = vmul.f32 %v193, %v193
      %v301 = vmul.f32 %v194, %v194
      %v302 = vmul.f32 %v195, %v195
      %v303 = vmul.f32 %v196, %v196
      %v304 = vmul.f32 %v197, %v197
      %v305 = vmul.f32 %v198, %v198
      %v306 = vmul.f32 %v199, %v199
      %v307 = vmul.f32 %v200, %v200
      %v308 = vmul.f32 %v201, %v201
      %v309 = vmul.f32 %v202, %v202
      %v310 = vmul.f32 %v203, %v203
      %v311 = vmul.f32 %v204, %v204
      %v312 = vmul.f32 %v205, %v205
      %v313 = vmul.f32 %v206, %v206
      %v314 = vmul.f32 %v207, %v207
      %v315 = vmul.f32 %v208, %v208
      %v316 = vmul.f32 %v209, %v209
      %v317 = vmul.f32 %v210, %v210
      %v318 = vmul.f32 %v211, %v211
      %v319 = vmul.f32 %v212, %v212
      %v320 = vmul.f32 %v213, %v213
      %v321 = vmul.f32 %v214, %v214
      %v322 = vmul.f32 %v215, %v215
      %v323 = vmul.f32 %v216, %v216
      %v324 = vmul.f32 %v217, %v217
      %v325 = vmul.f32 %v218, %v218
      %v326 = vsel %vm220, %v294, 0.0
      %v327 = vsel %vm220, %v295, 0.0
      %v328 = vadd.f32 %v326, %v327
      %v329 = vsel %vm220, %v296, 0.0
      %v330 = vadd.f32 %v328, %v329
      %v331 = vsel %vm220, %v297, 0.0
      %v332 = vadd.f32 %v330, %v331
      %v333 = vsel %vm220, %v298, 0.0
      %v334 = vadd.f32 %v332, %v333
      %v335 = vsel %vm220, %v299, 0.0
      %v336 = vadd.f32 %v334, %v335
      %v337 = vsel %vm220, %v300, 0.0
      %v338 = vadd.f32 %v336, %v337
      %v339 = vsel %vm220, %v301, 0.0
      %v340 = vadd.f32 %v338, %v339
      %v341 = vsel %vm220, %v302, 0.0
      %v342 = vadd.f32 %v340, %v341
      %v343 = vsel %vm220, %v303, 0.0
      %v344 = vadd.f32 %v342, %v343
      %v345 = vsel %vm220, %v304, 0.0
      %v346 = vadd.f32 %v344, %v345
      %v347 = vsel %vm220, %v305, 0.0
      %v348 = vadd.f32 %v346, %v347
      %v349 = vsel %vm220, %v306, 0.0
      %v350 = vadd.f32 %v348, %v349
      %v351 = vsel %vm220, %v307, 0.0
      %v352 = vadd.f32 %v350, %v351
      %v353 = vsel %vm220, %v308, 0.0
      %v354 = vadd.f32 %v352, %v353
      %v355 = vsel %vm220, %v309, 0.0
      %v356 = vadd.f32 %v354, %v355
      %v357 = vsel %vm220, %v310, 0.0
      %v358 = vadd.f32 %v356, %v357
      %v359 = vsel %vm220, %v311, 0.0
      %v360 = vadd.f32 %v358, %v359
      %v361 = vsel %vm220, %v312, 0.0
      %v362 = vadd.f32 %v360, %v361
      %v363 = vsel %vm220, %v313, 0.0
      %v364 = vadd.f32 %v362, %v363
      %v365 = vsel %vm220, %v314, 0.0
      %v366 = vadd.f32 %v364, %v365
      %v367 = vsel %vm220, %v315, 0.0
      %v368 = vadd.f32 %v366, %v367
      %v369 = vsel %vm220, %v316, 0.0
      %v370 = vadd.f32 %v368, %v369
      %v371 = vsel %vm220, %v317, 0.0
      %v372 = vadd.f32 %v370, %v371
      %v373 = vsel %vm220, %v318, 0.0
      %v374 = vadd.f32 %v372, %v373
      %v375 = vsel %vm220, %v319, 0.0
      %v376 = vadd.f32 %v374, %v375
      %v377 = vsel %vm220, %v320, 0.0
      %v378 = vadd.f32 %v376, %v377
      %v379 = vsel %vm220, %v321, 0.0
      %v380 = vadd.f32 %v378, %v379
      %v381 = vsel %vm220, %v322, 0.0
      %v382 = vadd.f32 %v380, %v381
      %v383 = vsel %vm220, %v323, 0.0
      %v384 = vadd.f32 %v382, %v383
      %v385 = vsel %vm220, %v324, 0.0
      %v386 = vadd.f32 %v384, %v385
      %v387 = vsel %vm220, %v325, 0.0
      %v388 = vadd.f32 %v386, %v387
      %v389 = vrot.slane %v388, 4
      %v390 = vadd.f32 %v388, %v389
      %v391 = vrot.slane %v390, 2
      %v392 = vadd.f32 %v390, %v391
      %v393 = vrot.slane %v392, 1
      %v394 = vadd.f32 %v392, %v393
      %v395 = vadd.f32 %v293, %v394
      %396 = vst.msk [vmem:[%s179] sm:$0x1] %vm291, %v395
      %p397 = scmp.lt.s32.totalorder %s18, 1
      %s398 = scalar_select %p397, %s18, 1
      %s399 = scalar_lea.vmem %s1, %s398
      %p400 = scmp.lt.s32.totalorder %s18, 1
      %s401 = scalar_select %p400, %s18, 1
      %s402 = scalar_lea.vmem %s2, %s401
      // Predicated region
      $region29: #{spade_forward.3} parent=23 // pred_check
        %p403 = pneg %p72
      $region30: #{spade_forward.3} parent=23 // pred_check_branch
        %405 = sbr.rel (%p403) target = $region32
      $region31: #{spade_forward.3} parent=23 // pred_region
        _
      $region32: #{spade_forward.3} parent=23 // pred_fallthru
        _
      // Predicated region
      $region33: #{spade_forward.3} parent=23 // pred_check
        %p406 = pneg %p98
      $region34: #{spade_forward.3} parent=23 // pred_check_branch
        %408 = sbr.rel (%p406) target = $region36
      $region35: #{spade_forward.3} parent=23 // pred_region
        _
      $region36: #{spade_forward.3} parent=23 // pred_fallthru
        _
    $region24: #{spade_forward.3} parent=5 // pred_fallthru
      _
    %p409 = scmp.le.s32.totalorder 2, %s9
    // Predicated region
    $region37: #{spade_forward.3} parent=5 // pred_check
      %p410 = pneg %p409
    $region38: #{spade_forward.3} parent=5 // pred_check_branch
      %412 = sbr.rel (%p410) target = $region40
    $region39: #{spade_forward.3} parent=5 // pred_region
      %s413 = ssub.s32 %s9, 2
      // Predicated region
      $region41: #{spade_forward.3} parent=39 // pred_check
        %p414 = pneg %p78
      $region42: #{spade_forward.3} parent=39 // pred_check_branch
        %416 = sbr.rel (%p414) target = $region44
      $region43: #{spade_forward.3} parent=39 // pred_region
        %p417 = scmp.lt.s32.totalorder %s20, 1
        %s418 = scalar_select %p417, %s20, 1
        %s419 = scalar_lea.vmem %s1, %s418
      $region44: #{spade_forward.3} parent=39 // pred_fallthru
        _
      // Predicated region
      $region45: #{spade_forward.3} parent=39 // pred_check
        %p420 = pneg %p104
      $region46: #{spade_forward.3} parent=39 // pred_check_branch
        %422 = sbr.rel (%p420) target = $region48
      $region47: #{spade_forward.3} parent=39 // pred_region
        %p423 = scmp.lt.s32.totalorder %s20, 1
        %s424 = scalar_select %p423, %s20, 1
        %s425 = scalar_lea.vmem %s2, %s424
      $region48: #{spade_forward.3} parent=39 // pred_fallthru
        _
    $region40: #{spade_forward.3} parent=5 // pred_fallthru
      _
  $region6: #{spade_forward.3} parent=0 // loop_footer
    %s13 = sadd.s32 1, %s9
  $region7: #{spade_forward.3} parent=0 // loop_footer_branch
    %8 = sbr.rel target = $region3
  $region8: #{spade_forward.3} parent=0 // loop_exit
    _

// kernel: spade_forward.5
$region0: #{spade_forward.5}
  #allocation0 [shape = 'u32[]', space=smem, size = 0x4, offset = 0x4, fixed_abs, tag = 'smem constant byte address 0x4 - core index']
  #allocation1 [shape = 'u32[144,128]{1,0:T(1,128)}', space=vmem, size = 0x12000, scoped, tag = 'internal scratch']
  %s0 = inlined_call_operand.vmem [shape: f32[2,16,16,32], index: 0, kind: input, shape index: {}]
  %s1 = inlined_call_operand.vmem [shape: bf16[2,16,24,128], index: 1, kind: input, shape index: {}]
  %s2 = inlined_call_operand.vmem [shape: f32[2,1,1,32], index: 2, kind: input, shape index: {}]
  %s3 = inlined_call_operand.vmem [shape: f32[2,1,1,32], index: 3, kind: input, shape index: {}]
  %s4 = inlined_call_operand.hbm [shape: f32[2,16,16,32], index: 4, kind: output, shape index: {}]
  %s5 = sld [smem:[#allocation0]]
  $region90: #{spade_forward.5} parent=0
    _
  %s7 = ssub.s32 1, %s5
  %s8 = scalar_select 0, %s7, %s5
  $region1: #{spade_forward.5} parent=0
    #allocation2 [shape = 'u8[131072]{0}', space=vmem, size = 0x20000, scoped, tag = 'input window, operand 1']
    #allocation3 [shape = 'u8[262144]{0}', space=vmem, size = 0x40000, scoped, tag = 'output window, operand 0']
    #allocation4 [shape = 's32[2]{0}', space=sflag, size = 0x8, scoped, tag = 'scoped memory for spade_forward.5']
    %9 = vsyncpa [#allocation4], 0
    %s10 = scalar_lea.sflag [#allocation4], 1
    %11 = vsyncpa %s10, 0
    loop: start=0, step=1, limit=4
    $region2: #{spade_forward.5} parent=1 // loop_pre_header
      _
    $region3: #{spade_forward.5} parent=1 // loop_header
      %s13 = sphi 0, %s17
      %p14 = scmp.ge.s32.totalorder %s13, 4
      %s20 = sphi 0, %s32
      %s21 = sphi 0, %s28
      %s22 = sphi 0, %s20
      %s23 = sphi 0, %s21
      %s24 = sphi 0, %s22
      %s25 = sphi 0, %s23
      %s37 = sphi 0, %s39
      %s40 = sphi 0, %s37
      %s41 = sphi 0, %s40
      %s57 = sphi 0, %s41
      %s65 = sphi 0, %s67
      %s68 = sphi 0, %s65
      %s69 = sphi 0, %s68
      %s85 = sphi 0, %s69
      %s91 = sphi 0, %s93
      %s94 = sphi 0, %s91
      %s95 = sphi 0, %s94
      %s111 = sphi 0, %s95
      %s117 = sphi 0, %s119
      %s120 = sphi 0, %s117
      %s121 = sphi 0, %s120
      %s137 = sphi 0, %s121
      %s145 = sphi 0, %s147
      %s148 = sphi 0, %s145
      %s149 = sphi 0, %s148
      %s165 = sphi 0, %s149
    $region4: #{spade_forward.5} parent=1 // loop_header_branch
      %16 = sbr.rel (%p14) target = $region8
    $region5: #{spade_forward.5} parent=1 // loop_body
      %s18 = ssub.s32 %s13, 1
      %s19 = ssub.s32 %s13, 2
      %s26 = sadd.s32 1, %s21
      %p27 = scmp.ge.s32.totalorder %s26, 1
      %s28 = scalar_select %p27, 0, %s26
      %s29 = sadd.s32 1, %s20
      %s30 = scalar_select %p27, %s29, %s20
      %p31 = scmp.ge.s32.totalorder %s30, 2
      %s32 = scalar_select %p31, 0, %s30
      %s33 = ssub.s32 %s20, %s32
      %s34 = ssub.s32 %s21, %s28
      %s35 = sor.u32 %s33, %s34
      %p36 = scmp.eq.s32.totalorder %s35, 0
      %s38 = sadd.s32 %s37, 1
      %s39 = scalar_select %p36, %s37, %s38
      %p42 = pneg %p36
      %p43 = scmp.eq.s32.totalorder %s13, 1
      %p44 = por %p42, %p43
      %p45 = scmp.ne.s32.totalorder %s37, %s40
      %p46 = scmp.eq.s32.totalorder %s13, 0
      %p47 = por %p45, %p46
      %p48 = scmp.ne.s32.totalorder %s37, %s40
      %p49 = scmp.eq.s32.totalorder %s18, 1
      %p50 = por %p48, %p49
      %p51 = scmp.ne.s32.totalorder %s40, %s41
      %p52 = scmp.eq.s32.totalorder %s18, 0
      %p53 = por %p51, %p52
      %p54 = scmp.ne.s32.totalorder %s40, %s41
      %p55 = scmp.eq.s32.totalorder %s19, 1
      %p56 = por %p54, %p55
      %p58 = scmp.ne.s32.totalorder %s41, %s57
      %p59 = scmp.eq.s32.totalorder %s19, 0
      %p60 = por %p58, %p59
      %s61 = ssub.s32 %s20, %s32
      %s62 = ssub.s32 %s21, %s28
      %s63 = sor.u32 %s61, %s62
      %p64 = scmp.eq.s32.totalorder %s63, 0
      %s66 = sadd.s32 %s65, 1
      %s67 = scalar_select %p64, %s65, %s66
      %p70 = pneg %p64
      %p71 = scmp.eq.s32.totalorder %s13, 1
      %p72 = por %p70, %p71
      %p73 = scmp.ne.s32.totalorder %s65, %s68
      %p74 = scmp.eq.s32.totalorder %s13, 0
      %p75 = por %p73, %p74
      %p76 = scmp.ne.s32.totalorder %s65, %s68
      %p77 = scmp.eq.s32.totalorder %s18, 1
      %p78 = por %p76, %p77
      %p79 = scmp.ne.s32.totalorder %s68, %s69
      %p80 = scmp.eq.s32.totalorder %s18, 0
      %p81 = por %p79, %p80
      %p82 = scmp.ne.s32.totalorder %s68, %s69
      %p83 = scmp.eq.s32.totalorder %s19, 1
      %p84 = por %p82, %p83
      %p86 = scmp.ne.s32.totalorder %s69, %s85
      %p87 = scmp.eq.s32.totalorder %s19, 0
      %p88 = por %p86, %p87
      %s89 = ssub.s32 %s20, %s32
      %p90 = scmp.eq.s32.totalorder %s89, 0
      %s92 = sadd.s32 %s91, 1
      %s93 = scalar_select %p90, %s91, %s92
      %p96 = pneg %p90
      %p97 = scmp.eq.s32.totalorder %s13, 1
      %p98 = por %p96, %p97
      %p99 = scmp.ne.s32.totalorder %s91, %s94
      %p100 = scmp.eq.s32.totalorder %s13, 0
      %p101 = por %p99, %p100
      %p102 = scmp.ne.s32.totalorder %s91, %s94
      %p103 = scmp.eq.s32.totalorder %s18, 1
      %p104 = por %p102, %p103
      %p105 = scmp.ne.s32.totalorder %s94, %s95
      %p106 = scmp.eq.s32.totalorder %s18, 0
      %p107 = por %p105, %p106
      %p108 = scmp.ne.s32.totalorder %s94, %s95
      %p109 = scmp.eq.s32.totalorder %s19, 1
      %p110 = por %p108, %p109
      %p112 = scmp.ne.s32.totalorder %s95, %s111
      %p113 = scmp.eq.s32.totalorder %s19, 0
      %p114 = por %p112, %p113
      %s115 = ssub.s32 %s20, %s32
      %p116 = scmp.eq.s32.totalorder %s115, 0
      %s118 = sadd.s32 %s117, 1
      %s119 = scalar_select %p116, %s117, %s118
      %p122 = pneg %p116
      %p123 = scmp.eq.s32.totalorder %s13, 1
      %p124 = por %p122, %p123
      %p125 = scmp.ne.s32.totalorder %s117, %s120
      %p126 = scmp.eq.s32.totalorder %s13, 0
      %p127 = por %p125, %p126
      %p128 = scmp.ne.s32.totalorder %s117, %s120
      %p129 = scmp.eq.s32.totalorder %s18, 1
      %p130 = por %p128, %p129
      %p131 = scmp.ne.s32.totalorder %s120, %s121
      %p132 = scmp.eq.s32.totalorder %s18, 0
      %p133 = por %p131, %p132
      %p134 = scmp.ne.s32.totalorder %s120, %s121
      %p135 = scmp.eq.s32.totalorder %s19, 1
      %p136 = por %p134, %p135
      %p138 = scmp.ne.s32.totalorder %s121, %s137
      %p139 = scmp.eq.s32.totalorder %s19, 0
      %p140 = por %p138, %p139
      %s141 = ssub.s32 %s20, %s32
      %s142 = ssub.s32 %s21, %s28
      %s143 = sor.u32 %s141, %s142
      %p144 = scmp.eq.s32.totalorder %s143, 0
      %s146 = sadd.s32 %s145, 1
      %s147 = scalar_select %p144, %s145, %s146
      %p150 = pneg %p144
      %p151 = scmp.eq.s32.totalorder %s13, 1
      %p152 = por %p150, %p151
      %p153 = scmp.ne.s32.totalorder %s145, %s148
      %p154 = scmp.eq.s32.totalorder %s13, 0
      %p155 = por %p153, %p154
      %p156 = scmp.ne.s32.totalorder %s145, %s148
      %p157 = scmp.eq.s32.totalorder %s18, 1
      %p158 = por %p156, %p157
      %p159 = scmp.ne.s32.totalorder %s148, %s149
      %p160 = scmp.eq.s32.totalorder %s18, 0
      %p161 = por %p159, %p160
      %p162 = scmp.ne.s32.totalorder %s148, %s149
      %p163 = scmp.eq.s32.totalorder %s19, 1
      %p164 = por %p162, %p163
      %p166 = scmp.ne.s32.totalorder %s149, %s165
      %p167 = scmp.eq.s32.totalorder %s19, 0
      %p168 = por %p166, %p167
      %p169 = scmp.le.s32.totalorder 1, %s13
      %p170 = scmp.lt.s32.totalorder %s13, 3
      %p171 = pnand %p169, %p170
      %p172 = pneg %p171
      // Predicated region
      $region9: #{spade_forward.5} parent=5 // pred_check
        _
      $region10: #{spade_forward.5} parent=5 // pred_check_branch
        %174 = sbr.rel (%p171) target = $region12
      $region11: #{spade_forward.5} parent=5 // pred_region
        %s175 = ssub.s32 %s13, 1
      $region12: #{spade_forward.5} parent=5 // pred_fallthru
        _
      %p176 = scmp.lt.s32.totalorder %s13, 2
      // Predicated region
      $region13: #{spade_forward.5} parent=5 // pred_check
        %p177 = pneg %p176
      $region14: #{spade_forward.5} parent=5 // pred_check_branch
        %179 = sbr.rel (%p177) target = $region16
      $region15: #{spade_forward.5} parent=5 // pred_region
        // Predicated region
        $region17: #{spade_forward.5} parent=15 // pred_check
          %p180 = pneg %p47
        $region18: #{spade_forward.5} parent=15 // pred_check_branch
          %182 = sbr.rel (%p180) target = $region20
        $region19: #{spade_forward.5} parent=15 // pred_region
          %s183 = smul.u32 16, %s21
          %p184 = scmp.lt.s32.totalorder %s20, 1
          %s185 = scalar_select %p184, %s20, 1
          %p186 = scmp.lt.s32.totalorder %s183, 15
          %s187 = scalar_select %p186, %s183, 15
          %s188 = smul.addr %s187, 2
          %s189 = smul.addr %s185, 32
          %s190 = sadd.s32 %s188, %s189
          %s191 = smul.addr %s190, 8
          %s192 = scalar_lea.vmem %s0, %s191
          %s193 = smul.u32 16, %s21
        $region20: #{spade_forward.5} parent=15 // pred_fallthru
          _
        // Predicated region
        $region21: #{spade_forward.5} parent=15 // pred_check
          %p194 = pneg %p75
        $region22: #{spade_forward.5} parent=15 // pred_check_branch
          %196 = sbr.rel (%p194) target = $region24
        $region23: #{spade_forward.5} parent=15 // pred_region
          %s197 = sand.u32 %s65, 1
          %s198 = sand.u32 %s65, 1
          %s199 = smul.addr %s198, 128
          %s200 = scalar_lea.vmem [#allocation2], %s199
          %s201 = smul.u32 16, %s21
          %s202 = smul.addr %s201, 3
          %s203 = smul.addr %s20, 48
          %s204 = sadd.s32 %s202, %s203
          %s205 = smul.addr %s204, 4
          %s206 = scalar_lea.vmem %s1, %s205
          // Predicated region
          $region25: #{spade_forward.5} parent=23 // pred_check
            _
          $region26: #{spade_forward.5} parent=23 // pred_check_branch
            %208 = sbr.rel (0) target = $region28
          $region27: #{spade_forward.5} parent=23 // pred_region
            // Predicated region
            $region29: #{spade_forward.5} parent=27 // pred_check
              _
            $region30: #{spade_forward.5} parent=27 // pred_check_branch
              %210 = sbr.rel target = $region32
            $region31: #{spade_forward.5} parent=27 // pred_region
              // Predicated region
              $region44: #{spade_forward.5} parent=31 // pred_check
                _
              $region45: #{spade_forward.5} parent=31 // pred_check_branch
                %287 = sbr.rel (0) target = $region47
              $region46: #{spade_forward.5} parent=31 // pred_region
                loop: start=0, step=1, limit=1
                $region48: #{spade_forward.5} parent=46 // loop_pre_header
                  _
                $region49: #{spade_forward.5} parent=46 // loop_header
                  %s289 = sphi 0, %s293
                  %p290 = scmp.ge.s32.totalorder %s289, 1
                  %s294 = sphi %s206, %s206
                  %s295 = sphi %s200, %s200
                $region50: #{spade_forward.5} parent=46 // loop_header_branch
                  %292 = sbr.rel (%p290) target = $region54
                $region51: #{spade_forward.5} parent=46 // loop_body
                  _
                $region52: #{spade_forward.5} parent=46 // loop_footer
                  %s293 = sadd.s32 1, %s289
                $region53: #{spade_forward.5} parent=46 // loop_footer_branch
                  %288 = sbr.rel target = $region49
                $region54: #{spade_forward.5} parent=46 // loop_exit
                  _
                loop: start=0, step=1, limit=1
                $region55: #{spade_forward.5} parent=46 // loop_pre_header
                  _
                $region56: #{spade_forward.5} parent=46 // loop_header
                  %s298 = sphi 0, %s302
                  %p299 = scmp.ge.s32.totalorder %s298, 1
                  %s303 = sphi %s206, %s206
                  %s304 = sphi %s200, %s200
                $region57: #{spade_forward.5} parent=46 // loop_header_branch
                  %301 = sbr.rel (%p299) target = $region61
                $region58: #{spade_forward.5} parent=46 // loop_body
                  %v305 = vld [vmem:[%s303] sm:$0xf]
                  %306 = vst [vmem:[%s304] sm:$0xf] %v305
                  %v307 = vld [vmem:[%s303 + $0x4] sm:$0xf]
                  %308 = vst [vmem:[%s304 + $0x4] sm:$0xf] %v307
                  %v309 = vld [vmem:[%s303 + $0xc] sm:$0xf]
                  %310 = vst [vmem:[%s304 + $0x8] sm:$0xf] %v309
                  %v311 = vld [vmem:[%s303 + $0x10] sm:$0xf]
                  %312 = vst [vmem:[%s304 + $0xc] sm:$0xf] %v311
                  %v313 = vld [vmem:[%s303 + $0x18] sm:$0xf]
                  %314 = vst [vmem:[%s304 + $0x10] sm:$0xf] %v313
                  %v315 = vld [vmem:[%s303 + $0x1c] sm:$0xf]
                  %316 = vst [vmem:[%s304 + $0x14] sm:$0xf] %v315
                  %v317 = vld [vmem:[%s303 + $0x24] sm:$0xf]
                  %318 = vst [vmem:[%s304 + $0x18] sm:$0xf] %v317
                  %v319 = vld [vmem:[%s303 + $0x28] sm:$0xf]
                  %320 = vst [vmem:[%s304 + $0x1c] sm:$0xf] %v319
                  %v321 = vld [vmem:[%s303 + $0x30] sm:$0xf]
                  %322 = vst [vmem:[%s304 + $0x20] sm:$0xf] %v321
                  %v323 = vld [vmem:[%s303 + $0x34] sm:$0xf]
                  %324 = vst [vmem:[%s304 + $0x24] sm:$0xf] %v323
                  %v325 = vld [vmem:[%s303 + $0x3c] sm:$0xf]
                  %326 = vst [vmem:[%s304 + $0x28] sm:$0xf] %v325
                  %v327 = vld [vmem:[%s303 + $0x40] sm:$0xf]
                  %328 = vst [vmem:[%s304 + $0x2c] sm:$0xf] %v327
                  %v329 = vld [vmem:[%s303 + $0x48] sm:$0xf]
                  %330 = vst [vmem:[%s304 + $0x30] sm:$0xf] %v329
                  %v331 = vld [vmem:[%s303 + $0x4c] sm:$0xf]
                  %332 = vst [vmem:[%s304 + $0x34] sm:$0xf] %v331
                  %v333 = vld [vmem:[%s303 + $0x54] sm:$0xf]
                  %334 = vst [vmem:[%s304 + $0x38] sm:$0xf] %v333
                  %v335 = vld [vmem:[%s303 + $0x58] sm:$0xf]
                  %336 = vst [vmem:[%s304 + $0x3c] sm:$0xf] %v335
                  %v337 = vld [vmem:[%s303 + $0x60] sm:$0xf]
                  %338 = vst [vmem:[%s304 + $0x40] sm:$0xf] %v337
                  %v339 = vld [vmem:[%s303 + $0x64] sm:$0xf]
                  %340 = vst [vmem:[%s304 + $0x44] sm:$0xf] %v339
                  %v341 = vld [vmem:[%s303 + $0x6c] sm:$0xf]
                  %342 = vst [vmem:[%s304 + $0x48] sm:$0xf] %v341
                  %v343 = vld [vmem:[%s303 + $0x70] sm:$0xf]
                  %344 = vst [vmem:[%s304 + $0x4c] sm:$0xf] %v343
                  %v345 = vld [vmem:[%s303 + $0x78] sm:$0xf]
                  %346 = vst [vmem:[%s304 + $0x50] sm:$0xf] %v345
                  %v347 = vld [vmem:[%s303 + $0x7c] sm:$0xf]
                  %348 = vst [vmem:[%s304 + $0x54] sm:$0xf] %v347
                  %v349 = vld [vmem:[%s303 + $0x84] sm:$0xf]
                  %350 = vst [vmem:[%s304 + $0x58] sm:$0xf] %v349
                  %v351 = vld [vmem:[%s303 + $0x88] sm:$0xf]
                  %352 = vst [vmem:[%s304 + $0x5c] sm:$0xf] %v351
                  %v353 = vld [vmem:[%s303 + $0x90] sm:$0xf]
                  %354 = vst [vmem:[%s304 + $0x60] sm:$0xf] %v353
                  %v355 = vld [vmem:[%s303 + $0x94] sm:$0xf]
                  %356 = vst [vmem:[%s304 + $0x64] sm:$0xf] %v355
                  %v357 = vld [vmem:[%s303 + $0x9c] sm:$0xf]
                  %358 = vst [vmem:[%s304 + $0x68] sm:$0xf] %v357
                  %v359 = vld [vmem:[%s303 + $0xa0] sm:$0xf]
                  %360 = vst [vmem:[%s304 + $0x6c] sm:$0xf] %v359
                  %v361 = vld [vmem:[%s303 + $0xa8] sm:$0xf]
                  %362 = vst [vmem:[%s304 + $0x70] sm:$0xf] %v361
                  %v363 = vld [vmem:[%s303 + $0xac] sm:$0xf]
                  %364 = vst [vmem:[%s304 + $0x74] sm:$0xf] %v363
                  %v365 = vld [vmem:[%s303 + $0xb4] sm:$0xf]
                  %366 = vst [vmem:[%s304 + $0x78] sm:$0xf] %v365
                  %v367 = vld [vmem:[%s303 + $0xb8] sm:$0xf]
                  %368 = vst [vmem:[%s304 + $0x7c] sm:$0xf] %v367
                $region59: #{spade_forward.5} parent=46 // loop_footer
                  %s302 = sadd.s32 1, %s298
                $region60: #{spade_forward.5} parent=46 // loop_footer_branch
                  %297 = sbr.rel target = $region56
                $region61: #{spade_forward.5} parent=46 // loop_exit
                  _
              $region47: #{spade_forward.5} parent=31 // pred_fallthru
                _
            $region32: #{spade_forward.5} parent=27 // pred_fallthru
              _
            // Predicated region
            $region33: #{spade_forward.5} parent=27 // pred_check
              _
            $region34: #{spade_forward.5} parent=27 // pred_check_branch
              %212 = sbr.rel (0) target = $region36
            $region35: #{spade_forward.5} parent=27 // pred_region
              loop: start=0, step=1, limit=1
              $region37: #{spade_forward.5} parent=35 // loop_pre_header
                _
              $region38: #{spade_forward.5} parent=35 // loop_header
                %s215 = sphi 0, %s219
                %p216 = scmp.ge.s32.totalorder %s215, 1
                %s220 = sphi %s206, %s206
                %s221 = sphi %s200, %s200
              $region39: #{spade_forward.5} parent=35 // loop_header_branch
                %218 = sbr.rel (%p216) target = $region43
              $region40: #{spade_forward.5} parent=35 // loop_body
                %v222 = vld [vmem:[%s220] sm:$0xf]
                %223 = vst [vmem:[%s221] sm:$0xf] %v222
                %v224 = vld [vmem:[%s220 + $0x4] sm:$0xf]
                %225 = vst [vmem:[%s221 + $0x4] sm:$0xf] %v224
                %v226 = vld [vmem:[%s220 + $0xc] sm:$0xf]
                %227 = vst [vmem:[%s221 + $0x8] sm:$0xf] %v226
                %v228 = vld [vmem:[%s220 + $0x10] sm:$0xf]
                %229 = vst [vmem:[%s221 + $0xc] sm:$0xf] %v228
                %v230 = vld [vmem:[%s220 + $0x18] sm:$0xf]
                %231 = vst [vmem:[%s221 + $0x10] sm:$0xf] %v230
                %v232 = vld [vmem:[%s220 + $0x1c] sm:$0xf]
                %233 = vst [vmem:[%s221 + $0x14] sm:$0xf] %v232
                %v234 = vld [vmem:[%s220 + $0x24] sm:$0xf]
                %235 = vst [vmem:[%s221 + $0x18] sm:$0xf] %v234
                %v236 = vld [vmem:[%s220 + $0x28] sm:$0xf]
                %237 = vst [vmem:[%s221 + $0x1c] sm:$0xf] %v236
                %v238 = vld [vmem:[%s220 + $0x30] sm:$0xf]
                %239 = vst [vmem:[%s221 + $0x20] sm:$0xf] %v238
                %v240 = vld [vmem:[%s220 + $0x34] sm:$0xf]
                %241 = vst [vmem:[%s221 + $0x24] sm:$0xf] %v240
                %v242 = vld [vmem:[%s220 + $0x3c] sm:$0xf]
                %243 = vst [vmem:[%s221 + $0x28] sm:$0xf] %v242
                %v244 = vld [vmem:[%s220 + $0x40] sm:$0xf]
                %245 = vst [vmem:[%s221 + $0x2c] sm:$0xf] %v244
                %v246 = vld [vmem:[%s220 + $0x48] sm:$0xf]
                %247 = vst [vmem:[%s221 + $0x30] sm:$0xf] %v246
                %v248 = vld [vmem:[%s220 + $0x4c] sm:$0xf]
                %249 = vst [vmem:[%s221 + $0x34] sm:$0xf] %v248
                %v250 = vld [vmem:[%s220 + $0x54] sm:$0xf]
                %251 = vst [vmem:[%s221 + $0x38] sm:$0xf] %v250
                %v252 = vld [vmem:[%s220 + $0x58] sm:$0xf]
                %253 = vst [vmem:[%s221 + $0x3c] sm:$0xf] %v252
                %v254 = vld [vmem:[%s220 + $0x60] sm:$0xf]
                %255 = vst [vmem:[%s221 + $0x40] sm:$0xf] %v254
                %v256 = vld [vmem:[%s220 + $0x64] sm:$0xf]
                %257 = vst [vmem:[%s221 + $0x44] sm:$0xf] %v256
                %v258 = vld [vmem:[%s220 + $0x6c] sm:$0xf]
                %259 = vst [vmem:[%s221 + $0x48] sm:$0xf] %v258
                %v260 = vld [vmem:[%s220 + $0x70] sm:$0xf]
                %261 = vst [vmem:[%s221 + $0x4c] sm:$0xf] %v260
                %v262 = vld [vmem:[%s220 + $0x78] sm:$0xf]
                %263 = vst [vmem:[%s221 + $0x50] sm:$0xf] %v262
                %v264 = vld [vmem:[%s220 + $0x7c] sm:$0xf]
                %265 = vst [vmem:[%s221 + $0x54] sm:$0xf] %v264
                %v266 = vld [vmem:[%s220 + $0x84] sm:$0xf]
                %267 = vst [vmem:[%s221 + $0x58] sm:$0xf] %v266
                %v268 = vld [vmem:[%s220 + $0x88] sm:$0xf]
                %269 = vst [vmem:[%s221 + $0x5c] sm:$0xf] %v268
                %v270 = vld [vmem:[%s220 + $0x90] sm:$0xf]
                %271 = vst [vmem:[%s221 + $0x60] sm:$0xf] %v270
                %v272 = vld [vmem:[%s220 + $0x94] sm:$0xf]
                %273 = vst [vmem:[%s221 + $0x64] sm:$0xf] %v272
                %v274 = vld [vmem:[%s220 + $0x9c] sm:$0xf]
                %275 = vst [vmem:[%s221 + $0x68] sm:$0xf] %v274
                %v276 = vld [vmem:[%s220 + $0xa0] sm:$0xf]
                %277 = vst [vmem:[%s221 + $0x6c] sm:$0xf] %v276
                %v278 = vld [vmem:[%s220 + $0xa8] sm:$0xf]
                %279 = vst [vmem:[%s221 + $0x70] sm:$0xf] %v278
                %v280 = vld [vmem:[%s220 + $0xac] sm:$0xf]
                %281 = vst [vmem:[%s221 + $0x74] sm:$0xf] %v280
                %v282 = vld [vmem:[%s220 + $0xb4] sm:$0xf]
                %283 = vst [vmem:[%s221 + $0x78] sm:$0xf] %v282
                %v284 = vld [vmem:[%s220 + $0xb8] sm:$0xf]
                %285 = vst [vmem:[%s221 + $0x7c] sm:$0xf] %v284
              $region41: #{spade_forward.5} parent=35 // loop_footer
                %s219 = sadd.s32 1, %s215
              $region42: #{spade_forward.5} parent=35 // loop_footer_branch
                %214 = sbr.rel target = $region38
              $region43: #{spade_forward.5} parent=35 // loop_exit
                _
            $region36: #{spade_forward.5} parent=27 // pred_fallthru
              _
          $region28: #{spade_forward.5} parent=23 // pred_fallthru
            _
          %369 = vnop
        $region24: #{spade_forward.5} parent=15 // pred_fallthru
          _
        // Predicated region
        $region62: #{spade_forward.5} parent=15 // pred_check
          %p370 = pneg %p101
        $region63: #{spade_forward.5} parent=15 // pred_check_branch
          %372 = sbr.rel (%p370) target = $region65
        $region64: #{spade_forward.5} parent=15 // pred_region
          %p373 = scmp.lt.s32.totalorder %s20, 1
          %s374 = scalar_select %p373, %s20, 1
          %s375 = scalar_lea.vmem %s2, %s374
        $region65: #{spade_forward.5} parent=15 // pred_fallthru
          _
        // Predicated region
        $region66: #{spade_forward.5} parent=15 // pred_check
          %p376 = pneg %p127
        $region67: #{spade_forward.5} parent=15 // pred_check_branch
          %378 = sbr.rel (%p376) target = $region69
        $region68: #{spade_forward.5} parent=15 // pred_region
          %p379 = scmp.lt.s32.totalorder %s20, 1
          %s380 = scalar_select %p379, %s20, 1
          %s381 = scalar_lea.vmem %s3, %s380
        $region69: #{spade_forward.5} parent=15 // pred_fallthru
          _
      $region16: #{spade_forward.5} parent=5 // pred_fallthru
        _
      %p382 = scmp.le.s32.totalorder 1, %s13
      %p383 = scmp.lt.s32.totalorder %s13, 3
      %p384 = pnand %p382, %p383
      %p385 = pneg %p384
      // Predicated region
      $region70: #{spade_forward.5} parent=5 // pred_check
        _
      $region71: #{spade_forward.5} parent=5 // pred_check_branch
        %387 = sbr.rel (%p384) target = $region73
      $region72: #{spade_forward.5} parent=5 // pred_region
        %s388 = ssub.s32 %s13, 1
        %s389 = sand.u32 %s68, 1
        %s390 = sand.u32 %s68, 1
        %s391 = smul.addr %s390, 128
        %s392 = scalar_lea.vmem [#allocation2], %s391
        // Predicated region
        $region74: #{spade_forward.5} parent=72 // pred_check
          %p393 = pneg %p81
        $region75: #{spade_forward.5} parent=72 // pred_check_branch
          %395 = sbr.rel (%p393) target = $region77
        $region76: #{spade_forward.5} parent=72 // pred_region
          _
        $region77: #{spade_forward.5} parent=72 // pred_fallthru
          _
        %s396 = smul.u32 16, %s23
        %p397 = scmp.lt.s32.totalorder %s22, 1
        %s398 = scalar_select %p397, %s22, 1
        %p399 = scmp.lt.s32.totalorder %s396, 15
        %s400 = scalar_select %p399, %s396, 15
        %s401 = smul.addr %s400, 2
        %s402 = smul.addr %s398, 32
        %s403 = sadd.s32 %s401, %s402
        %s404 = smul.addr %s403, 8
        %s405 = scalar_lea.vmem %s0, %s404
        %p406 = pneg %p53
        %p407 = pneg %p50
        %s408 = sand.u32 %s68, 1
        %s409 = sand.u32 %s68, 1
        %s410 = smul.addr %s409, 128
        %s411 = scalar_lea.vmem [#allocation2], %s410
        %p412 = pneg %p81
        %p413 = pneg %p78
        %p414 = scmp.lt.s32.totalorder %s22, 1
        %s415 = scalar_select %p414, %s22, 1
        %s416 = scalar_lea.vmem %s2, %s415
        %p417 = pneg %p107
        %p418 = pneg %p104
        %p419 = scmp.lt.s32.totalorder %s22, 1
        %s420 = scalar_select %p419, %s22, 1
        %s421 = scalar_lea.vmem %s3, %s420
        %p422 = pneg %p133
        %p423 = pneg %p130
        %p424 = pneg %p161
        %p425 = pneg %p158
        %s426 = sand.u32 %s148, 1
        %s427 = scalar_lea.sflag [#allocation4], %s426
        %s428 = sand.u32 %s148, 1
        %s429 = smul.addr %s428, 256
        %s430 = scalar_lea.vmem [#allocation3], %s429
        %s431 = smul.u32 16, %s23
        %p432 = scmp.lt.s32.totalorder %s22, 1
        %s433 = scalar_select %p432, %s22, 1
        %p434 = scmp.lt.s32.totalorder %s431, 15
        %s435 = scalar_select %p434, %s431, 15
        %s436 = smul.addr %s435, 2
        %s437 = smul.addr %s433, 32
        %s438 = sadd.s32 %s436, %s437
        %s439 = smul.addr %s438, 8
        %s440 = scalar_lea.vmem %s0, %s439
        %s441 = smul.u32 16, %s23
        %s442 = smul.u32 16, %s23
        %p443 = scmp.lt.s32.totalorder %s22, 1
        %s444 = scalar_select %p443, %s22, 1
        %s445 = scalar_lea.vmem %s2, %s444
        %p446 = scmp.lt.s32.totalorder %s22, 1
        %s447 = scalar_select %p446, %s22, 1
        %s448 = scalar_lea.vmem %s3, %s447
        %s449 = smul.u32 16, %s23
        %v450 = vld [vmem:[%s440] sm:$0xff]
        %v451 = vld [vmem:[%s440 + $0x8] sm:$0xff]
        %v452 = vld [vmem:[%s440 + $0x10] sm:$0xff]
        %v453 = vld [vmem:[%s440 + $0x18] sm:$0xff]
        %v454 = vld [vmem:[%s440 + $0x20] sm:$0xff]
        %v455 = vld [vmem:[%s440 + $0x28] sm:$0xff]
        %v456 = vld [vmem:[%s440 + $0x30] sm:$0xff]
        %v457 = vld [vmem:[%s440 + $0x38] sm:$0xff]
        %v458 = vld [vmem:[%s440 + $0x40] sm:$0xff]
        %v459 = vld [vmem:[%s440 + $0x48] sm:$0xff]
        %v460 = vld [vmem:[%s440 + $0x50] sm:$0xff]
        %v461 = vld [vmem:[%s440 + $0x58] sm:$0xff]
        %v462 = vld [vmem:[%s440 + $0x60] sm:$0xff]
        %v463 = vld [vmem:[%s440 + $0x68] sm:$0xff]
        %v464 = vld [vmem:[%s440 + $0x70] sm:$0xff]
        %v465 = vld [vmem:[%s440 + $0x78] sm:$0xff]
        %v466 = vld [vmem:[%s440 + $0x80] sm:$0xff]
        %v467 = vld [vmem:[%s440 + $0x88] sm:$0xff]
        %v468 = vld [vmem:[%s440 + $0x90] sm:$0xff]
        %v469 = vld [vmem:[%s440 + $0x98] sm:$0xff]
        %v470 = vld [vmem:[%s440 + $0xa0] sm:$0xff]
        %v471 = vld [vmem:[%s440 + $0xa8] sm:$0xff]
        %v472 = vld [vmem:[%s440 + $0xb0] sm:$0xff]
        %v473 = vld [vmem:[%s440 + $0xb8] sm:$0xff]
        %v474 = vld [vmem:[%s440 + $0xc0] sm:$0xff]
        %v475 = vld [vmem:[%s440 + $0xc8] sm:$0xff]
        %v476 = vld [vmem:[%s440 + $0xd0] sm:$0xff]
        %v477 = vld [vmem:[%s440 + $0xd8] sm:$0xff]
        %v478 = vld [vmem:[%s440 + $0xe0] sm:$0xff]
        %v479 = vld [vmem:[%s440 + $0xe8] sm:$0xff]
        %v480 = vld [vmem:[%s440 + $0xf0] sm:$0xff]
        %v481 = vld [vmem:[%s440 + $0xf8] sm:$0xff]
        %v482 = vld [vmem:[%s445] sm:$0x1]
        %v483 = vmul.f32 %v482, 0.00390625
        %v484 = vld [vmem:[%s448] sm:$0x1]
        %v485 = vmul.f32 %v484, 0.00390625
        %v486 = vmul.f32 %v483, %v483
        %v487 = vsub.f32 %v485, %v486
        %v488 = vmax.f32 %v487, 0.0
        %v489 = vadd.f32 %v488, 1e-05
        %v490 = vrsqrt.pop %v489
        %v491 = vld [vmem:[%s392] sm:$0xf]
        %v492 = vld [vmem:[%s392 + $0x4] sm:$0xf]
        %v493 = vld [vmem:[%s392 + $0x8] sm:$0xf]
        %v494 = vld [vmem:[%s392 + $0xc] sm:$0xf]
        %v495 = vld [vmem:[%s392 + $0x10] sm:$0xf]
        %v496 = vld [vmem:[%s392 + $0x14] sm:$0xf]
        %v497 = vld [vmem:[%s392 + $0x18] sm:$0xf]
        %v498 = vld [vmem:[%s392 + $0x1c] sm:$0xf]
        %v499 = vld [vmem:[%s392 + $0x20] sm:$0xf]
        %v500 = vld [vmem:[%s392 + $0x24] sm:$0xf]
        %v501 = vld [vmem:[%s392 + $0x28] sm:$0xf]
        %v502 = vld [vmem:[%s392 + $0x2c] sm:$0xf]
        %v503 = vld [vmem:[%s392 + $0x30] sm:$0xf]
        %v504 = vld [vmem:[%s392 + $0x34] sm:$0xf]
        %v505 = vld [vmem:[%s392 + $0x38] sm:$0xf]
        %v506 = vld [vmem:[%s392 + $0x3c] sm:$0xf]
        %v507 = vld [vmem:[%s392 + $0x40] sm:$0xf]
        %v508 = vld [vmem:[%s392 + $0x44] sm:$0xf]
        %v509 = vld [vmem:[%s392 + $0x48] sm:$0xf]
        %v510 = vld [vmem:[%s392 + $0x4c] sm:$0xf]
        %v511 = vld [vmem:[%s392 + $0x50] sm:$0xf]
        %v512 = vld [vmem:[%s392 + $0x54] sm:$0xf]
        %v513 = vld [vmem:[%s392 + $0x58] sm:$0xf]
        %v514 = vld [vmem:[%s392 + $0x5c] sm:$0xf]
        %v515 = vld [vmem:[%s392 + $0x60] sm:$0xf]
        %v516 = vld [vmem:[%s392 + $0x64] sm:$0xf]
        %v517 = vld [vmem:[%s392 + $0x68] sm:$0xf]
        %v518 = vld [vmem:[%s392 + $0x6c] sm:$0xf]
        %v519 = vld [vmem:[%s392 + $0x70] sm:$0xf]
        %v520 = vld [vmem:[%s392 + $0x74] sm:$0xf]
        %v521 = vld [vmem:[%s392 + $0x78] sm:$0xf]
        %v522 = vld [vmem:[%s392 + $0x7c] sm:$0xf]
        %v523 = vunpack.c.l.bf16 %v491
        %v524 = vunpack.c.l.bf16 %v492
        %v525 = vunpack.c.l.bf16 %v493
        %v526 = vunpack.c.l.bf16 %v494
        %v527 = vunpack.c.l.bf16 %v495
        %v528 = vunpack.c.l.bf16 %v496
        %v529 = vunpack.c.l.bf16 %v497
        %v530 = vunpack.c.l.bf16 %v498
        %v531 = vunpack.c.l.bf16 %v499
        %v532 = vunpack.c.l.bf16 %v500
        %v533 = vunpack.c.l.bf16 %v501
        %v534 = vunpack.c.l.bf16 %v502
        %v535 = vunpack.c.l.bf16 %v503
        %v536 = vunpack.c.l.bf16 %v504
        %v537 = vunpack.c.l.bf16 %v505
        %v538 = vunpack.c.l.bf16 %v506
        %v539 = vunpack.c.l.bf16 %v507
        %v540 = vunpack.c.l.bf16 %v508
        %v541 = vunpack.c.l.bf16 %v509
        %v542 = vunpack.c.l.bf16 %v510
        %v543 = vunpack.c.l.bf16 %v511
        %v544 = vunpack.c.l.bf16 %v512
        %v545 = vunpack.c.l.bf16 %v513
        %v546 = vunpack.c.l.bf16 %v514
        %v547 = vunpack.c.l.bf16 %v515
        %v548 = vunpack.c.l.bf16 %v516
        %v549 = vunpack.c.l.bf16 %v517
        %v550 = vunpack.c.l.bf16 %v518
        %v551 = vunpack.c.l.bf16 %v519
        %v552 = vunpack.c.l.bf16 %v520
        %v553 = vunpack.c.l.bf16 %v521
        %v554 = vunpack.c.l.bf16 %v522
        %v556 = vlaneseq
        %v557 = vshrl.u32 %v556, 7
        %v558 = vsub.s32 0, %v557
        %v559 = vrot.slane %v483, %v558
        %v561 = vsub.f32 %v450, %v559
        %v562 = vsub.f32 %v451, %v559
        %v563 = vsub.f32 %v452, %v559
        %v564 = vsub.f32 %v453, %v559
        %v565 = vsub.f32 %v454, %v559
        %v566 = vsub.f32 %v455, %v559
        %v567 = vsub.f32 %v456, %v559
        %v568 = vsub.f32 %v457, %v559
        %v569 = vsub.f32 %v458, %v559
        %v570 = vsub.f32 %v459, %v559
        %v571 = vsub.f32 %v460, %v559
        %v572 = vsub.f32 %v461, %v559
        %v573 = vsub.f32 %v462, %v559
        %v574 = vsub.f32 %v463, %v559
        %v575 = vsub.f32 %v464, %v559
        %v576 = vsub.f32 %v465, %v559
        %v577 = vsub.f32 %v466, %v559
        %v578 = vsub.f32 %v467, %v559
        %v579 = vsub.f32 %v468, %v559
        %v580 = vsub.f32 %v469, %v559
        %v581 = vsub.f32 %v470, %v559
        %v582 = vsub.f32 %v471, %v559
        %v583 = vsub.f32 %v472, %v559
        %v584 = vsub.f32 %v473, %v559
        %v585 = vsub.f32 %v474, %v559
        %v586 = vsub.f32 %v475, %v559
        %v587 = vsub.f32 %v476, %v559
        %v588 = vsub.f32 %v477, %v559
        %v589 = vsub.f32 %v478, %v559
        %v590 = vsub.f32 %v479, %v559
        %v591 = vsub.f32 %v480, %v559
        %v592 = vsub.f32 %v481, %v559
        %v594 = vlaneseq
        %v595 = vshrl.u32 %v594, 7
        %v596 = vsub.s32 0, %v595
        %v597 = vrot.slane %v490, %v596
        %v599 = vmul.f32 %v561, %v597
        %v600 = vmul.f32 %v562, %v597
        %v601 = vmul.f32 %v563, %v597
        %v602 = vmul.f32 %v564, %v597
        %v603 = vmul.f32 %v565, %v597
        %v604 = vmul.f32 %v566, %v597
        %v605 = vmul.f32 %v567, %v597
        %v606 = vmul.f32 %v568, %v597
        %v607 = vmul.f32 %v569, %v597
        %v608 = vmul.f32 %v570, %v597
        %v609 = vmul.f32 %v571, %v597
        %v610 = vmul.f32 %v572, %v597
        %v611 = vmul.f32 %v573, %v597
        %v612 = vmul.f32 %v574, %v597
        %v613 = vmul.f32 %v575, %v597
        %v614 = vmul.f32 %v576, %v597
        %v615 = vmul.f32 %v577, %v597
        %v616 = vmul.f32 %v578, %v597
        %v617 = vmul.f32 %v579, %v597
        %v618 = vmul.f32 %v580, %v597
        %v619 = vmul.f32 %v581, %v597
        %v620 = vmul.f32 %v582, %v597
        %v621 = vmul.f32 %v583, %v597
        %v622 = vmul.f32 %v584, %v597
        %v623 = vmul.f32 %v585, %v597
        %v624 = vmul.f32 %v586, %v597
        %v625 = vmul.f32 %v587, %v597
        %v626 = vmul.f32 %v588, %v597
        %v627 = vmul.f32 %v589, %v597
        %v628 = vmul.f32 %v590, %v597
        %v629 = vmul.f32 %v591, %v597
        %v630 = vmul.f32 %v592, %v597
        %v631 = vadd.f32 %v523, 1.0
        %v632 = vadd.f32 %v524, 1.0
        %v633 = vadd.f32 %v525, 1.0
        %v634 = vadd.f32 %v526, 1.0
        %v635 = vadd.f32 %v527, 1.0
        %v636 = vadd.f32 %v528, 1.0
        %v637 = vadd.f32 %v529, 1.0
        %v638 = vadd.f32 %v530, 1.0
        %v639 = vadd.f32 %v531, 1.0
        %v640 = vadd.f32 %v532, 1.0
        %v641 = vadd.f32 %v533, 1.0
        %v642 = vadd.f32 %v534, 1.0
        %v643 = vadd.f32 %v535, 1.0
        %v644 = vadd.f32 %v536, 1.0
        %v645 = vadd.f32 %v537, 1.0
        %v646 = vadd.f32 %v538, 1.0
        %v647 = vadd.f32 %v539, 1.0
        %v648 = vadd.f32 %v540, 1.0
        %v649 = vadd.f32 %v541, 1.0
        %v650 = vadd.f32 %v542, 1.0
        %v651 = vadd.f32 %v543, 1.0
        %v652 = vadd.f32 %v544, 1.0
        %v653 = vadd.f32 %v545, 1.0
        %v654 = vadd.f32 %v546, 1.0
        %v655 = vadd.f32 %v547, 1.0
        %v656 = vadd.f32 %v548, 1.0
        %v657 = vadd.f32 %v549, 1.0
        %v658 = vadd.f32 %v550, 1.0
        %v659 = vadd.f32 %v551, 1.0
        %v660 = vadd.f32 %v552, 1.0
        %v661 = vadd.f32 %v553, 1.0
        %v662 = vadd.f32 %v554, 1.0
        %v663 = vmul.f32 %v599, %v631
        %v664 = vmul.f32 %v600, %v632
        %v665 = vmul.f32 %v601, %v633
        %v666 = vmul.f32 %v602, %v634
        %v667 = vmul.f32 %v603, %v635
        %v668 = vmul.f32 %v604, %v636
        %v669 = vmul.f32 %v605, %v637
        %v670 = vmul.f32 %v606, %v638
        %v671 = vmul.f32 %v607, %v639
        %v672 = vmul.f32 %v608, %v640
        %v673 = vmul.f32 %v609, %v641
        %v674 = vmul.f32 %v610, %v642
        %v675 = vmul.f32 %v611, %v643
        %v676 = vmul.f32 %v612, %v644
        %v677 = vmul.f32 %v613, %v645
        %v678 = vmul.f32 %v614, %v646
        %v679 = vmul.f32 %v615, %v647
        %v680 = vmul.f32 %v616, %v648
        %v681 = vmul.f32 %v617, %v649
        %v682 = vmul.f32 %v618, %v650
        %v683 = vmul.f32 %v619, %v651
        %v684 = vmul.f32 %v620, %v652
        %v685 = vmul.f32 %v621, %v653
        %v686 = vmul.f32 %v622, %v654
        %v687 = vmul.f32 %v623, %v655
        %v688 = vmul.f32 %v624, %v656
        %v689 = vmul.f32 %v625, %v657
        %v690 = vmul.f32 %v626, %v658
        %v691 = vmul.f32 %v627, %v659
        %v692 = vmul.f32 %v628, %v660
        %v693 = vmul.f32 %v629, %v661
        %v694 = vmul.f32 %v630, %v662
        %727 = vrot.lane.b32.xlu0 %v523, 96
        %v728 = vpop.permute.xlu0 %727
        %729 = vrot.lane.b32.xlu0 %v524, 96
        %v730 = vpop.permute.xlu0 %729
        %731 = vrot.lane.b32.xlu0 %v525, 96
        %v732 = vpop.permute.xlu0 %731
        %733 = vrot.lane.b32.xlu0 %v526, 96
        %v734 = vpop.permute.xlu0 %733
        %735 = vrot.lane.b32.xlu0 %v527, 96
        %v736 = vpop.permute.xlu0 %735
        %737 = vrot.lane.b32.xlu0 %v528, 96
        %v738 = vpop.permute.xlu0 %737
        %739 = vrot.lane.b32.xlu0 %v529, 96
        %v740 = vpop.permute.xlu0 %739
        %741 = vrot.lane.b32.xlu0 %v530, 96
        %v742 = vpop.permute.xlu0 %741
        %743 = vrot.lane.b32.xlu0 %v531, 96
        %v744 = vpop.permute.xlu0 %743
        %745 = vrot.lane.b32.xlu0 %v532, 96
        %v746 = vpop.permute.xlu0 %745
        %747 = vrot.lane.b32.xlu0 %v533, 96
        %v748 = vpop.permute.xlu0 %747
        %749 = vrot.lane.b32.xlu0 %v534, 96
        %v750 = vpop.permute.xlu0 %749
        %751 = vrot.lane.b32.xlu0 %v535, 96
        %v752 = vpop.permute.xlu0 %751
        %753 = vrot.lane.b32.xlu0 %v536, 96
        %v754 = vpop.permute.xlu0 %753
        %755 = vrot.lane.b32.xlu0 %v537, 96
        %v756 = vpop.permute.xlu0 %755
        %757 = vrot.lane.b32.xlu0 %v538, 96
        %v758 = vpop.permute.xlu0 %757
        %759 = vrot.lane.b32.xlu0 %v539, 96
        %v760 = vpop.permute.xlu0 %759
        %761 = vrot.lane.b32.xlu0 %v540, 96
        %v762 = vpop.permute.xlu0 %761
        %763 = vrot.lane.b32.xlu0 %v541, 96
        %v764 = vpop.permute.xlu0 %763
        %765 = vrot.lane.b32.xlu0 %v542, 96
        %v766 = vpop.permute.xlu0 %765
        %767 = vrot.lane.b32.xlu0 %v543, 96
        %v768 = vpop.permute.xlu0 %767
        %769 = vrot.lane.b32.xlu0 %v544, 96
        %v770 = vpop.permute.xlu0 %769
        %771 = vrot.lane.b32.xlu0 %v545, 96
        %v772 = vpop.permute.xlu0 %771
        %773 = vrot.lane.b32.xlu0 %v546, 96
        %v774 = vpop.permute.xlu0 %773
        %775 = vrot.lane.b32.xlu0 %v547, 96
        %v776 = vpop.permute.xlu0 %775
        %777 = vrot.lane.b32.xlu0 %v548, 96
        %v778 = vpop.permute.xlu0 %777
        %779 = vrot.lane.b32.xlu0 %v549, 96
        %v780 = vpop.permute.xlu0 %779
        %781 = vrot.lane.b32.xlu0 %v550, 96
        %v782 = vpop.permute.xlu0 %781
        %783 = vrot.lane.b32.xlu0 %v551, 96
        %v784 = vpop.permute.xlu0 %783
        %785 = vrot.lane.b32.xlu0 %v552, 96
        %v786 = vpop.permute.xlu0 %785
        %787 = vrot.lane.b32.xlu0 %v553, 96
        %v788 = vpop.permute.xlu0 %787
        %789 = vrot.lane.b32.xlu0 %v554, 96
        %v790 = vpop.permute.xlu0 %789
        %v823 = vadd.f32 %v663, %v728
        %v824 = vadd.f32 %v664, %v730
        %v825 = vadd.f32 %v665, %v732
        %v826 = vadd.f32 %v666, %v734
        %v827 = vadd.f32 %v667, %v736
        %v828 = vadd.f32 %v668, %v738
        %v829 = vadd.f32 %v669, %v740
        %v830 = vadd.f32 %v670, %v742
        %v831 = vadd.f32 %v671, %v744
        %v832 = vadd.f32 %v672, %v746
        %v833 = vadd.f32 %v673, %v748
        %v834 = vadd.f32 %v674, %v750
        %v835 = vadd.f32 %v675, %v752
        %v836 = vadd.f32 %v676, %v754
        %v837 = vadd.f32 %v677, %v756
        %v838 = vadd.f32 %v678, %v758
        %v839 = vadd.f32 %v679, %v760
        %v840 = vadd.f32 %v680, %v762
        %v841 = vadd.f32 %v681, %v764
        %v842 = vadd.f32 %v682, %v766
        %v843 = vadd.f32 %v683, %v768
        %v844 = vadd.f32 %v684, %v770
        %v845 = vadd.f32 %v685, %v772
        %v846 = vadd.f32 %v686, %v774
        %v847 = vadd.f32 %v687, %v776
        %v848 = vadd.f32 %v688, %v778
        %v849 = vadd.f32 %v689, %v780
        %v850 = vadd.f32 %v690, %v782
        %v851 = vadd.f32 %v691, %v784
        %v852 = vadd.f32 %v692, %v786
        %v853 = vadd.f32 %v693, %v788
        %v854 = vadd.f32 %v694, %v790
        %vm855 = vcmask 261120
        %856 = vst.msk [vmem:[%s430] sm:$0xff] %vm855, %v823
        %857 = vst.msk [vmem:[%s430 + $0x8] sm:$0xff] %vm855, %v824
        %858 = vst.msk [vmem:[%s430 + $0x10] sm:$0xff] %vm855, %v825
        %859 = vst.msk [vmem:[%s430 + $0x18] sm:$0xff] %vm855, %v826
        %860 = vst.msk [vmem:[%s430 + $0x20] sm:$0xff] %vm855, %v827
        %861 = vst.msk [vmem:[%s430 + $0x28] sm:$0xff] %vm855, %v828
        %862 = vst.msk [vmem:[%s430 + $0x30] sm:$0xff] %vm855, %v829
        %863 = vst.msk [vmem:[%s430 + $0x38] sm:$0xff] %vm855, %v830
        %864 = vst.msk [vmem:[%s430 + $0x40] sm:$0xff] %vm855, %v831
        %865 = vst.msk [vmem:[%s430 + $0x48] sm:$0xff] %vm855, %v832
        %866 = vst.msk [vmem:[%s430 + $0x50] sm:$0xff] %vm855, %v833
        %867 = vst.msk [vmem:[%s430 + $0x58] sm:$0xff] %vm855, %v834
        %868 = vst.msk [vmem:[%s430 + $0x60] sm:$0xff] %vm855, %v835
        %869 = vst.msk [vmem:[%s430 + $0x68] sm:$0xff] %vm855, %v836
        %870 = vst.msk [vmem:[%s430 + $0x70] sm:$0xff] %vm855, %v837
        %871 = vst.msk [vmem:[%s430 + $0x78] sm:$0xff] %vm855, %v838
        %872 = vst.msk [vmem:[%s430 + $0x80] sm:$0xff] %vm855, %v839
        %873 = vst.msk [vmem:[%s430 + $0x88] sm:$0xff] %vm855, %v840
        %874 = vst.msk [vmem:[%s430 + $0x90] sm:$0xff] %vm855, %v841
        %875 = vst.msk [vmem:[%s430 + $0x98] sm:$0xff] %vm855, %v842
        %876 = vst.msk [vmem:[%s430 + $0xa0] sm:$0xff] %vm855, %v843
        %877 = vst.msk [vmem:[%s430 + $0xa8] sm:$0xff] %vm855, %v844
        %878 = vst.msk [vmem:[%s430 + $0xb0] sm:$0xff] %vm855, %v845
        %879 = vst.msk [vmem:[%s430 + $0xb8] sm:$0xff] %vm855, %v846
        %880 = vst.msk [vmem:[%s430 + $0xc0] sm:$0xff] %vm855, %v847
        %881 = vst.msk [vmem:[%s430 + $0xc8] sm:$0xff] %vm855, %v848
        %882 = vst.msk [vmem:[%s430 + $0xd0] sm:$0xff] %vm855, %v849
        %883 = vst.msk [vmem:[%s430 + $0xd8] sm:$0xff] %vm855, %v850
        %884 = vst.msk [vmem:[%s430 + $0xe0] sm:$0xff] %vm855, %v851
        %885 = vst.msk [vmem:[%s430 + $0xe8] sm:$0xff] %vm855, %v852
        %886 = vst.msk [vmem:[%s430 + $0xf0] sm:$0xff] %vm855, %v853
        %887 = vst.msk [vmem:[%s430 + $0xf8] sm:$0xff] %vm855, %v854
        %s888 = sand.u32 %s148, 1
        %s889 = scalar_lea.sflag [#allocation4], %s888
        %s890 = sand.u32 %s148, 1
        %s891 = smul.addr %s890, 256
        %s892 = scalar_lea.vmem [#allocation3], %s891
        // Predicated region
        $region78: #{spade_forward.5} parent=72 // pred_check
          %p893 = pneg %p158
        $region79: #{spade_forward.5} parent=72 // pred_check_branch
          %895 = sbr.rel (%p893) target = $region81
        $region80: #{spade_forward.5} parent=72 // pred_region
          %s896 = smul.u32 16, %s23
          %s898 = ssub.s32 4096, 4096
          %899 = vsyncadd %s889, %s898
          %s900 = smul.addr %s896, 2
          %s901 = smul.addr %s22, 32
          %s902 = sadd.s32 %s900, %s901
          %s903 = smul.addr %s902, 128
          %s904 = scalar_lea.hbm %s4, %s903
          %s905 = sshll.u32 %s892, 4
          %s906 = int_to_ptr.vmem [resolvable:$true] %s905
          %911 = dma.vmem_to_hbm [thread:$0]  %s906, 4096, %s904, %s889, 128, 128, 8
        $region81: #{spade_forward.5} parent=72 // pred_fallthru
          _
      $region73: #{spade_forward.5} parent=5 // pred_fallthru
        _
      %p912 = scmp.le.s32.totalorder 2, %s13
      // Predicated region
      $region82: #{spade_forward.5} parent=5 // pred_check
        %p913 = pneg %p912
      $region83: #{spade_forward.5} parent=5 // pred_check_branch
        %915 = sbr.rel (%p913) target = $region85
      $region84: #{spade_forward.5} parent=5 // pred_region
        %s916 = ssub.s32 %s13, 2
        // Predicated region
        $region86: #{spade_forward.5} parent=84 // pred_check
          %p917 = pneg %p164
        $region87: #{spade_forward.5} parent=84 // pred_check_branch
          %919 = sbr.rel (%p917) target = $region89
        $region88: #{spade_forward.5} parent=84 // pred_region
          %s920 = sand.u32 %s149, 1
          %s921 = scalar_lea.sflag [#allocation4], %s920
          %s922 = sand.u32 %s149, 1
          %s923 = smul.addr %s922, 256
          %s924 = scalar_lea.vmem [#allocation3], %s923
          %925 = dma.done %s921, 4096
        $region89: #{spade_forward.5} parent=84 // pred_fallthru
          _
      $region85: #{spade_forward.5} parent=5 // pred_fallthru
        _
    $region6: #{spade_forward.5} parent=1 // loop_footer
      %s17 = sadd.s32 1, %s13
    $region7: #{spade_forward.5} parent=1 // loop_footer_branch
      %12 = sbr.rel target = $region3
    $region8: #{spade_forward.5} parent=1 // loop_exit
      _
    %926 = vsyncpa [#allocation4], 1
    %s927 = scalar_lea.sflag [#allocation4], 1
    %928 = vsyncpa %s927, 1

// kernel: spade_forward.4
$region0: #{spade_forward.4}
  #allocation0 [shape = 'u32[]', space=smem, size = 0x4, offset = 0x4, fixed_abs, tag = 'smem constant byte address 0x4 - core index']
  #allocation1 [shape = 'u32[144,128]{1,0:T(1,128)}', space=vmem, size = 0x12000, scoped, tag = 'internal scratch']
  %s0 = inlined_call_operand.vmem [shape: bf16[2,456,32], index: 0, kind: input, shape index: {}]
  %s1 = inlined_call_operand.vmem [shape: f32[456,1], index: 1, kind: input, shape index: {}]
  %s2 = inlined_call_operand.vmem [shape: bf16[32,128], index: 2, kind: input, shape index: {}]
  %s3 = inlined_call_operand.vmem [shape: f32[1,128], index: 3, kind: input, shape index: {}]
  %s4 = inlined_call_operand.vmem [shape: bf16[3,384,128], index: 4, kind: input, shape index: {}]
  %s5 = inlined_call_operand.vmem [shape: f32[1,128], index: 5, kind: input, shape index: {}]
  %s6 = inlined_call_operand.vmem [shape: bf16[2,384,128], index: 6, kind: output, shape index: {}]
  %s7 = sld [smem:[#allocation0]]
  $region57: #{spade_forward.4} parent=0
    _
  %s9 = ssub.s32 1, %s7
  %s10 = scalar_select 0, %s9, %s7
  loop: start=0, step=1, limit=4
  $region2: #{spade_forward.4} parent=0 // loop_pre_header
    _
  $region3: #{spade_forward.4} parent=0 // loop_header
    %s12 = sphi 0, %s16
    %p13 = scmp.ge.s32.totalorder %s12, 4
    %s19 = sphi 0, %s31
    %s20 = sphi 0, %s27
    %s21 = sphi 0, %s19
    %s22 = sphi 0, %s20
    %s23 = sphi 0, %s21
    %s24 = sphi 0, %s22
    %s34 = sphi 0, %s36
    %s37 = sphi 0, %s34
    %s38 = sphi 0, %s37
    %s54 = sphi 0, %s38
    %s58 = sphi 0, %s58
    %s60 = sphi 0, %s58
    %s61 = sphi 0, %s60
    %s75 = sphi 0, %s61
    %s79 = sphi 0, %s79
    %s81 = sphi 0, %s79
    %s82 = sphi 0, %s81
    %s96 = sphi 0, %s82
    %s100 = sphi 0, %s100
    %s102 = sphi 0, %s100
    %s103 = sphi 0, %s102
    %s117 = sphi 0, %s103
    %s123 = sphi 0, %s125
    %s126 = sphi 0, %s123
    %s127 = sphi 0, %s126
    %s143 = sphi 0, %s127
    %s149 = sphi 0, %s151
    %s152 = sphi 0, %s149
    %s153 = sphi 0, %s152
    %s169 = sphi 0, %s153
    %s177 = sphi 0, %s179
    %s180 = sphi 0, %s177
    %s181 = sphi 0, %s180
    %s197 = sphi 0, %s181
  $region4: #{spade_forward.4} parent=0 // loop_header_branch
    %15 = sbr.rel (%p13) target = $region8
  $region5: #{spade_forward.4} parent=0 // loop_body
    %s17 = ssub.s32 %s12, 1
    %s18 = ssub.s32 %s12, 2
    %s25 = sadd.s32 1, %s20
    %p26 = scmp.ge.s32.totalorder %s25, 1
    %s27 = scalar_select %p26, 0, %s25
    %s28 = sadd.s32 1, %s19
    %s29 = scalar_select %p26, %s28, %s19
    %p30 = scmp.ge.s32.totalorder %s29, 2
    %s31 = scalar_select %p30, 0, %s29
    %s32 = ssub.s32 %s19, %s31
    %p33 = scmp.eq.s32.totalorder %s32, 0
    %s35 = sadd.s32 %s34, 1
    %s36 = scalar_select %p33, %s34, %s35
    %p39 = pneg %p33
    %p40 = scmp.eq.s32.totalorder %s12, 1
    %p41 = por %p39, %p40
    %p42 = scmp.ne.s32.totalorder %s34, %s37
    %p43 = scmp.eq.s32.totalorder %s12, 0
    %p44 = por %p42, %p43
    %p45 = scmp.ne.s32.totalorder %s34, %s37
    %p46 = scmp.eq.s32.totalorder %s17, 1
    %p47 = por %p45, %p46
    %p48 = scmp.ne.s32.totalorder %s37, %s38
    %p49 = scmp.eq.s32.totalorder %s17, 0
    %p50 = por %p48, %p49
    %p51 = scmp.ne.s32.totalorder %s37, %s38
    %p52 = scmp.eq.s32.totalorder %s18, 1
    %p53 = por %p51, %p52
    %p55 = scmp.ne.s32.totalorder %s38, %s54
    %p56 = scmp.eq.s32.totalorder %s18, 0
    %p57 = por %p55, %p56
    %s59 = sadd.s32 %s58, 1
    %p62 = scmp.eq.s32.totalorder %s12, 1
    %p63 = scmp.ne.s32.totalorder %s58, %s60
    %p64 = scmp.eq.s32.totalorder %s12, 0
    %p65 = por %p63, %p64
    %p66 = scmp.ne.s32.totalorder %s58, %s60
    %p67 = scmp.eq.s32.totalorder %s17, 1
    %p68 = por %p66, %p67
    %p69 = scmp.ne.s32.totalorder %s60, %s61
    %p70 = scmp.eq.s32.totalorder %s17, 0
    %p71 = por %p69, %p70
    %p72 = scmp.ne.s32.totalorder %s60, %s61
    %p73 = scmp.eq.s32.totalorder %s18, 1
    %p74 = por %p72, %p73
    %p76 = scmp.ne.s32.totalorder %s61, %s75
    %p77 = scmp.eq.s32.totalorder %s18, 0
    %p78 = por %p76, %p77
    %s80 = sadd.s32 %s79, 1
    %p83 = scmp.eq.s32.totalorder %s12, 1
    %p84 = scmp.ne.s32.totalorder %s79, %s81
    %p85 = scmp.eq.s32.totalorder %s12, 0
    %p86 = por %p84, %p85
    %p87 = scmp.ne.s32.totalorder %s79, %s81
    %p88 = scmp.eq.s32.totalorder %s17, 1
    %p89 = por %p87, %p88
    %p90 = scmp.ne.s32.totalorder %s81, %s82
    %p91 = scmp.eq.s32.totalorder %s17, 0
    %p92 = por %p90, %p91
    %p93 = scmp.ne.s32.totalorder %s81, %s82
    %p94 = scmp.eq.s32.totalorder %s18, 1
    %p95 = por %p93, %p94
    %p97 = scmp.ne.s32.totalorder %s82, %s96
    %p98 = scmp.eq.s32.totalorder %s18, 0
    %p99 = por %p97, %p98
    %s101 = sadd.s32 %s100, 1
    %p104 = scmp.eq.s32.totalorder %s12, 1
    %p105 = scmp.ne.s32.totalorder %s100, %s102
    %p106 = scmp.eq.s32.totalorder %s12, 0
    %p107 = por %p105, %p106
    %p108 = scmp.ne.s32.totalorder %s100, %s102
    %p109 = scmp.eq.s32.totalorder %s17, 1
    %p110 = por %p108, %p109
    %p111 = scmp.ne.s32.totalorder %s102, %s103
    %p112 = scmp.eq.s32.totalorder %s17, 0
    %p113 = por %p111, %p112
    %p114 = scmp.ne.s32.totalorder %s102, %s103
    %p115 = scmp.eq.s32.totalorder %s18, 1
    %p116 = por %p114, %p115
    %p118 = scmp.ne.s32.totalorder %s103, %s117
    %p119 = scmp.eq.s32.totalorder %s18, 0
    %p120 = por %p118, %p119
    %s121 = ssub.s32 %s20, %s27
    %p122 = scmp.eq.s32.totalorder %s121, 0
    %s124 = sadd.s32 %s123, 1
    %s125 = scalar_select %p122, %s123, %s124
    %p128 = pneg %p122
    %p129 = scmp.eq.s32.totalorder %s12, 1
    %p130 = por %p128, %p129
    %p131 = scmp.ne.s32.totalorder %s123, %s126
    %p132 = scmp.eq.s32.totalorder %s12, 0
    %p133 = por %p131, %p132
    %p134 = scmp.ne.s32.totalorder %s123, %s126
    %p135 = scmp.eq.s32.totalorder %s17, 1
    %p136 = por %p134, %p135
    %p137 = scmp.ne.s32.totalorder %s126, %s127
    %p138 = scmp.eq.s32.totalorder %s17, 0
    %p139 = por %p137, %p138
    %p140 = scmp.ne.s32.totalorder %s126, %s127
    %p141 = scmp.eq.s32.totalorder %s18, 1
    %p142 = por %p140, %p141
    %p144 = scmp.ne.s32.totalorder %s127, %s143
    %p145 = scmp.eq.s32.totalorder %s18, 0
    %p146 = por %p144, %p145
    %s147 = ssub.s32 %s20, %s27
    %p148 = scmp.eq.s32.totalorder %s147, 0
    %s150 = sadd.s32 %s149, 1
    %s151 = scalar_select %p148, %s149, %s150
    %p154 = pneg %p148
    %p155 = scmp.eq.s32.totalorder %s12, 1
    %p156 = por %p154, %p155
    %p157 = scmp.ne.s32.totalorder %s149, %s152
    %p158 = scmp.eq.s32.totalorder %s12, 0
    %p159 = por %p157, %p158
    %p160 = scmp.ne.s32.totalorder %s149, %s152
    %p161 = scmp.eq.s32.totalorder %s17, 1
    %p162 = por %p160, %p161
    %p163 = scmp.ne.s32.totalorder %s152, %s153
    %p164 = scmp.eq.s32.totalorder %s17, 0
    %p165 = por %p163, %p164
    %p166 = scmp.ne.s32.totalorder %s152, %s153
    %p167 = scmp.eq.s32.totalorder %s18, 1
    %p168 = por %p166, %p167
    %p170 = scmp.ne.s32.totalorder %s153, %s169
    %p171 = scmp.eq.s32.totalorder %s18, 0
    %p172 = por %p170, %p171
    %s173 = ssub.s32 %s19, %s31
    %s174 = ssub.s32 %s20, %s27
    %s175 = sor.u32 %s173, %s174
    %p176 = scmp.eq.s32.totalorder %s175, 0
    %s178 = sadd.s32 %s177, 1
    %s179 = scalar_select %p176, %s177, %s178
    %p182 = pneg %p176
    %p183 = scmp.eq.s32.totalorder %s12, 1
    %p184 = por %p182, %p183
    %p185 = scmp.ne.s32.totalorder %s177, %s180
    %p186 = scmp.eq.s32.totalorder %s12, 0
    %p187 = por %p185, %p186
    %p188 = scmp.ne.s32.totalorder %s177, %s180
    %p189 = scmp.eq.s32.totalorder %s17, 1
    %p190 = por %p188, %p189
    %p191 = scmp.ne.s32.totalorder %s180, %s181
    %p192 = scmp.eq.s32.totalorder %s17, 0
    %p193 = por %p191, %p192
    %p194 = scmp.ne.s32.totalorder %s180, %s181
    %p195 = scmp.eq.s32.totalorder %s18, 1
    %p196 = por %p194, %p195
    %p198 = scmp.ne.s32.totalorder %s181, %s197
    %p199 = scmp.eq.s32.totalorder %s18, 0
    %p200 = por %p198, %p199
    %p201 = scmp.le.s32.totalorder 1, %s12
    %p202 = scmp.lt.s32.totalorder %s12, 3
    %p203 = pnand %p201, %p202
    %p204 = pneg %p203
    // Predicated region
    $region9: #{spade_forward.4} parent=5 // pred_check
      _
    $region10: #{spade_forward.4} parent=5 // pred_check_branch
      %206 = sbr.rel (%p203) target = $region12
    $region11: #{spade_forward.4} parent=5 // pred_region
      %s207 = ssub.s32 %s12, 1
      // Predicated region
      $region13: #{spade_forward.4} parent=11 // pred_check
        %p208 = pneg %p71
      $region14: #{spade_forward.4} parent=11 // pred_check_branch
        %210 = sbr.rel (%p208) target = $region16
      $region15: #{spade_forward.4} parent=11 // pred_region
        _
      $region16: #{spade_forward.4} parent=11 // pred_fallthru
        _
      // Predicated region
      $region17: #{spade_forward.4} parent=11 // pred_check
        %p211 = pneg %p92
      $region18: #{spade_forward.4} parent=11 // pred_check_branch
        %213 = sbr.rel (%p211) target = $region20
      $region19: #{spade_forward.4} parent=11 // pred_region
        _
      $region20: #{spade_forward.4} parent=11 // pred_fallthru
        _
      // Predicated region
      $region21: #{spade_forward.4} parent=11 // pred_check
        %p214 = pneg %p113
      $region22: #{spade_forward.4} parent=11 // pred_check_branch
        %216 = sbr.rel (%p214) target = $region24
      $region23: #{spade_forward.4} parent=11 // pred_region
        _
      $region24: #{spade_forward.4} parent=11 // pred_fallthru
        _
      // Predicated region
      $region25: #{spade_forward.4} parent=11 // pred_check
        %p217 = pneg %p139
      $region26: #{spade_forward.4} parent=11 // pred_check_branch
        %219 = sbr.rel (%p217) target = $region28
      $region27: #{spade_forward.4} parent=11 // pred_region
        %p220 = scmp.lt.s32.totalorder %s22, 0
        %s221 = scalar_select %p220, %s22, 0
        %s222 = smul.addr %s221, 4
        %s223 = scalar_lea.vmem %s4, %s222
      $region28: #{spade_forward.4} parent=11 // pred_fallthru
        _
      // Predicated region
      $region29: #{spade_forward.4} parent=11 // pred_check
        %p224 = pneg %p165
      $region30: #{spade_forward.4} parent=11 // pred_check_branch
        %226 = sbr.rel (%p224) target = $region32
      $region31: #{spade_forward.4} parent=11 // pred_region
        %p227 = scmp.lt.s32.totalorder %s22, 0
        %s228 = scalar_select %p227, %s22, 0
        %s229 = scalar_lea.vmem %s5, %s228
      $region32: #{spade_forward.4} parent=11 // pred_fallthru
        _
    $region12: #{spade_forward.4} parent=5 // pred_fallthru
      _
    %p230 = scmp.lt.s32.totalorder %s12, 2
    // Predicated region
    $region33: #{spade_forward.4} parent=5 // pred_check
      %p231 = pneg %p230
    $region34: #{spade_forward.4} parent=5 // pred_check_branch
      %233 = sbr.rel (%p231) target = $region36
    $region35: #{spade_forward.4} parent=5 // pred_region
      // Predicated region
      $region37: #{spade_forward.4} parent=35 // pred_check
        %p234 = pneg %p44
      $region38: #{spade_forward.4} parent=35 // pred_check_branch
        %236 = sbr.rel (%p234) target = $region40
      $region39: #{spade_forward.4} parent=35 // pred_region
        %p237 = scmp.lt.s32.totalorder %s19, 1
        %s238 = scalar_select %p237, %s19, 1
        %s239 = smul.addr %s238, 57
        %s240 = smul.addr %s239, 4
        %s241 = scalar_lea.vmem %s0, %s240
      $region40: #{spade_forward.4} parent=35 // pred_fallthru
        _
    $region36: #{spade_forward.4} parent=5 // pred_fallthru
      _
    %p242 = scmp.le.s32.totalorder 1, %s12
    %p243 = scmp.lt.s32.totalorder %s12, 3
    %p244 = pnand %p242, %p243
    %p245 = pneg %p244
    // Predicated region
    $region41: #{spade_forward.4} parent=5 // pred_check
      _
    $region42: #{spade_forward.4} parent=5 // pred_check_branch
      %247 = sbr.rel (%p244) target = $region44
    $region43: #{spade_forward.4} parent=5 // pred_region
      %s248 = ssub.s32 %s12, 1
      %p249 = scmp.lt.s32.totalorder %s21, 1
      %s250 = scalar_select %p249, %s21, 1
      %s251 = smul.addr %s250, 57
      %s252 = smul.addr %s251, 4
      %s253 = scalar_lea.vmem %s0, %s252
      %p254 = pneg %p50
      %p255 = pneg %p47
      %p256 = pneg %p71
      %p257 = pneg %p68
      %p258 = pneg %p92
      %p259 = pneg %p89
      %p260 = pneg %p113
      %p261 = pneg %p110
      %p262 = scmp.lt.s32.totalorder %s22, 0
      %s263 = scalar_select %p262, %s22, 0
      %s264 = smul.addr %s263, 4
      %s265 = scalar_lea.vmem %s4, %s264
      %p266 = pneg %p139
      %p267 = pneg %p136
      %p268 = scmp.lt.s32.totalorder %s22, 0
      %s269 = scalar_select %p268, %s22, 0
      %s270 = scalar_lea.vmem %s5, %s269
      %p271 = pneg %p165
      %p272 = pneg %p162
      %p273 = pneg %p193
      %p274 = pneg %p190
      %p275 = scmp.lt.s32.totalorder %s21, 1
      %s276 = scalar_select %p275, %s21, 1
      %p277 = scmp.lt.s32.totalorder %s22, 0
      %s278 = scalar_select %p277, %s22, 0
      %s279 = smul.addr %s276, 48
      %s280 = sadd.s32 %s278, %s279
      %s281 = smul.addr %s280, 4
      %s282 = scalar_lea.vmem %s6, %s281
      %p283 = scmp.lt.s32.totalorder %s21, 1
      %s284 = scalar_select %p283, %s21, 1
      %s285 = smul.addr %s284, 57
      %s286 = smul.addr %s285, 4
      %s287 = scalar_lea.vmem %s0, %s286
      %p288 = scmp.lt.s32.totalorder %s22, 0
      %s289 = scalar_select %p288, %s22, 0
      %s290 = smul.addr %s289, 4
      %s291 = scalar_lea.vmem %s4, %s290
      %p292 = scmp.lt.s32.totalorder %s22, 0
      %s293 = scalar_select %p292, %s22, 0
      %s294 = scalar_lea.vmem %s5, %s293
      %p295 = scmp.lt.s32.totalorder %s21, 1
      %s296 = scalar_select %p295, %s21, 1
      %p297 = scmp.lt.s32.totalorder %s22, 0
      %s298 = scalar_select %p297, %s22, 0
      %s299 = smul.addr %s296, 48
      %s300 = sadd.s32 %s298, %s299
      %s301 = smul.addr %s300, 4
      %s302 = scalar_lea.vmem %s6, %s301
      %v304 = vld [vmem:[%s287] sm:$0xf]
      %v305 = vld [vmem:[%s287 + $0x4] sm:$0xf]
      %v306 = vld [vmem:[%s287 + $0x8] sm:$0xf]
      %v307 = vld [vmem:[%s287 + $0xc] sm:$0xf]
      %v308 = vld [vmem:[%s287 + $0x10] sm:$0xf]
      %v309 = vld [vmem:[%s287 + $0x14] sm:$0xf]
      %v310 = vld [vmem:[%s287 + $0x18] sm:$0xf]
      %v311 = vld [vmem:[%s287 + $0x1c] sm:$0xf]
      %v312 = vld [vmem:[%s287 + $0x20] sm:$0xf]
      %v313 = vld [vmem:[%s287 + $0x24] sm:$0xf]
      %v314 = vld [vmem:[%s287 + $0x28] sm:$0xf]
      %v315 = vld [vmem:[%s287 + $0x2c] sm:$0xf]
      %v316 = vld [vmem:[%s287 + $0x30] sm:$0xf]
      %v317 = vld [vmem:[%s287 + $0x34] sm:$0xf]
      %v318 = vld [vmem:[%s287 + $0x38] sm:$0xf]
      %v319 = vld [vmem:[%s287 + $0x3c] sm:$0xf]
      %v320 = vld [vmem:[%s287 + $0x40] sm:$0xf]
      %v321 = vld [vmem:[%s287 + $0x44] sm:$0xf]
      %v322 = vld [vmem:[%s287 + $0x48] sm:$0xf]
      %v323 = vld [vmem:[%s287 + $0x4c] sm:$0xf]
      %v324 = vld [vmem:[%s287 + $0x50] sm:$0xf]
      %v325 = vld [vmem:[%s287 + $0x54] sm:$0xf]
      %v326 = vld [vmem:[%s287 + $0x58] sm:$0xf]
      %v327 = vld [vmem:[%s287 + $0x5c] sm:$0xf]
      %v328 = vld [vmem:[%s287 + $0x60] sm:$0xf]
      %v329 = vld [vmem:[%s287 + $0x64] sm:$0xf]
      %v330 = vld [vmem:[%s287 + $0x68] sm:$0xf]
      %v331 = vld [vmem:[%s287 + $0x6c] sm:$0xf]
      %v332 = vld [vmem:[%s287 + $0x70] sm:$0xf]
      %v333 = vld [vmem:[%s287 + $0x74] sm:$0xf]
      %v334 = vld [vmem:[%s287 + $0x78] sm:$0xf]
      %v335 = vld [vmem:[%s287 + $0x7c] sm:$0xf]
      %v336 = vld [vmem:[%s287 + $0x80] sm:$0xf]
      %v337 = vld [vmem:[%s287 + $0x84] sm:$0xf]
      %v338 = vld [vmem:[%s287 + $0x88] sm:$0xf]
      %v339 = vld [vmem:[%s287 + $0x8c] sm:$0xf]
      %v340 = vld [vmem:[%s287 + $0x90] sm:$0xf]
      %v341 = vld [vmem:[%s287 + $0x94] sm:$0xf]
      %v342 = vld [vmem:[%s287 + $0x98] sm:$0xf]
      %v343 = vld [vmem:[%s287 + $0x9c] sm:$0xf]
      %v344 = vld [vmem:[%s287 + $0xa0] sm:$0xf]
      %v345 = vld [vmem:[%s287 + $0xa4] sm:$0xf]
      %v346 = vld [vmem:[%s287 + $0xa8] sm:$0xf]
      %v347 = vld [vmem:[%s287 + $0xac] sm:$0xf]
      %v348 = vld [vmem:[%s287 + $0xb0] sm:$0xf]
      %v349 = vld [vmem:[%s287 + $0xb4] sm:$0xf]
      %v350 = vld [vmem:[%s287 + $0xb8] sm:$0xf]
      %v351 = vld [vmem:[%s287 + $0xbc] sm:$0xf]
      %v352 = vld [vmem:[%s287 + $0xc0] sm:$0xf]
      %v353 = vld [vmem:[%s287 + $0xc4] sm:$0xf]
      %v354 = vld [vmem:[%s287 + $0xc8] sm:$0xf]
      %v355 = vld [vmem:[%s287 + $0xcc] sm:$0xf]
      %v356 = vld [vmem:[%s287 + $0xd0] sm:$0xf]
      %v357 = vld [vmem:[%s287 + $0xd4] sm:$0xf]
      %v358 = vld [vmem:[%s287 + $0xd8] sm:$0xf]
      %v359 = vld [vmem:[%s287 + $0xdc] sm:$0xf]
      %v360 = vld [vmem:[%s287 + $0xe0] sm:$0xf]
      %v361 = vld [vmem:[%s2] sm:$0xf]
      %v362 = vld [vmem:[%s2 + $0x4] sm:$0xf]
      %v363 = vld [vmem:[%s2 + $0x8] sm:$0xf]
      %v364 = vld [vmem:[%s2 + $0xc] sm:$0xf]
      %v365 = vld [vmem:[%s3] sm:$0x1]
      %v367 = vlaneseq
      %v368 = vshrl.u32 %v367, 7
      %v369 = vsub.s32 0, %v368
      %v370 = vrot.slane %v365, %v369
      %v429 = vunpack.c.l.b16 %v304
      %v430 = vunpack.c.l.b16 %v305
      %v431 = vunpack.c.l.b16 %v306
      %v432 = vunpack.c.l.b16 %v307
      %v433 = vunpack.c.l.b16 %v308
      %v434 = vunpack.c.l.b16 %v309
      %v435 = vunpack.c.l.b16 %v310
      %v436 = vunpack.c.l.b16 %v311
      %v437 = vunpack.c.l.b16 %v312
      %v438 = vunpack.c.l.b16 %v313
      %v439 = vunpack.c.l.b16 %v314
      %v440 = vunpack.c.l.b16 %v315
      %v441 = vunpack.c.l.b16 %v316
      %v442 = vunpack.c.l.b16 %v317
      %v443 = vunpack.c.l.b16 %v318
      %v444 = vunpack.c.l.b16 %v319
      %v445 = vunpack.c.l.b16 %v320
      %v446 = vunpack.c.l.b16 %v321
      %v447 = vunpack.c.l.b16 %v322
      %v448 = vunpack.c.l.b16 %v323
      %v449 = vunpack.c.l.b16 %v324
      %v450 = vunpack.c.l.b16 %v325
      %v451 = vunpack.c.l.b16 %v326
      %v452 = vunpack.c.l.b16 %v327
      %v453 = vunpack.c.l.b16 %v328
      %v454 = vunpack.c.l.b16 %v329
      %v455 = vunpack.c.l.b16 %v330
      %v456 = vunpack.c.l.b16 %v331
      %v457 = vunpack.c.l.b16 %v332
      %v458 = vunpack.c.l.b16 %v333
      %v459 = vunpack.c.l.b16 %v334
      %v460 = vunpack.c.l.b16 %v335
      %v461 = vunpack.c.l.b16 %v336
      %v462 = vunpack.c.l.b16 %v337
      %v463 = vunpack.c.l.b16 %v338
      %v464 = vunpack.c.l.b16 %v339
      %v465 = vunpack.c.l.b16 %v340
      %v466 = vunpack.c.l.b16 %v341
      %v467 = vunpack.c.l.b16 %v342
      %v468 = vunpack.c.l.b16 %v343
      %v469 = vunpack.c.l.b16 %v344
      %v470 = vunpack.c.l.b16 %v345
      %v471 = vunpack.c.l.b16 %v346
      %v472 = vunpack.c.l.b16 %v347
      %v473 = vunpack.c.l.b16 %v348
      %v474 = vunpack.c.l.b16 %v349
      %v475 = vunpack.c.l.b16 %v350
      %v476 = vunpack.c.l.b16 %v351
      %v477 = vunpack.c.l.b16 %v352
      %v478 = vunpack.c.l.b16 %v353
      %v479 = vunpack.c.l.b16 %v354
      %v480 = vunpack.c.l.b16 %v355
      %v481 = vunpack.c.l.b16 %v356
      %v482 = vunpack.c.l.b16 %v357
      %v483 = vunpack.c.l.b16 %v358
      %v484 = vunpack.c.l.b16 %v359
      %v485 = vunpack.c.l.b16 %v360
      %v486 = vpack.c.b16 %v430, %v429
      %v487 = vpack.c.b16 %v432, %v431
      %v488 = vpack.c.b16 %v434, %v433
      %v489 = vpack.c.b16 %v436, %v435
      %v490 = vpack.c.b16 %v438, %v437
      %v491 = vpack.c.b16 %v440, %v439
      %v492 = vpack.c.b16 %v442, %v441
      %v493 = vpack.c.b16 %v444, %v443
      %v494 = vpack.c.b16 %v446, %v445
      %v495 = vpack.c.b16 %v448, %v447
      %v496 = vpack.c.b16 %v450, %v449
      %v497 = vpack.c.b16 %v452, %v451
      %v498 = vpack.c.b16 %v454, %v453
      %v499 = vpack.c.b16 %v456, %v455
      %v500 = vpack.c.b16 %v458, %v457
      %v501 = vpack.c.b16 %v460, %v459
      %v502 = vpack.c.b16 %v462, %v461
      %v503 = vpack.c.b16 %v464, %v463
      %v504 = vpack.c.b16 %v466, %v465
      %v505 = vpack.c.b16 %v468, %v467
      %v506 = vpack.c.b16 %v470, %v469
      %v507 = vpack.c.b16 %v472, %v471
      %v508 = vpack.c.b16 %v474, %v473
      %v509 = vpack.c.b16 %v476, %v475
      %v510 = vpack.c.b16 %v478, %v477
      %v511 = vpack.c.b16 %v480, %v479
      %v512 = vpack.c.b16 %v482, %v481
      %v513 = vpack.c.b16 %v484, %v483
      %v514 = vpack.c.b16 %v485, %v485
      %v519 = vunpack.c.l.b16 %v361
      %v520 = vunpack.c.l.b16 %v362
      %v521 = vunpack.c.l.b16 %v363
      %v522 = vunpack.c.l.b16 %v364
      %v523 = vpack.c.b16 %v520, %v519
      %v524 = vpack.c.b16 %v522, %v521
      %vm527 = vcmask 261120
      %v529 = vsel %vm527, %v486, 0
      %v532 = vsel %vm527, %v487, 0
      %v535 = vsel %vm527, %v488, 0
      %v538 = vsel %vm527, %v489, 0
      %v541 = vsel %vm527, %v490, 0
      %v544 = vsel %vm527, %v491, 0
      %v547 = vsel %vm527, %v492, 0
      %v550 = vsel %vm527, %v493, 0
      %v553 = vsel %vm527, %v494, 0
      %v556 = vsel %vm527, %v495, 0
      %v559 = vsel %vm527, %v496, 0
      %v562 = vsel %vm527, %v497, 0
      %v565 = vsel %vm527, %v498, 0
      %v568 = vsel %vm527, %v499, 0
      %v571 = vsel %vm527, %v500, 0
      %v574 = vsel %vm527, %v501, 0
      %v577 = vsel %vm527, %v502, 0
      %v580 = vsel %vm527, %v503, 0
      %v583 = vsel %vm527, %v504, 0
      %v586 = vsel %vm527, %v505, 0
      %v589 = vsel %vm527, %v506, 0
      %v592 = vsel %vm527, %v507, 0
      %v595 = vsel %vm527, %v508, 0
      %v598 = vsel %vm527, %v509, 0
      %v601 = vsel %vm527, %v510, 0
      %v604 = vsel %vm527, %v511, 0
      %v607 = vsel %vm527, %v512, 0
      %v610 = vsel %vm527, %v513, 0
      %v613 = vsel %vm527, %v514, 0
      %615 = vmatprep.subr.bf16.mxu0 0
      %616 = vmatpush1.bf16.msra.mxu0 %v523
      %617 = vmatprep.subr.bf16.mxu0 0
      %618 = vmatpush1.bf16.msra.mxu0 %v524
      %619 = vmatprep.subr.bf16.mxu0 0
      %620 = vmatpush1.bf16.msra.mxu0 0
      %621 = vmatprep.subr.bf16.mxu0 0
      %622 = vmatpush1.bf16.msra.mxu0 0
      %623 = vmatprep.subr.bf16.mxu0 0
      %624 = vmatpush1.bf16.msra.mxu0 0
      %625 = vmatprep.subr.bf16.mxu0 0
      %626 = vmatpush1.bf16.msra.mxu0 0
      %627 = vmatprep.subr.bf16.mxu0 0
      %628 = vmatpush1.bf16.msra.mxu0 0
      %629 = vmatprep.subr.bf16.mxu0 0
      %630 = vmatpush1.bf16.msra.mxu0 0
      %631 = vmatprep.subr.bf16.mxu0 0
      %632 = vmatpush1.bf16.msra.mxu0 0
      %633 = vmatprep.subr.bf16.mxu0 0
      %634 = vmatpush1.bf16.msra.mxu0 0
      %635 = vmatprep.subr.bf16.mxu0 0
      %636 = vmatpush1.bf16.msra.mxu0 0
      %637 = vmatprep.subr.bf16.mxu0 0
      %638 = vmatpush1.bf16.msra.mxu0 0
      %639 = vmatprep.subr.bf16.mxu0 0
      %640 = vmatpush1.bf16.msra.mxu0 0
      %641 = vmatprep.subr.bf16.mxu0 0
      %642 = vmatpush1.bf16.msra.mxu0 0
      %643 = vmatprep.subr.bf16.mxu0 0
      %644 = vmatpush1.bf16.msra.mxu0 0
      %645 = vmatprep.subr.bf16.mxu0 0
      %646 = vmatpush1.bf16.msra.mxu0 0
      %647 = vmatprep.mubr.bf16.mxu0 0
      %648 = vmatmul.mubr.bf16.gmra.mrb[0].mxu0 %v529
      %v649 = vpop.f32.mrb[0].mxu0
      %v650 = vadd.f32 %v370, %v649
      %v651 = vpop.f32.mrb[0].mxu0
      %v652 = vpop.f32.mrb[0].mxu0
      %v653 = vadd.f32 %v370, %v652
      %v654 = vpop.f32.mrb[0].mxu0
      %655 = vmatprep.mubr.bf16.mxu0 0
      %656 = vmatmul.mubr.bf16.gmra.mrb[0].mxu0 %v532
      %v657 = vpop.f32.mrb[0].mxu0
      %v658 = vadd.f32 %v370, %v657
      %v659 = vpop.f32.mrb[0].mxu0
      %v660 = vpop.f32.mrb[0].mxu0
      %v661 = vadd.f32 %v370, %v660
      %v662 = vpop.f32.mrb[0].mxu0
      %663 = vmatprep.mubr.bf16.mxu0 0
      %664 = vmatmul.mubr.bf16.gmra.mrb[0].mxu0 %v535
      %v665 = vpop.f32.mrb[0].mxu0
      %v666 = vadd.f32 %v370, %v665
      %v667 = vpop.f32.mrb[0].mxu0
      %v668 = vpop.f32.mrb[0].mxu0
      %v669 = vadd.f32 %v370, %v668
      %v670 = vpop.f32.mrb[0].mxu0
      %671 = vmatprep.mubr.bf16.mxu0 0
      %672 = vmatmul.mubr.bf16.gmra.mrb[0].mxu0 %v538
      %v673 = vpop.f32.mrb[0].mxu0
      %v674 = vadd.f32 %v370, %v673
      %v675 = vpop.f32.mrb[0].mxu0
      %v676 = vpop.f32.mrb[0].mxu0
      %v677 = vadd.f32 %v370, %v676
      %v678 = vpop.f32.mrb[0].mxu0
      %679 = vmatprep.mubr.bf16.mxu0 0
      %680 = vmatmul.mubr.bf16.gmra.mrb[0].mxu0 %v541
      %v681 = vpop.f32.mrb[0].mxu0
      %v682 = vadd.f32 %v370, %v681
      %v683 = vpop.f32.mrb[0].mxu0
      %v684 = vpop.f32.mrb[0].mxu0
      %v685 = vadd.f32 %v370, %v684
      %v686 = vpop.f32.mrb[0].mxu0
      %687 = vmatprep.mubr.bf16.mxu0 0
      %688 = vmatmul.mubr.bf16.gmra.mrb[0].mxu0 %v544
      %v689 = vpop.f32.mrb[0].mxu0
      %v690 = vadd.f32 %v370, %v689
      %v691 = vpop.f32.mrb[0].mxu0
      %v692 = vpop.f32.mrb[0].mxu0
      %v693 = vadd.f32 %v370, %v692
      %v694 = vpop.f32.mrb[0].mxu0
      %695 = vmatprep.mubr.bf16.mxu0 0
      %696 = vmatmul.mubr.bf16.gmra.mrb[0].mxu0 %v547
      %v697 = vpop.f32.mrb[0].mxu0
      %v698 = vadd.f32 %v370, %v697
      %v699 = vpop.f32.mrb[0].mxu0
      %v700 = vpop.f32.mrb[0].mxu0
      %v701 = vadd.f32 %v370, %v700
      %v702 = vpop.f32.mrb[0].mxu0
      %703 = vmatprep.mubr.bf16.mxu0 0
      %704 = vmatmul.mubr.bf16.gmra.mrb[0].mxu0 %v550
      %v705 = vpop.f32.mrb[0].mxu0
      %v706 = vadd.f32 %v370, %v705
      %v707 = vpop.f32.mrb[0].mxu0
      %v708 = vpop.f32.mrb[0].mxu0
      %v709 = vadd.f32 %v370, %v708
      %v710 = vpop.f32.mrb[0].mxu0
      %711 = vmatprep.mubr.bf16.mxu0 0
      %712 = vmatmul.mubr.bf16.gmra.mrb[0].mxu0 %v553
      %v713 = vpop.f32.mrb[0].mxu0
      %v714 = vadd.f32 %v370, %v713
      %v715 = vpop.f32.mrb[0].mxu0
      %v716 = vpop.f32.mrb[0].mxu0
      %v717 = vadd.f32 %v370, %v716
      %v718 = vpop.f32.mrb[0].mxu0
      %719 = vmatprep.mubr.bf16.mxu0 0
      %720 = vmatmul.mubr.bf16.gmra.mrb[0].mxu0 %v556
      %v721 = vpop.f32.mrb[0].mxu0
      %v722 = vadd.f32 %v370, %v721
      %v723 = vpop.f32.mrb[0].mxu0
      %v724 = vpop.f32.mrb[0].mxu0
      %v725 = vadd.f32 %v370, %v724
      %v726 = vpop.f32.mrb[0].mxu0
      %727 = vmatprep.mubr.bf16.mxu0 0
      %728 = vmatmul.mubr.bf16.gmra.mrb[0].mxu0 %v559
      %v729 = vpop.f32.mrb[0].mxu0
      %v730 = vadd.f32 %v370, %v729
      %v731 = vpop.f32.mrb[0].mxu0
      %v732 = vpop.f32.mrb[0].mxu0
      %v733 = vadd.f32 %v370, %v732
      %v734 = vpop.f32.mrb[0].mxu0
      %735 = vmatprep.mubr.bf16.mxu0 0
      %736 = vmatmul.mubr.bf16.gmra.mrb[0].mxu0 %v562
      %v737 = vpop.f32.mrb[0].mxu0
      %v738 = vadd.f32 %v370, %v737
      %v739 = vpop.f32.mrb[0].mxu0
      %v740 = vpop.f32.mrb[0].mxu0
      %v741 = vadd.f32 %v370, %v740
      %v742 = vpop.f32.mrb[0].mxu0
      %743 = vmatprep.mubr.bf16.mxu0 0
      %744 = vmatmul.mubr.bf16.gmra.mrb[0].mxu0 %v565
      %v745 = vpop.f32.mrb[0].mxu0
      %v746 = vadd.f32 %v370, %v745
      %v747 = vpop.f32.mrb[0].mxu0
      %v748 = vpop.f32.mrb[0].mxu0
      %v749 = vadd.f32 %v370, %v748
      %v750 = vpop.f32.mrb[0].mxu0
      %751 = vmatprep.mubr.bf16.mxu0 0
      %752 = vmatmul.mubr.bf16.gmra.mrb[0].mxu0 %v568
      %v753 = vpop.f32.mrb[0].mxu0
      %v754 = vadd.f32 %v370, %v753
      %v755 = vpop.f32.mrb[0].mxu0
      %v756 = vpop.f32.mrb[0].mxu0
      %v757 = vadd.f32 %v370, %v756
      %v758 = vpop.f32.mrb[0].mxu0
      %759 = vmatprep.mubr.bf16.mxu0 0
      %760 = vmatmul.mubr.bf16.gmra.mrb[0].mxu0 %v571
      %v761 = vpop.f32.mrb[0].mxu0
      %v762 = vadd.f32 %v370, %v761
      %v763 = vpop.f32.mrb[0].mxu0
      %v764 = vpop.f32.mrb[0].mxu0
      %v765 = vadd.f32 %v370, %v764
      %v766 = vpop.f32.mrb[0].mxu0
      %767 = vmatprep.mubr.bf16.mxu0 0
      %768 = vmatmul.mubr.bf16.gmra.mrb[0].mxu0 %v574
      %v769 = vpop.f32.mrb[0].mxu0
      %v770 = vadd.f32 %v370, %v769
      %v771 = vpop.f32.mrb[0].mxu0
      %v772 = vpop.f32.mrb[0].mxu0
      %v773 = vadd.f32 %v370, %v772
      %v774 = vpop.f32.mrb[0].mxu0
      %775 = vmatprep.mubr.bf16.mxu0 0
      %776 = vmatmul.mubr.bf16.gmra.mrb[0].mxu0 %v577
      %v777 = vpop.f32.mrb[0].mxu0
      %v778 = vadd.f32 %v370, %v777
      %v779 = vpop.f32.mrb[0].mxu0
      %v780 = vpop.f32.mrb[0].mxu0
      %v781 = vadd.f32 %v370, %v780
      %v782 = vpop.f32.mrb[0].mxu0
      %783 = vmatprep.mubr.bf16.mxu0 0
      %784 = vmatmul.mubr.bf16.gmra.mrb[0].mxu0 %v580
      %v785 = vpop.f32.mrb[0].mxu0
      %v786 = vadd.f32 %v370, %v785
      %v787 = vpop.f32.mrb[0].mxu0
      %v788 = vpop.f32.mrb[0].mxu0
      %v789 = vadd.f32 %v370, %v788
      %v790 = vpop.f32.mrb[0].mxu0
      %791 = vmatprep.mubr.bf16.mxu0 0
      %792 = vmatmul.mubr.bf16.gmra.mrb[0].mxu0 %v583
      %v793 = vpop.f32.mrb[0].mxu0
      %v794 = vadd.f32 %v370, %v793
      %v795 = vpop.f32.mrb[0].mxu0
      %v796 = vpop.f32.mrb[0].mxu0
      %v797 = vadd.f32 %v370, %v796
      %v798 = vpop.f32.mrb[0].mxu0
      %799 = vmatprep.mubr.bf16.mxu0 0
      %800 = vmatmul.mubr.bf16.gmra.mrb[0].mxu0 %v586
      %v801 = vpop.f32.mrb[0].mxu0
      %v802 = vadd.f32 %v370, %v801
      %v803 = vpop.f32.mrb[0].mxu0
      %v804 = vpop.f32.mrb[0].mxu0
      %v805 = vadd.f32 %v370, %v804
      %v806 = vpop.f32.mrb[0].mxu0
      %807 = vmatprep.mubr.bf16.mxu0 0
      %808 = vmatmul.mubr.bf16.gmra.mrb[0].mxu0 %v589
      %v809 = vpop.f32.mrb[0].mxu0
      %v810 = vadd.f32 %v370, %v809
      %v811 = vpop.f32.mrb[0].mxu0
      %v812 = vpop.f32.mrb[0].mxu0
      %v813 = vadd.f32 %v370, %v812
      %v814 = vpop.f32.mrb[0].mxu0
      %815 = vmatprep.mubr.bf16.mxu0 0
      %816 = vmatmul.mubr.bf16.gmra.mrb[0].mxu0 %v592
      %v817 = vpop.f32.mrb[0].mxu0
      %v818 = vadd.f32 %v370, %v817
      %v819 = vpop.f32.mrb[0].mxu0
      %v820 = vpop.f32.mrb[0].mxu0
      %v821 = vadd.f32 %v370, %v820
      %v822 = vpop.f32.mrb[0].mxu0
      %823 = vmatprep.mubr.bf16.mxu0 0
      %824 = vmatmul.mubr.bf16.gmra.mrb[0].mxu0 %v595
      %v825 = vpop.f32.mrb[0].mxu0
      %v826 = vadd.f32 %v370, %v825
      %v827 = vpop.f32.mrb[0].mxu0
      %v828 = vpop.f32.mrb[0].mxu0
      %v829 = vadd.f32 %v370, %v828
      %v830 = vpop.f32.mrb[0].mxu0
      %831 = vmatprep.mubr.bf16.mxu0 0
      %832 = vmatmul.mubr.bf16.gmra.mrb[0].mxu0 %v598
      %v833 = vpop.f32.mrb[0].mxu0
      %v834 = vadd.f32 %v370, %v833
      %v835 = vpop.f32.mrb[0].mxu0
      %v836 = vpop.f32.mrb[0].mxu0
      %v837 = vadd.f32 %v370, %v836
      %v838 = vpop.f32.mrb[0].mxu0
      %839 = vmatprep.mubr.bf16.mxu0 0
      %840 = vmatmul.mubr.bf16.gmra.mrb[0].mxu0 %v601
      %v841 = vpop.f32.mrb[0].mxu0
      %v842 = vadd.f32 %v370, %v841
      %v843 = vpop.f32.mrb[0].mxu0
      %v844 = vpop.f32.mrb[0].mxu0
      %v845 = vadd.f32 %v370, %v844
      %v846 = vpop.f32.mrb[0].mxu0
      %847 = vmatprep.mubr.bf16.mxu0 0
      %848 = vmatmul.mubr.bf16.gmra.mrb[0].mxu0 %v604
      %v849 = vpop.f32.mrb[0].mxu0
      %v850 = vadd.f32 %v370, %v849
      %v851 = vpop.f32.mrb[0].mxu0
      %v852 = vpop.f32.mrb[0].mxu0
      %v853 = vadd.f32 %v370, %v852
      %v854 = vpop.f32.mrb[0].mxu0
      %855 = vmatprep.mubr.bf16.mxu0 0
      %856 = vmatmul.mubr.bf16.gmra.mrb[0].mxu0 %v607
      %v857 = vpop.f32.mrb[0].mxu0
      %v858 = vadd.f32 %v370, %v857
      %v859 = vpop.f32.mrb[0].mxu0
      %v860 = vpop.f32.mrb[0].mxu0
      %v861 = vadd.f32 %v370, %v860
      %v862 = vpop.f32.mrb[0].mxu0
      %863 = vmatprep.mubr.bf16.mxu0 0
      %864 = vmatmul.mubr.bf16.gmra.mrb[0].mxu0 %v610
      %v865 = vpop.f32.mrb[0].mxu0
      %v866 = vadd.f32 %v370, %v865
      %v867 = vpop.f32.mrb[0].mxu0
      %v868 = vpop.f32.mrb[0].mxu0
      %v869 = vadd.f32 %v370, %v868
      %v870 = vpop.f32.mrb[0].mxu0
      %871 = vmatprep.mubr.bf16.mxu0 0
      %872 = vmatmul.mubr.bf16.gmra.mrb[0].mxu0 %v613
      %v873 = vpop.f32.mrb[0].mxu0
      %v874 = vpop.f32.mrb[0].mxu0
      %v875 = vpop.f32.mrb[0].mxu0
      %v876 = vpop.f32.mrb[0].mxu0
      %877 = vdwg.mxu0
      %v878 = vmax.f32 %v650, 0.0
      %v879 = vmax.f32 %v653, 0.0
      %v880 = vmax.f32 %v658, 0.0
      %v881 = vmax.f32 %v661, 0.0
      %v882 = vmax.f32 %v666, 0.0
      %v883 = vmax.f32 %v669, 0.0
      %v884 = vmax.f32 %v674, 0.0
      %v885 = vmax.f32 %v677, 0.0
      %v886 = vmax.f32 %v682, 0.0
      %v887 = vmax.f32 %v685, 0.0
      %v888 = vmax.f32 %v690, 0.0
      %v889 = vmax.f32 %v693, 0.0
      %v890 = vmax.f32 %v698, 0.0
      %v891 = vmax.f32 %v701, 0.0
      %v892 = vmax.f32 %v706, 0.0
      %v893 = vmax.f32 %v709, 0.0
      %v894 = vmax.f32 %v714, 0.0
      %v895 = vmax.f32 %v717, 0.0
      %v896 = vmax.f32 %v722, 0.0
      %v897 = vmax.f32 %v725, 0.0
      %v898 = vmax.f32 %v730, 0.0
      %v899 = vmax.f32 %v733, 0.0
      %v900 = vmax.f32 %v738, 0.0
      %v901 = vmax.f32 %v741, 0.0
      %v902 = vmax.f32 %v746, 0.0
      %v903 = vmax.f32 %v749, 0.0
      %v904 = vmax.f32 %v754, 0.0
      %v905 = vmax.f32 %v757, 0.0
      %v906 = vmax.f32 %v762, 0.0
      %v907 = vmax.f32 %v765, 0.0
      %v908 = vmax.f32 %v770, 0.0
      %v909 = vmax.f32 %v773, 0.0
      %v910 = vmax.f32 %v778, 0.0
      %v911 = vmax.f32 %v781, 0.0
      %v912 = vmax.f32 %v786, 0.0
      %v913 = vmax.f32 %v789, 0.0
      %v914 = vmax.f32 %v794, 0.0
      %v915 = vmax.f32 %v797, 0.0
      %v916 = vmax.f32 %v802, 0.0
      %v917 = vmax.f32 %v805, 0.0
      %v918 = vmax.f32 %v810, 0.0
      %v919 = vmax.f32 %v813, 0.0
      %v920 = vmax.f32 %v818, 0.0
      %v921 = vmax.f32 %v821, 0.0
      %v922 = vmax.f32 %v826, 0.0
      %v923 = vmax.f32 %v829, 0.0
      %v924 = vmax.f32 %v834, 0.0
      %v925 = vmax.f32 %v837, 0.0
      %v926 = vmax.f32 %v842, 0.0
      %v927 = vmax.f32 %v845, 0.0
      %v928 = vmax.f32 %v850, 0.0
      %v929 = vmax.f32 %v853, 0.0
      %v930 = vmax.f32 %v858, 0.0
      %v931 = vmax.f32 %v861, 0.0
      %v932 = vmax.f32 %v866, 0.0
      %v933 = vmax.f32 %v869, 0.0
      %v934 = vld [vmem:[%s1] sm:$0xff]
      %v935 = vld [vmem:[%s1 + $0x8] sm:$0xff]
      %v936 = vld [vmem:[%s1 + $0x10] sm:$0xff]
      %v937 = vld [vmem:[%s1 + $0x18] sm:$0xff]
      %v938 = vld [vmem:[%s1 + $0x20] sm:$0xff]
      %v939 = vld [vmem:[%s1 + $0x28] sm:$0xff]
      %v940 = vld [vmem:[%s1 + $0x30] sm:$0xff]
      %v941 = vld [vmem:[%s1 + $0x38] sm:$0xff]
      %v942 = vld [vmem:[%s1 + $0x40] sm:$0xff]
      %v943 = vld [vmem:[%s1 + $0x48] sm:$0xff]
      %v944 = vld [vmem:[%s1 + $0x50] sm:$0xff]
      %v945 = vld [vmem:[%s1 + $0x58] sm:$0xff]
      %v946 = vld [vmem:[%s1 + $0x60] sm:$0xff]
      %v947 = vld [vmem:[%s1 + $0x68] sm:$0xff]
      %v948 = vld [vmem:[%s1 + $0x70] sm:$0xff]
      %v949 = vld [vmem:[%s1 + $0x78] sm:$0xff]
      %v950 = vld [vmem:[%s1 + $0x80] sm:$0xff]
      %v951 = vld [vmem:[%s1 + $0x88] sm:$0xff]
      %v952 = vld [vmem:[%s1 + $0x90] sm:$0xff]
      %v953 = vld [vmem:[%s1 + $0x98] sm:$0xff]
      %v954 = vld [vmem:[%s1 + $0xa0] sm:$0xff]
      %v955 = vld [vmem:[%s1 + $0xa8] sm:$0xff]
      %v956 = vld [vmem:[%s1 + $0xb0] sm:$0xff]
      %v957 = vld [vmem:[%s1 + $0xb8] sm:$0xff]
      %v958 = vld [vmem:[%s1 + $0xc0] sm:$0xff]
      %v959 = vld [vmem:[%s1 + $0xc8] sm:$0xff]
      %v960 = vld [vmem:[%s1 + $0xd0] sm:$0xff]
      %v961 = vld [vmem:[%s1 + $0xd8] sm:$0xff]
      %v962 = vld [vmem:[%s1 + $0xe0] sm:$0xff]
      %v963 = vld [vmem:[%s1 + $0xe8] sm:$0xff]
      %v964 = vld [vmem:[%s1 + $0xf0] sm:$0xff]
      %v965 = vld [vmem:[%s1 + $0xf8] sm:$0xff]
      %v966 = vld [vmem:[%s1 + $0x100] sm:$0xff]
      %v967 = vld [vmem:[%s1 + $0x108] sm:$0xff]
      %v968 = vld [vmem:[%s1 + $0x110] sm:$0xff]
      %v969 = vld [vmem:[%s1 + $0x118] sm:$0xff]
      %v970 = vld [vmem:[%s1 + $0x120] sm:$0xff]
      %v971 = vld [vmem:[%s1 + $0x128] sm:$0xff]
      %v972 = vld [vmem:[%s1 + $0x130] sm:$0xff]
      %v973 = vld [vmem:[%s1 + $0x138] sm:$0xff]
      %v974 = vld [vmem:[%s1 + $0x140] sm:$0xff]
      %v975 = vld [vmem:[%s1 + $0x148] sm:$0xff]
      %v976 = vld [vmem:[%s1 + $0x150] sm:$0xff]
      %v977 = vld [vmem:[%s1 + $0x158] sm:$0xff]
      %v978 = vld [vmem:[%s1 + $0x160] sm:$0xff]
      %v979 = vld [vmem:[%s1 + $0x168] sm:$0xff]
      %v980 = vld [vmem:[%s1 + $0x170] sm:$0xff]
      %v981 = vld [vmem:[%s1 + $0x178] sm:$0xff]
      %v982 = vld [vmem:[%s1 + $0x180] sm:$0xff]
      %v983 = vld [vmem:[%s1 + $0x188] sm:$0xff]
      %v984 = vld [vmem:[%s1 + $0x190] sm:$0xff]
      %v985 = vld [vmem:[%s1 + $0x198] sm:$0xff]
      %v986 = vld [vmem:[%s1 + $0x1a0] sm:$0xff]
      %v987 = vld [vmem:[%s1 + $0x1a8] sm:$0xff]
      %v988 = vld [vmem:[%s1 + $0x1b0] sm:$0xff]
      %v989 = vld [vmem:[%s1 + $0x1b8] sm:$0xff]
      %991 = vset.pattern.permute.xlu0 0
      %992 = vperm.xlu0 %991, %v934
      %v993 = vpop.permute.xlu0 %992
      %996 = vset.pattern.permute.xlu0 0
      %997 = vperm.xlu0 %996, %v935
      %v998 = vpop.permute.xlu0 %997
      %1001 = vset.pattern.permute.xlu0 0
      %1002 = vperm.xlu0 %1001, %v936
      %v1003 = vpop.permute.xlu0 %1002
      %1006 = vset.pattern.permute.xlu0 0
      %1007 = vperm.xlu0 %1006, %v937
      %v1008 = vpop.permute.xlu0 %1007
      %1011 = vset.pattern.permute.xlu0 0
      %1012 = vperm.xlu0 %1011, %v938
      %v1013 = vpop.permute.xlu0 %1012
      %1016 = vset.pattern.permute.xlu0 0
      %1017 = vperm.xlu0 %1016, %v939
      %v1018 = vpop.permute.xlu0 %1017
      %1021 = vset.pattern.permute.xlu0 0
      %1022 = vperm.xlu0 %1021, %v940
      %v1023 = vpop.permute.xlu0 %1022
      %1026 = vset.pattern.permute.xlu0 0
      %1027 = vperm.xlu0 %1026, %v941
      %v1028 = vpop.permute.xlu0 %1027
      %1031 = vset.pattern.permute.xlu0 0
      %1032 = vperm.xlu0 %1031, %v942
      %v1033 = vpop.permute.xlu0 %1032
      %1036 = vset.pattern.permute.xlu0 0
      %1037 = vperm.xlu0 %1036, %v943
      %v1038 = vpop.permute.xlu0 %1037
      %1041 = vset.pattern.permute.xlu0 0
      %1042 = vperm.xlu0 %1041, %v944
      %v1043 = vpop.permute.xlu0 %1042
      %1046 = vset.pattern.permute.xlu0 0
      %1047 = vperm.xlu0 %1046, %v945
      %v1048 = vpop.permute.xlu0 %1047
      %1051 = vset.pattern.permute.xlu0 0
      %1052 = vperm.xlu0 %1051, %v946
      %v1053 = vpop.permute.xlu0 %1052
      %1056 = vset.pattern.permute.xlu0 0
      %1057 = vperm.xlu0 %1056, %v947
      %v1058 = vpop.permute.xlu0 %1057
      %1061 = vset.pattern.permute.xlu0 0
      %1062 = vperm.xlu0 %1061, %v948
      %v1063 = vpop.permute.xlu0 %1062
      %1066 = vset.pattern.permute.xlu0 0
      %1067 = vperm.xlu0 %1066, %v949
      %v1068 = vpop.permute.xlu0 %1067
      %1071 = vset.pattern.permute.xlu0 0
      %1072 = vperm.xlu0 %1071, %v950
      %v1073 = vpop.permute.xlu0 %1072
      %1076 = vset.pattern.permute.xlu0 0
      %1077 = vperm.xlu0 %1076, %v951
      %v1078 = vpop.permute.xlu0 %1077
      %1081 = vset.pattern.permute.xlu0 0
      %1082 = vperm.xlu0 %1081, %v952
      %v1083 = vpop.permute.xlu0 %1082
      %1086 = vset.pattern.permute.xlu0 0
      %1087 = vperm.xlu0 %1086, %v953
      %v1088 = vpop.permute.xlu0 %1087
      %1091 = vset.pattern.permute.xlu0 0
      %1092 = vperm.xlu0 %1091, %v954
      %v1093 = vpop.permute.xlu0 %1092
      %1096 = vset.pattern.permute.xlu0 0
      %1097 = vperm.xlu0 %1096, %v955
      %v1098 = vpop.permute.xlu0 %1097
      %1101 = vset.pattern.permute.xlu0 0
      %1102 = vperm.xlu0 %1101, %v956
      %v1103 = vpop.permute.xlu0 %1102
      %1106 = vset.pattern.permute.xlu0 0
      %1107 = vperm.xlu0 %1106, %v957
      %v1108 = vpop.permute.xlu0 %1107
      %1111 = vset.pattern.permute.xlu0 0
      %1112 = vperm.xlu0 %1111, %v958
      %v1113 = vpop.permute.xlu0 %1112
      %1116 = vset.pattern.permute.xlu0 0
      %1117 = vperm.xlu0 %1116, %v959
      %v1118 = vpop.permute.xlu0 %1117
      %1121 = vset.pattern.permute.xlu0 0
      %1122 = vperm.xlu0 %1121, %v960
      %v1123 = vpop.permute.xlu0 %1122
      %1126 = vset.pattern.permute.xlu0 0
      %1127 = vperm.xlu0 %1126, %v961
      %v1128 = vpop.permute.xlu0 %1127
      %1131 = vset.pattern.permute.xlu0 0
      %1132 = vperm.xlu0 %1131, %v962
      %v1133 = vpop.permute.xlu0 %1132
      %1136 = vset.pattern.permute.xlu0 0
      %1137 = vperm.xlu0 %1136, %v963
      %v1138 = vpop.permute.xlu0 %1137
      %1141 = vset.pattern.permute.xlu0 0
      %1142 = vperm.xlu0 %1141, %v964
      %v1143 = vpop.permute.xlu0 %1142
      %1146 = vset.pattern.permute.xlu0 0
      %1147 = vperm.xlu0 %1146, %v965
      %v1148 = vpop.permute.xlu0 %1147
      %1151 = vset.pattern.permute.xlu0 0
      %1152 = vperm.xlu0 %1151, %v966
      %v1153 = vpop.permute.xlu0 %1152
      %1156 = vset.pattern.permute.xlu0 0
      %1157 = vperm.xlu0 %1156, %v967
      %v1158 = vpop.permute.xlu0 %1157
      %1161 = vset.pattern.permute.xlu0 0
      %1162 = vperm.xlu0 %1161, %v968
      %v1163 = vpop.permute.xlu0 %1162
      %1166 = vset.pattern.permute.xlu0 0
      %1167 = vperm.xlu0 %1166, %v969
      %v1168 = vpop.permute.xlu0 %1167
      %1171 = vset.pattern.permute.xlu0 0
      %1172 = vperm.xlu0 %1171, %v970
      %v1173 = vpop.permute.xlu0 %1172
      %1176 = vset.pattern.permute.xlu0 0
      %1177 = vperm.xlu0 %1176, %v971
      %v1178 = vpop.permute.xlu0 %1177
      %1181 = vset.pattern.permute.xlu0 0
      %1182 = vperm.xlu0 %1181, %v972
      %v1183 = vpop.permute.xlu0 %1182
      %1186 = vset.pattern.permute.xlu0 0
      %1187 = vperm.xlu0 %1186, %v973
      %v1188 = vpop.permute.xlu0 %1187
      %1191 = vset.pattern.permute.xlu0 0
      %1192 = vperm.xlu0 %1191, %v974
      %v1193 = vpop.permute.xlu0 %1192
      %1196 = vset.pattern.permute.xlu0 0
      %1197 = vperm.xlu0 %1196, %v975
      %v1198 = vpop.permute.xlu0 %1197
      %1201 = vset.pattern.permute.xlu0 0
      %1202 = vperm.xlu0 %1201, %v976
      %v1203 = vpop.permute.xlu0 %1202
      %1206 = vset.pattern.permute.xlu0 0
      %1207 = vperm.xlu0 %1206, %v977
      %v1208 = vpop.permute.xlu0 %1207
      %1211 = vset.pattern.permute.xlu0 0
      %1212 = vperm.xlu0 %1211, %v978
      %v1213 = vpop.permute.xlu0 %1212
      %1216 = vset.pattern.permute.xlu0 0
      %1217 = vperm.xlu0 %1216, %v979
      %v1218 = vpop.permute.xlu0 %1217
      %1221 = vset.pattern.permute.xlu0 0
      %1222 = vperm.xlu0 %1221, %v980
      %v1223 = vpop.permute.xlu0 %1222
      %1226 = vset.pattern.permute.xlu0 0
      %1227 = vperm.xlu0 %1226, %v981
      %v1228 = vpop.permute.xlu0 %1227
      %1231 = vset.pattern.permute.xlu0 0
      %1232 = vperm.xlu0 %1231, %v982
      %v1233 = vpop.permute.xlu0 %1232
      %1236 = vset.pattern.permute.xlu0 0
      %1237 = vperm.xlu0 %1236, %v983
      %v1238 = vpop.permute.xlu0 %1237
      %1241 = vset.pattern.permute.xlu0 0
      %1242 = vperm.xlu0 %1241, %v984
      %v1243 = vpop.permute.xlu0 %1242
      %1246 = vset.pattern.permute.xlu0 0
      %1247 = vperm.xlu0 %1246, %v985
      %v1248 = vpop.permute.xlu0 %1247
      %1251 = vset.pattern.permute.xlu0 0
      %1252 = vperm.xlu0 %1251, %v986
      %v1253 = vpop.permute.xlu0 %1252
      %1256 = vset.pattern.permute.xlu0 0
      %1257 = vperm.xlu0 %1256, %v987
      %v1258 = vpop.permute.xlu0 %1257
      %1261 = vset.pattern.permute.xlu0 0
      %1262 = vperm.xlu0 %1261, %v988
      %v1263 = vpop.permute.xlu0 %1262
      %1266 = vset.pattern.permute.xlu0 0
      %1267 = vperm.xlu0 %1266, %v989
      %v1268 = vpop.permute.xlu0 %1267
      %v1270 = vmul.f32 %v878, %v993
      %v1271 = vmul.f32 %v879, %v998
      %v1272 = vmul.f32 %v880, %v1003
      %v1273 = vmul.f32 %v881, %v1008
      %v1274 = vmul.f32 %v882, %v1013
      %v1275 = vmul.f32 %v883, %v1018
      %v1276 = vmul.f32 %v884, %v1023
      %v1277 = vmul.f32 %v885, %v1028
      %v1278 = vmul.f32 %v886, %v1033
      %v1279 = vmul.f32 %v887, %v1038
      %v1280 = vmul.f32 %v888, %v1043
      %v1281 = vmul.f32 %v889, %v1048
      %v1282 = vmul.f32 %v890, %v1053
      %v1283 = vmul.f32 %v891, %v1058
      %v1284 = vmul.f32 %v892, %v1063
      %v1285 = vmul.f32 %v893, %v1068
      %v1286 = vmul.f32 %v894, %v1073
      %v1287 = vmul.f32 %v895, %v1078
      %v1288 = vmul.f32 %v896, %v1083
      %v1289 = vmul.f32 %v897, %v1088
      %v1290 = vmul.f32 %v898, %v1093
      %v1291 = vmul.f32 %v899, %v1098
      %v1292 = vmul.f32 %v900, %v1103
      %v1293 = vmul.f32 %v901, %v1108
      %v1294 = vmul.f32 %v902, %v1113
      %v1295 = vmul.f32 %v903, %v1118
      %v1296 = vmul.f32 %v904, %v1123
      %v1297 = vmul.f32 %v905, %v1128
      %v1298 = vmul.f32 %v906, %v1133
      %v1299 = vmul.f32 %v907, %v1138
      %v1300 = vmul.f32 %v908, %v1143
      %v1301 = vmul.f32 %v909, %v1148
      %v1302 = vmul.f32 %v910, %v1153
      %v1303 = vmul.f32 %v911, %v1158
      %v1304 = vmul.f32 %v912, %v1163
      %v1305 = vmul.f32 %v913, %v1168
      %v1306 = vmul.f32 %v914, %v1173
      %v1307 = vmul.f32 %v915, %v1178
      %v1308 = vmul.f32 %v916, %v1183
      %v1309 = vmul.f32 %v917, %v1188
      %v1310 = vmul.f32 %v918, %v1193
      %v1311 = vmul.f32 %v919, %v1198
      %v1312 = vmul.f32 %v920, %v1203
      %v1313 = vmul.f32 %v921, %v1208
      %v1314 = vmul.f32 %v922, %v1213
      %v1315 = vmul.f32 %v923, %v1218
      %v1316 = vmul.f32 %v924, %v1223
      %v1317 = vmul.f32 %v925, %v1228
      %v1318 = vmul.f32 %v926, %v1233
      %v1319 = vmul.f32 %v927, %v1238
      %v1320 = vmul.f32 %v928, %v1243
      %v1321 = vmul.f32 %v929, %v1248
      %v1322 = vmul.f32 %v930, %v1253
      %v1323 = vmul.f32 %v931, %v1258
      %v1324 = vmul.f32 %v932, %v1263
      %v1325 = vmul.f32 %v933, %v1268
      %v1326 = vpack.c.bf16 %v1271, %v1270
      %v1327 = vpack.c.bf16 %v1273, %v1272
      %v1328 = vpack.c.bf16 %v1275, %v1274
      %v1329 = vpack.c.bf16 %v1277, %v1276
      %v1330 = vpack.c.bf16 %v1279, %v1278
      %v1331 = vpack.c.bf16 %v1281, %v1280
      %v1332 = vpack.c.bf16 %v1283, %v1282
      %v1333 = vpack.c.bf16 %v1285, %v1284
      %v1334 = vpack.c.bf16 %v1287, %v1286
      %v1335 = vpack.c.bf16 %v1289, %v1288
      %v1336 = vpack.c.bf16 %v1291, %v1290
      %v1337 = vpack.c.bf16 %v1293, %v1292
      %v1338 = vpack.c.bf16 %v1295, %v1294
      %v1339 = vpack.c.bf16 %v1297, %v1296
      %v1340 = vpack.c.bf16 %v1299, %v1298
      %v1341 = vpack.c.bf16 %v1301, %v1300
      %v1342 = vpack.c.bf16 %v1303, %v1302
      %v1343 = vpack.c.bf16 %v1305, %v1304
      %v1344 = vpack.c.bf16 %v1307, %v1306
      %v1345 = vpack.c.bf16 %v1309, %v1308
      %v1346 = vpack.c.bf16 %v1311, %v1310
      %v1347 = vpack.c.bf16 %v1313, %v1312
      %v1348 = vpack.c.bf16 %v1315, %v1314
      %v1349 = vpack.c.bf16 %v1317, %v1316
      %v1350 = vpack.c.bf16 %v1319, %v1318
      %v1351 = vpack.c.bf16 %v1321, %v1320
      %v1352 = vpack.c.bf16 %v1323, %v1322
      %v1353 = vpack.c.bf16 %v1325, %v1324
      %vm1354 = vsmask.f32 7424
      %v1356 = vshrl.u32 %v1326, 16
      %v1358 = vshll.u32 %v1326, 16
      %v1360 = vrot.slane %v1358, 1
      %v1361 = vor.u32 %v1356, %v1360
      %v1363 = vshll.u32 %v1327, 16
      %v1365 = vrot.slane %v1363, 1
      %v1366 = vsel %vm1354, %v1361, %v1365
      %v1367 = vshrl.u32 %v1327, 16
      %v1369 = vor.u32 %v1367, %v1365
      %v1371 = vshll.u32 %v1328, 16
      %v1373 = vrot.slane %v1371, 1
      %v1374 = vsel %vm1354, %v1369, %v1373
      %v1375 = vshrl.u32 %v1328, 16
      %v1377 = vor.u32 %v1375, %v1373
      %v1379 = vshll.u32 %v1329, 16
      %v1381 = vrot.slane %v1379, 1
      %v1382 = vsel %vm1354, %v1377, %v1381
      %v1383 = vshrl.u32 %v1329, 16
      %v1385 = vor.u32 %v1383, %v1381
      %v1387 = vshll.u32 %v1330, 16
      %v1389 = vrot.slane %v1387, 1
      %v1390 = vsel %vm1354, %v1385, %v1389
      %v1391 = vshrl.u32 %v1330, 16
      %v1393 = vor.u32 %v1391, %v1389
      %v1395 = vshll.u32 %v1331, 16
      %v1397 = vrot.slane %v1395, 1
      %v1398 = vsel %vm1354, %v1393, %v1397
      %v1399 = vshrl.u32 %v1331, 16
      %v1401 = vor.u32 %v1399, %v1397
      %v1403 = vshll.u32 %v1332, 16
      %v1405 = vrot.slane %v1403, 1
      %v1406 = vsel %vm1354, %v1401, %v1405
      %v1407 = vshrl.u32 %v1332, 16
      %v1409 = vor.u32 %v1407, %v1405
      %v1411 = vshll.u32 %v1333, 16
      %v1413 = vrot.slane %v1411, 1
      %v1414 = vsel %vm1354, %v1409, %v1413
      %v1415 = vshrl.u32 %v1333, 16
      %v1417 = vor.u32 %v1415, %v1413
      %v1419 = vshll.u32 %v1334, 16
      %v1421 = vrot.slane %v1419, 1
      %v1422 = vsel %vm1354, %v1417, %v1421
      %v1423 = vshrl.u32 %v1334, 16
      %v1425 = vor.u32 %v1423, %v1421
      %v1427 = vshll.u32 %v1335, 16
      %v1429 = vrot.slane %v1427, 1
      %v1430 = vsel %vm1354, %v1425, %v1429
      %v1431 = vshrl.u32 %v1335, 16
      %v1433 = vor.u32 %v1431, %v1429
      %v1435 = vshll.u32 %v1336, 16
      %v1437 = vrot.slane %v1435, 1
      %v1438 = vsel %vm1354, %v1433, %v1437
      %v1439 = vshrl.u32 %v1336, 16
      %v1441 = vor.u32 %v1439, %v1437
      %v1443 = vshll.u32 %v1337, 16
      %v1445 = vrot.slane %v1443, 1
      %v1446 = vsel %vm1354, %v1441, %v1445
      %v1447 = vshrl.u32 %v1337, 16
      %v1449 = vor.u32 %v1447, %v1445
      %v1451 = vshll.u32 %v1338, 16
      %v1453 = vrot.slane %v1451, 1
      %v1454 = vsel %vm1354, %v1449, %v1453
      %v1455 = vshrl.u32 %v1338, 16
      %v1457 = vor.u32 %v1455, %v1453
      %v1459 = vshll.u32 %v1339, 16
      %v1461 = vrot.slane %v1459, 1
      %v1462 = vsel %vm1354, %v1457, %v1461
      %v1463 = vshrl.u32 %v1339, 16
      %v1465 = vor.u32 %v1463, %v1461
      %v1467 = vshll.u32 %v1340, 16
      %v1469 = vrot.slane %v1467, 1
      %v1470 = vsel %vm1354, %v1465, %v1469
      %v1471 = vshrl.u32 %v1340, 16
      %v1473 = vor.u32 %v1471, %v1469
      %v1475 = vshll.u32 %v1341, 16
      %v1477 = vrot.slane %v1475, 1
      %v1478 = vsel %vm1354, %v1473, %v1477
      %v1479 = vshrl.u32 %v1341, 16
      %v1481 = vor.u32 %v1479, %v1477
      %v1483 = vshll.u32 %v1342, 16
      %v1485 = vrot.slane %v1483, 1
      %v1486 = vsel %vm1354, %v1481, %v1485
      %v1487 = vshrl.u32 %v1342, 16
      %v1489 = vor.u32 %v1487, %v1485
      %v1491 = vshll.u32 %v1343, 16
      %v1493 = vrot.slane %v1491, 1
      %v1494 = vsel %vm1354, %v1489, %v1493
      %v1495 = vshrl.u32 %v1343, 16
      %v1497 = vor.u32 %v1495, %v1493
      %v1499 = vshll.u32 %v1344, 16
      %v1501 = vrot.slane %v1499, 1
      %v1502 = vsel %vm1354, %v1497, %v1501
      %v1503 = vshrl.u32 %v1344, 16
      %v1505 = vor.u32 %v1503, %v1501
      %v1507 = vshll.u32 %v1345, 16
      %v1509 = vrot.slane %v1507, 1
      %v1510 = vsel %vm1354, %v1505, %v1509
      %v1511 = vshrl.u32 %v1345, 16
      %v1513 = vor.u32 %v1511, %v1509
      %v1515 = vshll.u32 %v1346, 16
      %v1517 = vrot.slane %v1515, 1
      %v1518 = vsel %vm1354, %v1513, %v1517
      %v1519 = vshrl.u32 %v1346, 16
      %v1521 = vor.u32 %v1519, %v1517
      %v1523 = vshll.u32 %v1347, 16
      %v1525 = vrot.slane %v1523, 1
      %v1526 = vsel %vm1354, %v1521, %v1525
      %v1527 = vshrl.u32 %v1347, 16
      %v1529 = vor.u32 %v1527, %v1525
      %v1531 = vshll.u32 %v1348, 16
      %v1533 = vrot.slane %v1531, 1
      %v1534 = vsel %vm1354, %v1529, %v1533
      %v1535 = vshrl.u32 %v1348, 16
      %v1537 = vor.u32 %v1535, %v1533
      %v1539 = vshll.u32 %v1349, 16
      %v1541 = vrot.slane %v1539, 1
      %v1542 = vsel %vm1354, %v1537, %v1541
      %v1543 = vshrl.u32 %v1349, 16
      %v1545 = vor.u32 %v1543, %v1541
      %v1547 = vshll.u32 %v1350, 16
      %v1549 = vrot.slane %v1547, 1
      %v1550 = vsel %vm1354, %v1545, %v1549
      %v1551 = vshrl.u32 %v1350, 16
      %v1553 = vor.u32 %v1551, %v1549
      %v1555 = vshll.u32 %v1351, 16
      %v1557 = vrot.slane %v1555, 1
      %v1558 = vsel %vm1354, %v1553, %v1557
      %v1559 = vshrl.u32 %v1351, 16
      %v1561 = vor.u32 %v1559, %v1557
      %v1563 = vshll.u32 %v1352, 16
      %v1565 = vrot.slane %v1563, 1
      %v1566 = vsel %vm1354, %v1561, %v1565
      %v1567 = vshrl.u32 %v1352, 16
      %v1569 = vor.u32 %v1567, %v1565
      %v1571 = vshll.u32 %v1353, 16
      %v1573 = vrot.slane %v1571, 1
      %v1574 = vsel %vm1354, %v1569, %v1573
      %vm1630 = vcmask 1046528
      %v1631 = vrot.slane %v1326, 1
      %v1632 = vrot.slane %v1327, 1
      %v1633 = vsel %vm1630, %v1631, %v1632
      %v1634 = vrot.slane %v1328, 1
      %v1635 = vsel %vm1630, %v1632, %v1634
      %v1636 = vrot.slane %v1329, 1
      %v1637 = vsel %vm1630, %v1634, %v1636
      %v1638 = vrot.slane %v1330, 1
      %v1639 = vsel %vm1630, %v1636, %v1638
      %v1640 = vrot.slane %v1331, 1
      %v1641 = vsel %vm1630, %v1638, %v1640
      %v1642 = vrot.slane %v1332, 1
      %v1643 = vsel %vm1630, %v1640, %v1642
      %v1644 = vrot.slane %v1333, 1
      %v1645 = vsel %vm1630, %v1642, %v1644
      %v1646 = vrot.slane %v1334, 1
      %v1647 = vsel %vm1630, %v1644, %v1646
      %v1648 = vrot.slane %v1335, 1
      %v1649 = vsel %vm1630, %v1646, %v1648
      %v1650 = vrot.slane %v1336, 1
      %v1651 = vsel %vm1630, %v1648, %v1650
      %v1652 = vrot.slane %v1337, 1
      %v1653 = vsel %vm1630, %v1650, %v1652
      %v1654 = vrot.slane %v1338, 1
      %v1655 = vsel %vm1630, %v1652, %v1654
      %v1656 = vrot.slane %v1339, 1
      %v1657 = vsel %vm1630, %v1654, %v1656
      %v1658 = vrot.slane %v1340, 1
      %v1659 = vsel %vm1630, %v1656, %v1658
      %v1660 = vrot.slane %v1341, 1
      %v1661 = vsel %vm1630, %v1658, %v1660
      %v1662 = vrot.slane %v1342, 1
      %v1663 = vsel %vm1630, %v1660, %v1662
      %v1664 = vrot.slane %v1343, 1
      %v1665 = vsel %vm1630, %v1662, %v1664
      %v1666 = vrot.slane %v1344, 1
      %v1667 = vsel %vm1630, %v1664, %v1666
      %v1668 = vrot.slane %v1345, 1
      %v1669 = vsel %vm1630, %v1666, %v1668
      %v1670 = vrot.slane %v1346, 1
      %v1671 = vsel %vm1630, %v1668, %v1670
      %v1672 = vrot.slane %v1347, 1
      %v1673 = vsel %vm1630, %v1670, %v1672
      %v1674 = vrot.slane %v1348, 1
      %v1675 = vsel %vm1630, %v1672, %v1674
      %v1676 = vrot.slane %v1349, 1
      %v1677 = vsel %vm1630, %v1674, %v1676
      %v1678 = vrot.slane %v1350, 1
      %v1679 = vsel %vm1630, %v1676, %v1678
      %v1680 = vrot.slane %v1351, 1
      %v1681 = vsel %vm1630, %v1678, %v1680
      %v1682 = vrot.slane %v1352, 1
      %v1683 = vsel %vm1630, %v1680, %v1682
      %v1684 = vrot.slane %v1353, 1
      %v1685 = vsel %vm1630, %v1682, %v1684
      %v1713 = vld [vmem:[%s294] sm:$0x1]
      %v1715 = vlaneseq
      %v1716 = vshrl.u32 %v1715, 7
      %v1717 = vsub.s32 0, %v1716
      %v1718 = vrot.slane %v1713, %v1717
      %v1720 = vadd.f32 %v1718, 0.0
      %v1721 = vld [vmem:[%s291] sm:$0xf]
      %v1722 = vld [vmem:[%s291 + $0x4] sm:$0xf]
      %v1723 = vld [vmem:[%s291 + $0x8] sm:$0xf]
      %v1724 = vld [vmem:[%s291 + $0xc] sm:$0xf]
      %v1725 = vld [vmem:[%s291 + $0x10] sm:$0xf]
      %v1726 = vld [vmem:[%s291 + $0x14] sm:$0xf]
      %v1727 = vld [vmem:[%s291 + $0x18] sm:$0xf]
      %v1728 = vld [vmem:[%s291 + $0x1c] sm:$0xf]
      %v1729 = vld [vmem:[%s291 + $0x20] sm:$0xf]
      %v1730 = vld [vmem:[%s291 + $0x24] sm:$0xf]
      %v1731 = vld [vmem:[%s291 + $0x28] sm:$0xf]
      %v1732 = vld [vmem:[%s291 + $0x2c] sm:$0xf]
      %v1733 = vld [vmem:[%s291 + $0x30] sm:$0xf]
      %v1734 = vld [vmem:[%s291 + $0x34] sm:$0xf]
      %v1735 = vld [vmem:[%s291 + $0x38] sm:$0xf]
      %v1736 = vld [vmem:[%s291 + $0x3c] sm:$0xf]
      %v1737 = vld [vmem:[%s291 + $0x40] sm:$0xf]
      %v1738 = vld [vmem:[%s291 + $0x44] sm:$0xf]
      %v1739 = vld [vmem:[%s291 + $0x48] sm:$0xf]
      %v1740 = vld [vmem:[%s291 + $0x4c] sm:$0xf]
      %v1741 = vld [vmem:[%s291 + $0x50] sm:$0xf]
      %v1742 = vld [vmem:[%s291 + $0x54] sm:$0xf]
      %v1743 = vld [vmem:[%s291 + $0x58] sm:$0xf]
      %v1744 = vld [vmem:[%s291 + $0x5c] sm:$0xf]
      %v1745 = vld [vmem:[%s291 + $0x60] sm:$0xf]
      %v1746 = vld [vmem:[%s291 + $0x64] sm:$0xf]
      %v1747 = vld [vmem:[%s291 + $0x68] sm:$0xf]
      %v1748 = vld [vmem:[%s291 + $0x6c] sm:$0xf]
      %v1749 = vld [vmem:[%s291 + $0x70] sm:$0xf]
      %v1750 = vld [vmem:[%s291 + $0x74] sm:$0xf]
      %v1751 = vld [vmem:[%s291 + $0x78] sm:$0xf]
      %v1752 = vld [vmem:[%s291 + $0x7c] sm:$0xf]
      %v1753 = vld [vmem:[%s291 + $0x80] sm:$0xf]
      %v1754 = vld [vmem:[%s291 + $0x84] sm:$0xf]
      %v1755 = vld [vmem:[%s291 + $0x88] sm:$0xf]
      %v1756 = vld [vmem:[%s291 + $0x8c] sm:$0xf]
      %v1757 = vld [vmem:[%s291 + $0x90] sm:$0xf]
      %v1758 = vld [vmem:[%s291 + $0x94] sm:$0xf]
      %v1759 = vld [vmem:[%s291 + $0x98] sm:$0xf]
      %v1760 = vld [vmem:[%s291 + $0x9c] sm:$0xf]
      %v1761 = vld [vmem:[%s291 + $0xa0] sm:$0xf]
      %v1762 = vld [vmem:[%s291 + $0xa4] sm:$0xf]
      %v1763 = vld [vmem:[%s291 + $0xa8] sm:$0xf]
      %v1764 = vld [vmem:[%s291 + $0xac] sm:$0xf]
      %v1765 = vld [vmem:[%s291 + $0xb0] sm:$0xf]
      %v1766 = vld [vmem:[%s291 + $0xb4] sm:$0xf]
      %v1767 = vld [vmem:[%s291 + $0xb8] sm:$0xf]
      %v1768 = vld [vmem:[%s291 + $0xbc] sm:$0xf]
      %v1817 = vunpack.c.l.b16 %v1721
      %v1818 = vunpack.c.l.b16 %v1722
      %v1819 = vunpack.c.l.b16 %v1723
      %v1820 = vunpack.c.l.b16 %v1724
      %v1821 = vunpack.c.l.b16 %v1725
      %v1822 = vunpack.c.l.b16 %v1726
      %v1823 = vunpack.c.l.b16 %v1727
      %v1824 = vunpack.c.l.b16 %v1728
      %v1825 = vunpack.c.l.b16 %v1729
      %v1826 = vunpack.c.l.b16 %v1730
      %v1827 = vunpack.c.l.b16 %v1731
      %v1828 = vunpack.c.l.b16 %v1732
      %v1829 = vunpack.c.l.b16 %v1733
      %v1830 = vunpack.c.l.b16 %v1734
      %v1831 = vunpack.c.l.b16 %v1735
      %v1832 = vunpack.c.l.b16 %v1736
      %v1833 = vunpack.c.l.b16 %v1737
      %v1834 = vunpack.c.l.b16 %v1738
      %v1835 = vunpack.c.l.b16 %v1739
      %v1836 = vunpack.c.l.b16 %v1740
      %v1837 = vunpack.c.l.b16 %v1741
      %v1838 = vunpack.c.l.b16 %v1742
      %v1839 = vunpack.c.l.b16 %v1743
      %v1840 = vunpack.c.l.b16 %v1744
      %v1841 = vunpack.c.l.b16 %v1745
      %v1842 = vunpack.c.l.b16 %v1746
      %v1843 = vunpack.c.l.b16 %v1747
      %v1844 = vunpack.c.l.b16 %v1748
      %v1845 = vunpack.c.l.b16 %v1749
      %v1846 = vunpack.c.l.b16 %v1750
      %v1847 = vunpack.c.l.b16 %v1751
      %v1848 = vunpack.c.l.b16 %v1752
      %v1849 = vunpack.c.l.b16 %v1753
      %v1850 = vunpack.c.l.b16 %v1754
      %v1851 = vunpack.c.l.b16 %v1755
      %v1852 = vunpack.c.l.b16 %v1756
      %v1853 = vunpack.c.l.b16 %v1757
      %v1854 = vunpack.c.l.b16 %v1758
      %v1855 = vunpack.c.l.b16 %v1759
      %v1856 = vunpack.c.l.b16 %v1760
      %v1857 = vunpack.c.l.b16 %v1761
      %v1858 = vunpack.c.l.b16 %v1762
      %v1859 = vunpack.c.l.b16 %v1763
      %v1860 = vunpack.c.l.b16 %v1764
      %v1861 = vunpack.c.l.b16 %v1765
      %v1862 = vunpack.c.l.b16 %v1766
      %v1863 = vunpack.c.l.b16 %v1767
      %v1864 = vunpack.c.l.b16 %v1768
      %v1865 = vpack.c.b16 %v1818, %v1817
      %v1866 = vpack.c.b16 %v1820, %v1819
      %v1867 = vpack.c.b16 %v1822, %v1821
      %v1868 = vpack.c.b16 %v1824, %v1823
      %v1869 = vpack.c.b16 %v1826, %v1825
      %v1870 = vpack.c.b16 %v1828, %v1827
      %v1871 = vpack.c.b16 %v1830, %v1829
      %v1872 = vpack.c.b16 %v1832, %v1831
      %v1873 = vpack.c.b16 %v1834, %v1833
      %v1874 = vpack.c.b16 %v1836, %v1835
      %v1875 = vpack.c.b16 %v1838, %v1837
      %v1876 = vpack.c.b16 %v1840, %v1839
      %v1877 = vpack.c.b16 %v1842, %v1841
      %v1878 = vpack.c.b16 %v1844, %v1843
      %v1879 = vpack.c.b16 %v1846, %v1845
      %v1880 = vpack.c.b16 %v1848, %v1847
      %v1881 = vpack.c.b16 %v1850, %v1849
      %v1882 = vpack.c.b16 %v1852, %v1851
      %v1883 = vpack.c.b16 %v1854, %v1853
      %v1884 = vpack.c.b16 %v1856, %v1855
      %v1885 = vpack.c.b16 %v1858, %v1857
      %v1886 = vpack.c.b16 %v1860, %v1859
      %v1887 = vpack.c.b16 %v1862, %v1861
      %v1888 = vpack.c.b16 %v1864, %v1863
      %1913 = vmatprep.subr.bf16.mxu0 0
      %1914 = vmatpush1.bf16.msra.mxu0 %v1865
      %1915 = vmatprep.subr.bf16.mxu0 0
      %1916 = vmatpush1.bf16.msra.mxu0 %v1866
      %1917 = vmatprep.subr.bf16.mxu0 0
      %1918 = vmatpush1.bf16.msra.mxu0 %v1867
      %1919 = vmatprep.subr.bf16.mxu0 0
      %1920 = vmatpush1.bf16.msra.mxu0 %v1868
      %1921 = vmatprep.subr.bf16.mxu0 0
      %1922 = vmatpush1.bf16.msra.mxu0 %v1869
      %1923 = vmatprep.subr.bf16.mxu0 0
      %1924 = vmatpush1.bf16.msra.mxu0 %v1870
      %1925 = vmatprep.subr.bf16.mxu0 0
      %1926 = vmatpush1.bf16.msra.mxu0 %v1871
      %1927 = vmatprep.subr.bf16.mxu0 0
      %1928 = vmatpush1.bf16.msra.mxu0 %v1872
      %1929 = vmatprep.subr.bf16.mxu0 0
      %1930 = vmatpush1.bf16.msra.mxu0 %v1873
      %1931 = vmatprep.subr.bf16.mxu0 0
      %1932 = vmatpush1.bf16.msra.mxu0 %v1874
      %1933 = vmatprep.subr.bf16.mxu0 0
      %1934 = vmatpush1.bf16.msra.mxu0 %v1875
      %1935 = vmatprep.subr.bf16.mxu0 0
      %1936 = vmatpush1.bf16.msra.mxu0 %v1876
      %1937 = vmatprep.subr.bf16.mxu0 0
      %1938 = vmatpush1.bf16.msra.mxu0 %v1877
      %1939 = vmatprep.subr.bf16.mxu0 0
      %1940 = vmatpush1.bf16.msra.mxu0 %v1878
      %1941 = vmatprep.subr.bf16.mxu0 0
      %1942 = vmatpush1.bf16.msra.mxu0 %v1879
      %1943 = vmatprep.subr.bf16.mxu0 0
      %1944 = vmatpush1.bf16.msra.mxu0 %v1880
      %1945 = vmatprep.mubr.bf16.mxu0 %v1366
      %1946 = vmatmul.mubr.bf16.gmra.mrb[0].mxu0 %v1326
      %v1947 = vpop.f32.mrb[0].mxu0
      %v1948 = vadd.f32 0.0, %v1947
      %v1949 = vpop.f32.mrb[0].mxu0
      %v1950 = vpop.f32.mrb[0].mxu0
      %v1951 = vadd.f32 0.0, %v1950
      %v1952 = vpop.f32.mrb[0].mxu0
      %1953 = vmatprep.mubr.bf16.mxu0 %v1374
      %1954 = vmatmul.mubr.bf16.gmra.mrb[0].mxu0 %v1327
      %v1955 = vpop.f32.mrb[0].mxu0
      %v1956 = vadd.f32 0.0, %v1955
      %v1957 = vpop.f32.mrb[0].mxu0
      %v1958 = vpop.f32.mrb[0].mxu0
      %v1959 = vadd.f32 0.0, %v1958
      %v1960 = vpop.f32.mrb[0].mxu0
      %1961 = vmatprep.mubr.bf16.mxu0 %v1382
      %1962 = vmatmul.mubr.bf16.gmra.mrb[0].mxu0 %v1328
      %v1963 = vpop.f32.mrb[0].mxu0
      %v1964 = vadd.f32 0.0, %v1963
      %v1965 = vpop.f32.mrb[0].mxu0
      %v1966 = vpop.f32.mrb[0].mxu0
      %v1967 = vadd.f32 0.0, %v1966
      %v1968 = vpop.f32.mrb[0].mxu0
      %1969 = vmatprep.mubr.bf16.mxu0 %v1390
      %1970 = vmatmul.mubr.bf16.gmra.mrb[0].mxu0 %v1329
      %v1971 = vpop.f32.mrb[0].mxu0
      %v1972 = vadd.f32 0.0, %v1971
      %v1973 = vpop.f32.mrb[0].mxu0
      %v1974 = vpop.f32.mrb[0].mxu0
      %v1975 = vadd.f32 0.0, %v1974
      %v1976 = vpop.f32.mrb[0].mxu0
      %1977 = vmatprep.mubr.bf16.mxu0 %v1398
      %1978 = vmatmul.mubr.bf16.gmra.mrb[0].mxu0 %v1330
      %v1979 = vpop.f32.mrb[0].mxu0
      %v1980 = vadd.f32 0.0, %v1979
      %v1981 = vpop.f32.mrb[0].mxu0
      %v1982 = vpop.f32.mrb[0].mxu0
      %v1983 = vadd.f32 0.0, %v1982
      %v1984 = vpop.f32.mrb[0].mxu0
      %1985 = vmatprep.mubr.bf16.mxu0 %v1406
      %1986 = vmatmul.mubr.bf16.gmra.mrb[0].mxu0 %v1331
      %v1987 = vpop.f32.mrb[0].mxu0
      %v1988 = vadd.f32 0.0, %v1987
      %v1989 = vpop.f32.mrb[0].mxu0
      %v1990 = vpop.f32.mrb[0].mxu0
      %v1991 = vadd.f32 0.0, %v1990
      %v1992 = vpop.f32.mrb[0].mxu0
      %1993 = vmatprep.mubr.bf16.mxu0 %v1414
      %1994 = vmatmul.mubr.bf16.gmra.mrb[0].mxu0 %v1332
      %v1995 = vpop.f32.mrb[0].mxu0
      %v1996 = vadd.f32 0.0, %v1995
      %v1997 = vpop.f32.mrb[0].mxu0
      %v1998 = vpop.f32.mrb[0].mxu0
      %v1999 = vadd.f32 0.0, %v1998
      %v2000 = vpop.f32.mrb[0].mxu0
      %2001 = vmatprep.mubr.bf16.mxu0 %v1422
      %2002 = vmatmul.mubr.bf16.gmra.mrb[0].mxu0 %v1333
      %v2003 = vpop.f32.mrb[0].mxu0
      %v2004 = vadd.f32 0.0, %v2003
      %v2005 = vpop.f32.mrb[0].mxu0
      %v2006 = vpop.f32.mrb[0].mxu0
      %v2007 = vadd.f32 0.0, %v2006
      %v2008 = vpop.f32.mrb[0].mxu0
      %2009 = vmatprep.mubr.bf16.mxu0 %v1430
      %2010 = vmatmul.mubr.bf16.gmra.mrb[0].mxu0 %v1334
      %v2011 = vpop.f32.mrb[0].mxu0
      %v2012 = vadd.f32 0.0, %v2011
      %v2013 = vpop.f32.mrb[0].mxu0
      %v2014 = vpop.f32.mrb[0].mxu0
      %v2015 = vadd.f32 0.0, %v2014
      %v2016 = vpop.f32.mrb[0].mxu0
      %2017 = vmatprep.mubr.bf16.mxu0 %v1438
      %2018 = vmatmul.mubr.bf16.gmra.mrb[0].mxu0 %v1335
      %v2019 = vpop.f32.mrb[0].mxu0
      %v2020 = vadd.f32 0.0, %v2019
      %v2021 = vpop.f32.mrb[0].mxu0
      %v2022 = vpop.f32.mrb[0].mxu0
      %v2023 = vadd.f32 0.0, %v2022
      %v2024 = vpop.f32.mrb[0].mxu0
      %2025 = vmatprep.mubr.bf16.mxu0 %v1446
      %2026 = vmatmul.mubr.bf16.gmra.mrb[0].mxu0 %v1336
      %v2027 = vpop.f32.mrb[0].mxu0
      %v2028 = vadd.f32 0.0, %v2027
      %v2029 = vpop.f32.mrb[0].mxu0
      %v2030 = vpop.f32.mrb[0].mxu0
      %v2031 = vadd.f32 0.0, %v2030
      %v2032 = vpop.f32.mrb[0].mxu0
      %2033 = vmatprep.mubr.bf16.mxu0 %v1454
      %2034 = vmatmul.mubr.bf16.gmra.mrb[0].mxu0 %v1337
      %v2035 = vpop.f32.mrb[0].mxu0
      %v2036 = vadd.f32 0.0, %v2035
      %v2037 = vpop.f32.mrb[0].mxu0
      %v2038 = vpop.f32.mrb[0].mxu0
      %v2039 = vadd.f32 0.0, %v2038
      %v2040 = vpop.f32.mrb[0].mxu0
      %2041 = vmatprep.mubr.bf16.mxu0 %v1462
      %2042 = vmatmul.mubr.bf16.gmra.mrb[0].mxu0 %v1338
      %v2043 = vpop.f32.mrb[0].mxu0
      %v2044 = vadd.f32 0.0, %v2043
      %v2045 = vpop.f32.mrb[0].mxu0
      %v2046 = vpop.f32.mrb[0].mxu0
      %v2047 = vadd.f32 0.0, %v2046
      %v2048 = vpop.f32.mrb[0].mxu0
      %2049 = vmatprep.mubr.bf16.mxu0 %v1470
      %2050 = vmatmul.mubr.bf16.gmra.mrb[0].mxu0 %v1339
      %v2051 = vpop.f32.mrb[0].mxu0
      %v2052 = vadd.f32 0.0, %v2051
      %v2053 = vpop.f32.mrb[0].mxu0
      %v2054 = vpop.f32.mrb[0].mxu0
      %v2055 = vadd.f32 0.0, %v2054
      %v2056 = vpop.f32.mrb[0].mxu0
      %2057 = vmatprep.mubr.bf16.mxu0 %v1478
      %2058 = vmatmul.mubr.bf16.gmra.mrb[0].mxu0 %v1340
      %v2059 = vpop.f32.mrb[0].mxu0
      %v2060 = vadd.f32 0.0, %v2059
      %v2061 = vpop.f32.mrb[0].mxu0
      %v2062 = vpop.f32.mrb[0].mxu0
      %v2063 = vadd.f32 0.0, %v2062
      %v2064 = vpop.f32.mrb[0].mxu0
      %2065 = vmatprep.mubr.bf16.mxu0 %v1486
      %2066 = vmatmul.mubr.bf16.gmra.mrb[0].mxu0 %v1341
      %v2067 = vpop.f32.mrb[0].mxu0
      %v2068 = vadd.f32 0.0, %v2067
      %v2069 = vpop.f32.mrb[0].mxu0
      %v2070 = vpop.f32.mrb[0].mxu0
      %v2071 = vadd.f32 0.0, %v2070
      %v2072 = vpop.f32.mrb[0].mxu0
      %2073 = vmatprep.mubr.bf16.mxu0 %v1494
      %2074 = vmatmul.mubr.bf16.gmra.mrb[0].mxu0 %v1342
      %v2075 = vpop.f32.mrb[0].mxu0
      %v2076 = vadd.f32 0.0, %v2075
      %v2077 = vpop.f32.mrb[0].mxu0
      %v2078 = vpop.f32.mrb[0].mxu0
      %v2079 = vadd.f32 0.0, %v2078
      %v2080 = vpop.f32.mrb[0].mxu0
      %2081 = vmatprep.mubr.bf16.mxu0 %v1502
      %2082 = vmatmul.mubr.bf16.gmra.mrb[0].mxu0 %v1343
      %v2083 = vpop.f32.mrb[0].mxu0
      %v2084 = vadd.f32 0.0, %v2083
      %v2085 = vpop.f32.mrb[0].mxu0
      %v2086 = vpop.f32.mrb[0].mxu0
      %v2087 = vadd.f32 0.0, %v2086
      %v2088 = vpop.f32.mrb[0].mxu0
      %2089 = vmatprep.mubr.bf16.mxu0 %v1510
      %2090 = vmatmul.mubr.bf16.gmra.mrb[0].mxu0 %v1344
      %v2091 = vpop.f32.mrb[0].mxu0
      %v2092 = vadd.f32 0.0, %v2091
      %v2093 = vpop.f32.mrb[0].mxu0
      %v2094 = vpop.f32.mrb[0].mxu0
      %v2095 = vadd.f32 0.0, %v2094
      %v2096 = vpop.f32.mrb[0].mxu0
      %2097 = vmatprep.mubr.bf16.mxu0 %v1518
      %2098 = vmatmul.mubr.bf16.gmra.mrb[0].mxu0 %v1345
      %v2099 = vpop.f32.mrb[0].mxu0
      %v2100 = vadd.f32 0.0, %v2099
      %v2101 = vpop.f32.mrb[0].mxu0
      %v2102 = vpop.f32.mrb[0].mxu0
      %v2103 = vadd.f32 0.0, %v2102
      %v2104 = vpop.f32.mrb[0].mxu0
      %2105 = vmatprep.mubr.bf16.mxu0 %v1526
      %2106 = vmatmul.mubr.bf16.gmra.mrb[0].mxu0 %v1346
      %v2107 = vpop.f32.mrb[0].mxu0
      %v2108 = vadd.f32 0.0, %v2107
      %v2109 = vpop.f32.mrb[0].mxu0
      %v2110 = vpop.f32.mrb[0].mxu0
      %v2111 = vadd.f32 0.0, %v2110
      %v2112 = vpop.f32.mrb[0].mxu0
      %2113 = vmatprep.mubr.bf16.mxu0 %v1534
      %2114 = vmatmul.mubr.bf16.gmra.mrb[0].mxu0 %v1347
      %v2115 = vpop.f32.mrb[0].mxu0
      %v2116 = vadd.f32 0.0, %v2115
      %v2117 = vpop.f32.mrb[0].mxu0
      %v2118 = vpop.f32.mrb[0].mxu0
      %v2119 = vadd.f32 0.0, %v2118
      %v2120 = vpop.f32.mrb[0].mxu0
      %2121 = vmatprep.mubr.bf16.mxu0 %v1542
      %2122 = vmatmul.mubr.bf16.gmra.mrb[0].mxu0 %v1348
      %v2123 = vpop.f32.mrb[0].mxu0
      %v2124 = vadd.f32 0.0, %v2123
      %v2125 = vpop.f32.mrb[0].mxu0
      %v2126 = vpop.f32.mrb[0].mxu0
      %v2127 = vadd.f32 0.0, %v2126
      %v2128 = vpop.f32.mrb[0].mxu0
      %2129 = vmatprep.mubr.bf16.mxu0 %v1550
      %2130 = vmatmul.mubr.bf16.gmra.mrb[0].mxu0 %v1349
      %v2131 = vpop.f32.mrb[0].mxu0
      %v2132 = vadd.f32 0.0, %v2131
      %v2133 = vpop.f32.mrb[0].mxu0
      %v2134 = vpop.f32.mrb[0].mxu0
      %v2135 = vadd.f32 0.0, %v2134
      %v2136 = vpop.f32.mrb[0].mxu0
      %2137 = vdwg.mxu0
      %2138 = vmatprep.subr.bf16.mxu0 0
      %2139 = vmatpush1.bf16.msra.mxu0 %v1881
      %2140 = vmatprep.subr.bf16.mxu0 0
      %2141 = vmatpush1.bf16.msra.mxu0 %v1882
      %2142 = vmatprep.subr.bf16.mxu0 0
      %2143 = vmatpush1.bf16.msra.mxu0 %v1883
      %2144 = vmatprep.subr.bf16.mxu0 0
      %2145 = vmatpush1.bf16.msra.mxu0 %v1884
      %2146 = vmatprep.subr.bf16.mxu0 0
      %2147 = vmatpush1.bf16.msra.mxu0 %v1885
      %2148 = vmatprep.subr.bf16.mxu0 0
      %2149 = vmatpush1.bf16.msra.mxu0 %v1886
      %2150 = vmatprep.subr.bf16.mxu0 0
      %2151 = vmatpush1.bf16.msra.mxu0 %v1887
      %2152 = vmatprep.subr.bf16.mxu0 0
      %2153 = vmatpush1.bf16.msra.mxu0 %v1888
      %2154 = vmatprep.subr.bf16.mxu0 0
      %2155 = vmatpush1.bf16.msra.mxu0 0
      %2156 = vmatprep.subr.bf16.mxu0 0
      %2157 = vmatpush1.bf16.msra.mxu0 0
      %2158 = vmatprep.subr.bf16.mxu0 0
      %2159 = vmatpush1.bf16.msra.mxu0 0
      %2160 = vmatprep.subr.bf16.mxu0 0
      %2161 = vmatpush1.bf16.msra.mxu0 0
      %2162 = vmatprep.subr.bf16.mxu0 0
      %2163 = vmatpush1.bf16.msra.mxu0 0
      %2164 = vmatprep.subr.bf16.mxu0 0
      %2165 = vmatpush1.bf16.msra.mxu0 0
      %2166 = vmatprep.subr.bf16.mxu0 0
      %2167 = vmatpush1.bf16.msra.mxu0 0
      %2168 = vmatprep.subr.bf16.mxu0 0
      %2169 = vmatpush1.bf16.msra.mxu0 0
      %2170 = vmatprep.mubr.bf16.mxu0 0
      %2171 = vmatmul.mubr.bf16.gmra.mrb[0].mxu0 %v1633
      %v2172 = vpop.f32.mrb[0].mxu0
      %v2173 = vadd.f32 %v1948, %v2172
      %v2174 = vpop.f32.mrb[0].mxu0
      %v2175 = vpop.f32.mrb[0].mxu0
      %v2176 = vadd.f32 %v1951, %v2175
      %v2177 = vpop.f32.mrb[0].mxu0
      %2178 = vmatprep.mubr.bf16.mxu0 0
      %2179 = vmatmul.mubr.bf16.gmra.mrb[0].mxu0 %v1635
      %v2180 = vpop.f32.mrb[0].mxu0
      %v2181 = vadd.f32 %v1956, %v2180
      %v2182 = vpop.f32.mrb[0].mxu0
      %v2183 = vpop.f32.mrb[0].mxu0
      %v2184 = vadd.f32 %v1959, %v2183
      %v2185 = vpop.f32.mrb[0].mxu0
      %2186 = vmatprep.mubr.bf16.mxu0 0
      %2187 = vmatmul.mubr.bf16.gmra.mrb[0].mxu0 %v1637
      %v2188 = vpop.f32.mrb[0].mxu0
      %v2189 = vadd.f32 %v1964, %v2188
      %v2190 = vpop.f32.mrb[0].mxu0
      %v2191 = vpop.f32.mrb[0].mxu0
      %v2192 = vadd.f32 %v1967, %v2191
      %v2193 = vpop.f32.mrb[0].mxu0
      %2194 = vmatprep.mubr.bf16.mxu0 0
      %2195 = vmatmul.mubr.bf16.gmra.mrb[0].mxu0 %v1639
      %v2196 = vpop.f32.mrb[0].mxu0
      %v2197 = vadd.f32 %v1972, %v2196
      %v2198 = vpop.f32.mrb[0].mxu0
      %v2199 = vpop.f32.mrb[0].mxu0
      %v2200 = vadd.f32 %v1975, %v2199
      %v2201 = vpop.f32.mrb[0].mxu0
      %2202 = vmatprep.mubr.bf16.mxu0 0
      %2203 = vmatmul.mubr.bf16.gmra.mrb[0].mxu0 %v1641
      %v2204 = vpop.f32.mrb[0].mxu0
      %v2205 = vadd.f32 %v1980, %v2204
      %v2206 = vpop.f32.mrb[0].mxu0
      %v2207 = vpop.f32.mrb[0].mxu0
      %v2208 = vadd.f32 %v1983, %v2207
      %v2209 = vpop.f32.mrb[0].mxu0
      %2210 = vmatprep.mubr.bf16.mxu0 0
      %2211 = vmatmul.mubr.bf16.gmra.mrb[0].mxu0 %v1643
      %v2212 = vpop.f32.mrb[0].mxu0
      %v2213 = vadd.f32 %v1988, %v2212
      %v2214 = vpop.f32.mrb[0].mxu0
      %v2215 = vpop.f32.mrb[0].mxu0
      %v2216 = vadd.f32 %v1991, %v2215
      %v2217 = vpop.f32.mrb[0].mxu0
      %2218 = vmatprep.mubr.bf16.mxu0 0
      %2219 = vmatmul.mubr.bf16.gmra.mrb[0].mxu0 %v1645
      %v2220 = vpop.f32.mrb[0].mxu0
      %v2221 = vadd.f32 %v1996, %v2220
      %v2222 = vpop.f32.mrb[0].mxu0
      %v2223 = vpop.f32.mrb[0].mxu0
      %v2224 = vadd.f32 %v1999, %v2223
      %v2225 = vpop.f32.mrb[0].mxu0
      %2226 = vmatprep.mubr.bf16.mxu0 0
      %2227 = vmatmul.mubr.bf16.gmra.mrb[0].mxu0 %v1647
      %v2228 = vpop.f32.mrb[0].mxu0
      %v2229 = vadd.f32 %v2004, %v2228
      %v2230 = vpop.f32.mrb[0].mxu0
      %v2231 = vpop.f32.mrb[0].mxu0
      %v2232 = vadd.f32 %v2007, %v2231
      %v2233 = vpop.f32.mrb[0].mxu0
      %2234 = vmatprep.mubr.bf16.mxu0 0
      %2235 = vmatmul.mubr.bf16.gmra.mrb[0].mxu0 %v1649
      %v2236 = vpop.f32.mrb[0].mxu0
      %v2237 = vadd.f32 %v2012, %v2236
      %v2238 = vpop.f32.mrb[0].mxu0
      %v2239 = vpop.f32.mrb[0].mxu0
      %v2240 = vadd.f32 %v2015, %v2239
      %v2241 = vpop.f32.mrb[0].mxu0
      %2242 = vmatprep.mubr.bf16.mxu0 0
      %2243 = vmatmul.mubr.bf16.gmra.mrb[0].mxu0 %v1651
      %v2244 = vpop.f32.mrb[0].mxu0
      %v2245 = vadd.f32 %v2020, %v2244
      %v2246 = vpop.f32.mrb[0].mxu0
      %v2247 = vpop.f32.mrb[0].mxu0
      %v2248 = vadd.f32 %v2023, %v2247
      %v2249 = vpop.f32.mrb[0].mxu0
      %2250 = vmatprep.mubr.bf16.mxu0 0
      %2251 = vmatmul.mubr.bf16.gmra.mrb[0].mxu0 %v1653
      %v2252 = vpop.f32.mrb[0].mxu0
      %v2253 = vadd.f32 %v2028, %v2252
      %v2254 = vpop.f32.mrb[0].mxu0
      %v2255 = vpop.f32.mrb[0].mxu0
      %v2256 = vadd.f32 %v2031, %v2255
      %v2257 = vpop.f32.mrb[0].mxu0
      %2258 = vmatprep.mubr.bf16.mxu0 0
      %2259 = vmatmul.mubr.bf16.gmra.mrb[0].mxu0 %v1655
      %v2260 = vpop.f32.mrb[0].mxu0
      %v2261 = vadd.f32 %v2036, %v2260
      %v2262 = vpop.f32.mrb[0].mxu0
      %v2263 = vpop.f32.mrb[0].mxu0
      %v2264 = vadd.f32 %v2039, %v2263
      %v2265 = vpop.f32.mrb[0].mxu0
      %2266 = vmatprep.mubr.bf16.mxu0 0
      %2267 = vmatmul.mubr.bf16.gmra.mrb[0].mxu0 %v1657
      %v2268 = vpop.f32.mrb[0].mxu0
      %v2269 = vadd.f32 %v2044, %v2268
      %v2270 = vpop.f32.mrb[0].mxu0
      %v2271 = vpop.f32.mrb[0].mxu0
      %v2272 = vadd.f32 %v2047, %v2271
      %v2273 = vpop.f32.mrb[0].mxu0
      %2274 = vmatprep.mubr.bf16.mxu0 0
      %2275 = vmatmul.mubr.bf16.gmra.mrb[0].mxu0 %v1659
      %v2276 = vpop.f32.mrb[0].mxu0
      %v2277 = vadd.f32 %v2052, %v2276
      %v2278 = vpop.f32.mrb[0].mxu0
      %v2279 = vpop.f32.mrb[0].mxu0
      %v2280 = vadd.f32 %v2055, %v2279
      %v2281 = vpop.f32.mrb[0].mxu0
      %2282 = vmatprep.mubr.bf16.mxu0 0
      %2283 = vmatmul.mubr.bf16.gmra.mrb[0].mxu0 %v1661
      %v2284 = vpop.f32.mrb[0].mxu0
      %v2285 = vadd.f32 %v2060, %v2284
      %v2286 = vpop.f32.mrb[0].mxu0
      %v2287 = vpop.f32.mrb[0].mxu0
      %v2288 = vadd.f32 %v2063, %v2287
      %v2289 = vpop.f32.mrb[0].mxu0
      %2290 = vmatprep.mubr.bf16.mxu0 0
      %2291 = vmatmul.mubr.bf16.gmra.mrb[0].mxu0 %v1663
      %v2292 = vpop.f32.mrb[0].mxu0
      %v2293 = vadd.f32 %v2068, %v2292
      %v2294 = vpop.f32.mrb[0].mxu0
      %v2295 = vpop.f32.mrb[0].mxu0
      %v2296 = vadd.f32 %v2071, %v2295
      %v2297 = vpop.f32.mrb[0].mxu0
      %2298 = vmatprep.mubr.bf16.mxu0 0
      %2299 = vmatmul.mubr.bf16.gmra.mrb[0].mxu0 %v1665
      %v2300 = vpop.f32.mrb[0].mxu0
      %v2301 = vadd.f32 %v2076, %v2300
      %v2302 = vpop.f32.mrb[0].mxu0
      %v2303 = vpop.f32.mrb[0].mxu0
      %v2304 = vadd.f32 %v2079, %v2303
      %v2305 = vpop.f32.mrb[0].mxu0
      %2306 = vmatprep.mubr.bf16.mxu0 0
      %2307 = vmatmul.mubr.bf16.gmra.mrb[0].mxu0 %v1667
      %v2308 = vpop.f32.mrb[0].mxu0
      %v2309 = vadd.f32 %v2084, %v2308
      %v2310 = vpop.f32.mrb[0].mxu0
      %v2311 = vpop.f32.mrb[0].mxu0
      %v2312 = vadd.f32 %v2087, %v2311
      %v2313 = vpop.f32.mrb[0].mxu0
      %2314 = vmatprep.mubr.bf16.mxu0 0
      %2315 = vmatmul.mubr.bf16.gmra.mrb[0].mxu0 %v1669
      %v2316 = vpop.f32.mrb[0].mxu0
      %v2317 = vadd.f32 %v2092, %v2316
      %v2318 = vpop.f32.mrb[0].mxu0
      %v2319 = vpop.f32.mrb[0].mxu0
      %v2320 = vadd.f32 %v2095, %v2319
      %v2321 = vpop.f32.mrb[0].mxu0
      %2322 = vmatprep.mubr.bf16.mxu0 0
      %2323 = vmatmul.mubr.bf16.gmra.mrb[0].mxu0 %v1671
      %v2324 = vpop.f32.mrb[0].mxu0
      %v2325 = vadd.f32 %v2100, %v2324
      %v2326 = vpop.f32.mrb[0].mxu0
      %v2327 = vpop.f32.mrb[0].mxu0
      %v2328 = vadd.f32 %v2103, %v2327
      %v2329 = vpop.f32.mrb[0].mxu0
      %2330 = vmatprep.mubr.bf16.mxu0 0
      %2331 = vmatmul.mubr.bf16.gmra.mrb[0].mxu0 %v1673
      %v2332 = vpop.f32.mrb[0].mxu0
      %v2333 = vadd.f32 %v2108, %v2332
      %v2334 = vpop.f32.mrb[0].mxu0
      %v2335 = vpop.f32.mrb[0].mxu0
      %v2336 = vadd.f32 %v2111, %v2335
      %v2337 = vpop.f32.mrb[0].mxu0
      %2338 = vmatprep.mubr.bf16.mxu0 0
      %2339 = vmatmul.mubr.bf16.gmra.mrb[0].mxu0 %v1675
      %v2340 = vpop.f32.mrb[0].mxu0
      %v2341 = vadd.f32 %v2116, %v2340
      %v2342 = vpop.f32.mrb[0].mxu0
      %v2343 = vpop.f32.mrb[0].mxu0
      %v2344 = vadd.f32 %v2119, %v2343
      %v2345 = vpop.f32.mrb[0].mxu0
      %2346 = vmatprep.mubr.bf16.mxu0 0
      %2347 = vmatmul.mubr.bf16.gmra.mrb[0].mxu0 %v1677
      %v2348 = vpop.f32.mrb[0].mxu0
      %v2349 = vadd.f32 %v2124, %v2348
      %v2350 = vpop.f32.mrb[0].mxu0
      %v2351 = vpop.f32.mrb[0].mxu0
      %v2352 = vadd.f32 %v2127, %v2351
      %v2353 = vpop.f32.mrb[0].mxu0
      %2354 = vmatprep.mubr.bf16.mxu0 0
      %2355 = vmatmul.mubr.bf16.gmra.mrb[0].mxu0 %v1679
      %v2356 = vpop.f32.mrb[0].mxu0
      %v2357 = vadd.f32 %v2132, %v2356
      %v2358 = vpop.f32.mrb[0].mxu0
      %v2359 = vpop.f32.mrb[0].mxu0
      %v2360 = vadd.f32 %v2135, %v2359
      %v2361 = vpop.f32.mrb[0].mxu0
      %2362 = vdwg.mxu0
      %v2363 = vadd.f32 %v1720, %v2173
      %v2364 = vadd.f32 %v1720, %v2176
      %v2365 = vadd.f32 %v1720, %v2181
      %v2366 = vadd.f32 %v1720, %v2184
      %v2367 = vadd.f32 %v1720, %v2189
      %v2368 = vadd.f32 %v1720, %v2192
      %v2369 = vadd.f32 %v1720, %v2197
      %v2370 = vadd.f32 %v1720, %v2200
      %v2371 = vadd.f32 %v1720, %v2205
      %v2372 = vadd.f32 %v1720, %v2208
      %v2373 = vadd.f32 %v1720, %v2213
      %v2374 = vadd.f32 %v1720, %v2216
      %v2375 = vadd.f32 %v1720, %v2221
      %v2376 = vadd.f32 %v1720, %v2224
      %v2377 = vadd.f32 %v1720, %v2229
      %v2378 = vadd.f32 %v1720, %v2232
      %v2379 = vadd.f32 %v1720, %v2237
      %v2380 = vadd.f32 %v1720, %v2240
      %v2381 = vadd.f32 %v1720, %v2245
      %v2382 = vadd.f32 %v1720, %v2248
      %v2383 = vadd.f32 %v1720, %v2253
      %v2384 = vadd.f32 %v1720, %v2256
      %v2385 = vadd.f32 %v1720, %v2261
      %v2386 = vadd.f32 %v1720, %v2264
      %v2387 = vadd.f32 %v1720, %v2269
      %v2388 = vadd.f32 %v1720, %v2272
      %v2389 = vadd.f32 %v1720, %v2277
      %v2390 = vadd.f32 %v1720, %v2280
      %v2391 = vadd.f32 %v1720, %v2285
      %v2392 = vadd.f32 %v1720, %v2288
      %v2393 = vadd.f32 %v1720, %v2293
      %v2394 = vadd.f32 %v1720, %v2296
      %v2395 = vadd.f32 %v1720, %v2301
      %v2396 = vadd.f32 %v1720, %v2304
      %v2397 = vadd.f32 %v1720, %v2309
      %v2398 = vadd.f32 %v1720, %v2312
      %v2399 = vadd.f32 %v1720, %v2317
      %v2400 = vadd.f32 %v1720, %v2320
      %v2401 = vadd.f32 %v1720, %v2325
      %v2402 = vadd.f32 %v1720, %v2328
      %v2403 = vadd.f32 %v1720, %v2333
      %v2404 = vadd.f32 %v1720, %v2336
      %v2405 = vadd.f32 %v1720, %v2341
      %v2406 = vadd.f32 %v1720, %v2344
      %v2407 = vadd.f32 %v1720, %v2349
      %v2408 = vadd.f32 %v1720, %v2352
      %v2409 = vadd.f32 %v1720, %v2357
      %v2410 = vadd.f32 %v1720, %v2360
      %s2411 = scalar_lea.vmem %s291, 192
      %v2412 = vld [vmem:[%s2411] sm:$0xf]
      %v2413 = vld [vmem:[%s2411 + $0x4] sm:$0xf]
      %v2414 = vld [vmem:[%s2411 + $0x8] sm:$0xf]
      %v2415 = vld [vmem:[%s2411 + $0xc] sm:$0xf]
      %v2416 = vld [vmem:[%s2411 + $0x10] sm:$0xf]
      %v2417 = vld [vmem:[%s2411 + $0x14] sm:$0xf]
      %v2418 = vld [vmem:[%s2411 + $0x18] sm:$0xf]
      %v2419 = vld [vmem:[%s2411 + $0x1c] sm:$0xf]
      %v2420 = vld [vmem:[%s2411 + $0x20] sm:$0xf]
      %v2421 = vld [vmem:[%s2411 + $0x24] sm:$0xf]
      %v2422 = vld [vmem:[%s2411 + $0x28] sm:$0xf]
      %v2423 = vld [vmem:[%s2411 + $0x2c] sm:$0xf]
      %v2424 = vld [vmem:[%s2411 + $0x30] sm:$0xf]
      %v2425 = vld [vmem:[%s2411 + $0x34] sm:$0xf]
      %v2426 = vld [vmem:[%s2411 + $0x38] sm:$0xf]
      %v2427 = vld [vmem:[%s2411 + $0x3c] sm:$0xf]
      %v2428 = vld [vmem:[%s2411 + $0x40] sm:$0xf]
      %v2429 = vld [vmem:[%s2411 + $0x44] sm:$0xf]
      %v2430 = vld [vmem:[%s2411 + $0x48] sm:$0xf]
      %v2431 = vld [vmem:[%s2411 + $0x4c] sm:$0xf]
      %v2432 = vld [vmem:[%s2411 + $0x50] sm:$0xf]
      %v2433 = vld [vmem:[%s2411 + $0x54] sm:$0xf]
      %v2434 = vld [vmem:[%s2411 + $0x58] sm:$0xf]
      %v2435 = vld [vmem:[%s2411 + $0x5c] sm:$0xf]
      %v2436 = vld [vmem:[%s2411 + $0x60] sm:$0xf]
      %v2437 = vld [vmem:[%s2411 + $0x64] sm:$0xf]
      %v2438 = vld [vmem:[%s2411 + $0x68] sm:$0xf]
      %v2439 = vld [vmem:[%s2411 + $0x6c] sm:$0xf]
      %v2440 = vld [vmem:[%s2411 + $0x70] sm:$0xf]
      %v2441 = vld [vmem:[%s2411 + $0x74] sm:$0xf]
      %v2442 = vld [vmem:[%s2411 + $0x78] sm:$0xf]
      %v2443 = vld [vmem:[%s2411 + $0x7c] sm:$0xf]
      %v2444 = vld [vmem:[%s2411 + $0x80] sm:$0xf]
      %v2445 = vld [vmem:[%s2411 + $0x84] sm:$0xf]
      %v2446 = vld [vmem:[%s2411 + $0x88] sm:$0xf]
      %v2447 = vld [vmem:[%s2411 + $0x8c] sm:$0xf]
      %v2448 = vld [vmem:[%s2411 + $0x90] sm:$0xf]
      %v2449 = vld [vmem:[%s2411 + $0x94] sm:$0xf]
      %v2450 = vld [vmem:[%s2411 + $0x98] sm:$0xf]
      %v2451 = vld [vmem:[%s2411 + $0x9c] sm:$0xf]
      %v2452 = vld [vmem:[%s2411 + $0xa0] sm:$0xf]
      %v2453 = vld [vmem:[%s2411 + $0xa4] sm:$0xf]
      %v2454 = vld [vmem:[%s2411 + $0xa8] sm:$0xf]
      %v2455 = vld [vmem:[%s2411 + $0xac] sm:$0xf]
      %v2456 = vld [vmem:[%s2411 + $0xb0] sm:$0xf]
      %v2457 = vld [vmem:[%s2411 + $0xb4] sm:$0xf]
      %v2458 = vld [vmem:[%s2411 + $0xb8] sm:$0xf]
      %v2459 = vld [vmem:[%s2411 + $0xbc] sm:$0xf]
      %vm2460 = vcmask 1043456
      %v2461 = vrot.slane %v1327, 4
      %v2462 = vrot.slane %v1328, 4
      %v2463 = vsel %vm2460, %v2461, %v2462
      %v2464 = vrot.slane %v1374, 4
      %v2465 = vrot.slane %v1382, 4
      %v2466 = vsel %vm2460, %v2464, %v2465
      %v2467 = vrot.slane %v1635, 4
      %v2468 = vrot.slane %v1637, 4
      %v2469 = vsel %vm2460, %v2467, %v2468
      %v2470 = vrot.slane %v1329, 4
      %v2471 = vsel %vm2460, %v2462, %v2470
      %v2472 = vrot.slane %v1390, 4
      %v2473 = vsel %vm2460, %v2465, %v2472
      %v2474 = vrot.slane %v1639, 4
      %v2475 = vsel %vm2460, %v2468, %v2474
      %v2476 = vrot.slane %v1330, 4
      %v2477 = vsel %vm2460, %v2470, %v2476
      %v2478 = vrot.slane %v1398, 4
      %v2479 = vsel %vm2460, %v2472, %v2478
      %v2480 = vrot.slane %v1641, 4
      %v2481 = vsel %vm2460, %v2474, %v2480
      %v2482 = vrot.slane %v1331, 4
      %v2483 = vsel %vm2460, %v2476, %v2482
      %v2484 = vrot.slane %v1406, 4
      %v2485 = vsel %vm2460, %v2478, %v2484
      %v2486 = vrot.slane %v1643, 4
      %v2487 = vsel %vm2460, %v2480, %v2486
      %v2488 = vrot.slane %v1332, 4
      %v2489 = vsel %vm2460, %v2482, %v2488
      %v2490 = vrot.slane %v1414, 4
      %v2491 = vsel %vm2460, %v2484, %v2490
      %v2492 = vrot.slane %v1645, 4
      %v2493 = vsel %vm2460, %v2486, %v2492
      %v2494 = vrot.slane %v1333, 4
      %v2495 = vsel %vm2460, %v2488, %v2494
      %v2496 = vrot.slane %v1422, 4
      %v2497 = vsel %vm2460, %v2490, %v2496
      %v2498 = vrot.slane %v1647, 4
      %v2499 = vsel %vm2460, %v2492, %v2498
      %v2500 = vrot.slane %v1334, 4
      %v2501 = vsel %vm2460, %v2494, %v2500
      %v2502 = vrot.slane %v1430, 4
      %v2503 = vsel %vm2460, %v2496, %v2502
      %v2504 = vrot.slane %v1649, 4
      %v2505 = vsel %vm2460, %v2498, %v2504
      %v2506 = vrot.slane %v1335, 4
      %v2507 = vsel %vm2460, %v2500, %v2506
      %v2508 = vrot.slane %v1438, 4
      %v2509 = vsel %vm2460, %v2502, %v2508
      %v2510 = vrot.slane %v1651, 4
      %v2511 = vsel %vm2460, %v2504, %v2510
      %v2512 = vrot.slane %v1336, 4
      %v2513 = vsel %vm2460, %v2506, %v2512
      %v2514 = vrot.slane %v1446, 4
      %v2515 = vsel %vm2460, %v2508, %v2514
      %v2516 = vrot.slane %v1653, 4
      %v2517 = vsel %vm2460, %v2510, %v2516
      %v2518 = vrot.slane %v1337, 4
      %v2519 = vsel %vm2460, %v2512, %v2518
      %v2520 = vrot.slane %v1454, 4
      %v2521 = vsel %vm2460, %v2514, %v2520
      %v2522 = vrot.slane %v1655, 4
      %v2523 = vsel %vm2460, %v2516, %v2522
      %v2524 = vrot.slane %v1338, 4
      %v2525 = vsel %vm2460, %v2518, %v2524
      %v2526 = vrot.slane %v1462, 4
      %v2527 = vsel %vm2460, %v2520, %v2526
      %v2528 = vrot.slane %v1657, 4
      %v2529 = vsel %vm2460, %v2522, %v2528
      %v2530 = vrot.slane %v1339, 4
      %v2531 = vsel %vm2460, %v2524, %v2530
      %v2532 = vrot.slane %v1470, 4
      %v2533 = vsel %vm2460, %v2526, %v2532
      %v2534 = vrot.slane %v1659, 4
      %v2535 = vsel %vm2460, %v2528, %v2534
      %v2536 = vrot.slane %v1340, 4
      %v2537 = vsel %vm2460, %v2530, %v2536
      %v2538 = vrot.slane %v1478, 4
      %v2539 = vsel %vm2460, %v2532, %v2538
      %v2540 = vrot.slane %v1661, 4
      %v2541 = vsel %vm2460, %v2534, %v2540
      %v2542 = vrot.slane %v1341, 4
      %v2543 = vsel %vm2460, %v2536, %v2542
      %v2544 = vrot.slane %v1486, 4
      %v2545 = vsel %vm2460, %v2538, %v2544
      %v2546 = vrot.slane %v1663, 4
      %v2547 = vsel %vm2460, %v2540, %v2546
      %v2548 = vrot.slane %v1342, 4
      %v2549 = vsel %vm2460, %v2542, %v2548
      %v2550 = vrot.slane %v1494, 4
      %v2551 = vsel %vm2460, %v2544, %v2550
      %v2552 = vrot.slane %v1665, 4
      %v2553 = vsel %vm2460, %v2546, %v2552
      %v2554 = vrot.slane %v1343, 4
      %v2555 = vsel %vm2460, %v2548, %v2554
      %v2556 = vrot.slane %v1502, 4
      %v2557 = vsel %vm2460, %v2550, %v2556
      %v2558 = vrot.slane %v1667, 4
      %v2559 = vsel %vm2460, %v2552, %v2558
      %v2560 = vrot.slane %v1344, 4
      %v2561 = vsel %vm2460, %v2554, %v2560
      %v2562 = vrot.slane %v1510, 4
      %v2563 = vsel %vm2460, %v2556, %v2562
      %v2564 = vrot.slane %v1669, 4
      %v2565 = vsel %vm2460, %v2558, %v2564
      %v2566 = vrot.slane %v1345, 4
      %v2567 = vsel %vm2460, %v2560, %v2566
      %v2568 = vrot.slane %v1518, 4
      %v2569 = vsel %vm2460, %v2562, %v2568
      %v2570 = vrot.slane %v1671, 4
      %v2571 = vsel %vm2460, %v2564, %v2570
      %v2572 = vrot.slane %v1346, 4
      %v2573 = vsel %vm2460, %v2566, %v2572
      %v2574 = vrot.slane %v1526, 4
      %v2575 = vsel %vm2460, %v2568, %v2574
      %v2576 = vrot.slane %v1673, 4
      %v2577 = vsel %vm2460, %v2570, %v2576
      %v2578 = vrot.slane %v1347, 4
      %v2579 = vsel %vm2460, %v2572, %v2578
      %v2580 = vrot.slane %v1534, 4
      %v2581 = vsel %vm2460, %v2574, %v2580
      %v2582 = vrot.slane %v1675, 4
      %v2583 = vsel %vm2460, %v2576, %v2582
      %v2584 = vrot.slane %v1348, 4
      %v2585 = vsel %vm2460, %v2578, %v2584
      %v2586 = vrot.slane %v1542, 4
      %v2587 = vsel %vm2460, %v2580, %v2586
      %v2588 = vrot.slane %v1677, 4
      %v2589 = vsel %vm2460, %v2582, %v2588
      %v2590 = vrot.slane %v1349, 4
      %v2591 = vsel %vm2460, %v2584, %v2590
      %v2592 = vrot.slane %v1550, 4
      %v2593 = vsel %vm2460, %v2586, %v2592
      %v2594 = vrot.slane %v1679, 4
      %v2595 = vsel %vm2460, %v2588, %v2594
      %v2596 = vrot.slane %v1350, 4
      %v2597 = vsel %vm2460, %v2590, %v2596
      %v2598 = vrot.slane %v1558, 4
      %v2599 = vsel %vm2460, %v2592, %v2598
      %v2600 = vrot.slane %v1681, 4
      %v2601 = vsel %vm2460, %v2594, %v2600
      %v2602 = vrot.slane %v1351, 4
      %v2603 = vsel %vm2460, %v2596, %v2602
      %v2604 = vrot.slane %v1566, 4
      %v2605 = vsel %vm2460, %v2598, %v2604
      %v2606 = vrot.slane %v1683, 4
      %v2607 = vsel %vm2460, %v2600, %v2606
      %v2728 = vunpack.c.l.b16 %v2412
      %v2729 = vunpack.c.l.b16 %v2413
      %v2730 = vunpack.c.l.b16 %v2414
      %v2731 = vunpack.c.l.b16 %v2415
      %v2732 = vunpack.c.l.b16 %v2416
      %v2733 = vunpack.c.l.b16 %v2417
      %v2734 = vunpack.c.l.b16 %v2418
      %v2735 = vunpack.c.l.b16 %v2419
      %v2736 = vunpack.c.l.b16 %v2420
      %v2737 = vunpack.c.l.b16 %v2421
      %v2738 = vunpack.c.l.b16 %v2422
      %v2739 = vunpack.c.l.b16 %v2423
      %v2740 = vunpack.c.l.b16 %v2424
      %v2741 = vunpack.c.l.b16 %v2425
      %v2742 = vunpack.c.l.b16 %v2426
      %v2743 = vunpack.c.l.b16 %v2427
      %v2744 = vunpack.c.l.b16 %v2428
      %v2745 = vunpack.c.l.b16 %v2429
      %v2746 = vunpack.c.l.b16 %v2430
      %v2747 = vunpack.c.l.b16 %v2431
      %v2748 = vunpack.c.l.b16 %v2432
      %v2749 = vunpack.c.l.b16 %v2433
      %v2750 = vunpack.c.l.b16 %v2434
      %v2751 = vunpack.c.l.b16 %v2435
      %v2752 = vunpack.c.l.b16 %v2436
      %v2753 = vunpack.c.l.b16 %v2437
      %v2754 = vunpack.c.l.b16 %v2438
      %v2755 = vunpack.c.l.b16 %v2439
      %v2756 = vunpack.c.l.b16 %v2440
      %v2757 = vunpack.c.l.b16 %v2441
      %v2758 = vunpack.c.l.b16 %v2442
      %v2759 = vunpack.c.l.b16 %v2443
      %v2760 = vunpack.c.l.b16 %v2444
      %v2761 = vunpack.c.l.b16 %v2445
      %v2762 = vunpack.c.l.b16 %v2446
      %v2763 = vunpack.c.l.b16 %v2447
      %v2764 = vunpack.c.l.b16 %v2448
      %v2765 = vunpack.c.l.b16 %v2449
      %v2766 = vunpack.c.l.b16 %v2450
      %v2767 = vunpack.c.l.b16 %v2451
      %v2768 = vunpack.c.l.b16 %v2452
      %v2769 = vunpack.c.l.b16 %v2453
      %v2770 = vunpack.c.l.b16 %v2454
      %v2771 = vunpack.c.l.b16 %v2455
      %v2772 = vunpack.c.l.b16 %v2456
      %v2773 = vunpack.c.l.b16 %v2457
      %v2774 = vunpack.c.l.b16 %v2458
      %v2775 = vunpack.c.l.b16 %v2459
      %v2776 = vpack.c.b16 %v2729, %v2728
      %v2777 = vpack.c.b16 %v2731, %v2730
      %v2778 = vpack.c.b16 %v2733, %v2732
      %v2779 = vpack.c.b16 %v2735, %v2734
      %v2780 = vpack.c.b16 %v2737, %v2736
      %v2781 = vpack.c.b16 %v2739, %v2738
      %v2782 = vpack.c.b16 %v2741, %v2740
      %v2783 = vpack.c.b16 %v2743, %v2742
      %v2784 = vpack.c.b16 %v2745, %v2744
      %v2785 = vpack.c.b16 %v2747, %v2746
      %v2786 = vpack.c.b16 %v2749, %v2748
      %v2787 = vpack.c.b16 %v2751, %v2750
      %v2788 = vpack.c.b16 %v2753, %v2752
      %v2789 = vpack.c.b16 %v2755, %v2754
      %v2790 = vpack.c.b16 %v2757, %v2756
      %v2791 = vpack.c.b16 %v2759, %v2758
      %v2792 = vpack.c.b16 %v2761, %v2760
      %v2793 = vpack.c.b16 %v2763, %v2762
      %v2794 = vpack.c.b16 %v2765, %v2764
      %v2795 = vpack.c.b16 %v2767, %v2766
      %v2796 = vpack.c.b16 %v2769, %v2768
      %v2797 = vpack.c.b16 %v2771, %v2770
      %v2798 = vpack.c.b16 %v2773, %v2772
      %v2799 = vpack.c.b16 %v2775, %v2774
      %2824 = vmatprep.subr.bf16.mxu0 0
      %2825 = vmatpush1.bf16.msra.mxu0 %v2776
      %2826 = vmatprep.subr.bf16.mxu0 0
      %2827 = vmatpush1.bf16.msra.mxu0 %v2777
      %2828 = vmatprep.subr.bf16.mxu0 0
      %2829 = vmatpush1.bf16.msra.mxu0 %v2778
      %2830 = vmatprep.subr.bf16.mxu0 0
      %2831 = vmatpush1.bf16.msra.mxu0 %v2779
      %2832 = vmatprep.subr.bf16.mxu0 0
      %2833 = vmatpush1.bf16.msra.mxu0 %v2780
      %2834 = vmatprep.subr.bf16.mxu0 0
      %2835 = vmatpush1.bf16.msra.mxu0 %v2781
      %2836 = vmatprep.subr.bf16.mxu0 0
      %2837 = vmatpush1.bf16.msra.mxu0 %v2782
      %2838 = vmatprep.subr.bf16.mxu0 0
      %2839 = vmatpush1.bf16.msra.mxu0 %v2783
      %2840 = vmatprep.subr.bf16.mxu0 0
      %2841 = vmatpush1.bf16.msra.mxu0 %v2784
      %2842 = vmatprep.subr.bf16.mxu0 0
      %2843 = vmatpush1.bf16.msra.mxu0 %v2785
      %2844 = vmatprep.subr.bf16.mxu0 0
      %2845 = vmatpush1.bf16.msra.mxu0 %v2786
      %2846 = vmatprep.subr.bf16.mxu0 0
      %2847 = vmatpush1.bf16.msra.mxu0 %v2787
      %2848 = vmatprep.subr.bf16.mxu0 0
      %2849 = vmatpush1.bf16.msra.mxu0 %v2788
      %2850 = vmatprep.subr.bf16.mxu0 0
      %2851 = vmatpush1.bf16.msra.mxu0 %v2789
      %2852 = vmatprep.subr.bf16.mxu0 0
      %2853 = vmatpush1.bf16.msra.mxu0 %v2790
      %2854 = vmatprep.subr.bf16.mxu0 0
      %2855 = vmatpush1.bf16.msra.mxu0 %v2791
      %2856 = vmatprep.mubr.bf16.mxu0 %v2466
      %2857 = vmatmul.mubr.bf16.gmra.mrb[0].mxu0 %v2463
      %v2858 = vpop.f32.mrb[0].mxu0
      %v2859 = vadd.f32 0.0, %v2858
      %v2860 = vpop.f32.mrb[0].mxu0
      %v2861 = vpop.f32.mrb[0].mxu0
      %v2862 = vadd.f32 0.0, %v2861
      %v2863 = vpop.f32.mrb[0].mxu0
      %2864 = vmatprep.mubr.bf16.mxu0 %v2473
      %2865 = vmatmul.mubr.bf16.gmra.mrb[0].mxu0 %v2471
      %v2866 = vpop.f32.mrb[0].mxu0
      %v2867 = vadd.f32 0.0, %v2866
      %v2868 = vpop.f32.mrb[0].mxu0
      %v2869 = vpop.f32.mrb[0].mxu0
      %v2870 = vadd.f32 0.0, %v2869
      %v2871 = vpop.f32.mrb[0].mxu0
      %2872 = vmatprep.mubr.bf16.mxu0 %v2479
      %2873 = vmatmul.mubr.bf16.gmra.mrb[0].mxu0 %v2477
      %v2874 = vpop.f32.mrb[0].mxu0
      %v2875 = vadd.f32 0.0, %v2874
      %v2876 = vpop.f32.mrb[0].mxu0
      %v2877 = vpop.f32.mrb[0].mxu0
      %v2878 = vadd.f32 0.0, %v2877
      %v2879 = vpop.f32.mrb[0].mxu0
      %2880 = vmatprep.mubr.bf16.mxu0 %v2485
      %2881 = vmatmul.mubr.bf16.gmra.mrb[0].mxu0 %v2483
      %v2882 = vpop.f32.mrb[0].mxu0
      %v2883 = vadd.f32 0.0, %v2882
      %v2884 = vpop.f32.mrb[0].mxu0
      %v2885 = vpop.f32.mrb[0].mxu0
      %v2886 = vadd.f32 0.0, %v2885
      %v2887 = vpop.f32.mrb[0].mxu0
      %2888 = vmatprep.mubr.bf16.mxu0 %v2491
      %2889 = vmatmul.mubr.bf16.gmra.mrb[0].mxu0 %v2489
      %v2890 = vpop.f32.mrb[0].mxu0
      %v2891 = vadd.f32 0.0, %v2890
      %v2892 = vpop.f32.mrb[0].mxu0
      %v2893 = vpop.f32.mrb[0].mxu0
      %v2894 = vadd.f32 0.0, %v2893
      %v2895 = vpop.f32.mrb[0].mxu0
      %2896 = vmatprep.mubr.bf16.mxu0 %v2497
      %2897 = vmatmul.mubr.bf16.gmra.mrb[0].mxu0 %v2495
      %v2898 = vpop.f32.mrb[0].mxu0
      %v2899 = vadd.f32 0.0, %v2898
      %v2900 = vpop.f32.mrb[0].mxu0
      %v2901 = vpop.f32.mrb[0].mxu0
      %v2902 = vadd.f32 0.0, %v2901
      %v2903 = vpop.f32.mrb[0].mxu0
      %2904 = vmatprep.mubr.bf16.mxu0 %v2503
      %2905 = vmatmul.mubr.bf16.gmra.mrb[0].mxu0 %v2501
      %v2906 = vpop.f32.mrb[0].mxu0
      %v2907 = vadd.f32 0.0, %v2906
      %v2908 = vpop.f32.mrb[0].mxu0
      %v2909 = vpop.f32.mrb[0].mxu0
      %v2910 = vadd.f32 0.0, %v2909
      %v2911 = vpop.f32.mrb[0].mxu0
      %2912 = vmatprep.mubr.bf16.mxu0 %v2509
      %2913 = vmatmul.mubr.bf16.gmra.mrb[0].mxu0 %v2507
      %v2914 = vpop.f32.mrb[0].mxu0
      %v2915 = vadd.f32 0.0, %v2914
      %v2916 = vpop.f32.mrb[0].mxu0
      %v2917 = vpop.f32.mrb[0].mxu0
      %v2918 = vadd.f32 0.0, %v2917
      %v2919 = vpop.f32.mrb[0].mxu0
      %2920 = vmatprep.mubr.bf16.mxu0 %v2515
      %2921 = vmatmul.mubr.bf16.gmra.mrb[0].mxu0 %v2513
      %v2922 = vpop.f32.mrb[0].mxu0
      %v2923 = vadd.f32 0.0, %v2922
      %v2924 = vpop.f32.mrb[0].mxu0
      %v2925 = vpop.f32.mrb[0].mxu0
      %v2926 = vadd.f32 0.0, %v2925
      %v2927 = vpop.f32.mrb[0].mxu0
      %2928 = vmatprep.mubr.bf16.mxu0 %v2521
      %2929 = vmatmul.mubr.bf16.gmra.mrb[0].mxu0 %v2519
      %v2930 = vpop.f32.mrb[0].mxu0
      %v2931 = vadd.f32 0.0, %v2930
      %v2932 = vpop.f32.mrb[0].mxu0
      %v2933 = vpop.f32.mrb[0].mxu0
      %v2934 = vadd.f32 0.0, %v2933
      %v2935 = vpop.f32.mrb[0].mxu0
      %2936 = vmatprep.mubr.bf16.mxu0 %v2527
      %2937 = vmatmul.mubr.bf16.gmra.mrb[0].mxu0 %v2525
      %v2938 = vpop.f32.mrb[0].mxu0
      %v2939 = vadd.f32 0.0, %v2938
      %v2940 = vpop.f32.mrb[0].mxu0
      %v2941 = vpop.f32.mrb[0].mxu0
      %v2942 = vadd.f32 0.0, %v2941
      %v2943 = vpop.f32.mrb[0].mxu0
      %2944 = vmatprep.mubr.bf16.mxu0 %v2533
      %2945 = vmatmul.mubr.bf16.gmra.mrb[0].mxu0 %v2531
      %v2946 = vpop.f32.mrb[0].mxu0
      %v2947 = vadd.f32 0.0, %v2946
      %v2948 = vpop.f32.mrb[0].mxu0
      %v2949 = vpop.f32.mrb[0].mxu0
      %v2950 = vadd.f32 0.0, %v2949
      %v2951 = vpop.f32.mrb[0].mxu0
      %2952 = vmatprep.mubr.bf16.mxu0 %v2539
      %2953 = vmatmul.mubr.bf16.gmra.mrb[0].mxu0 %v2537
      %v2954 = vpop.f32.mrb[0].mxu0
      %v2955 = vadd.f32 0.0, %v2954
      %v2956 = vpop.f32.mrb[0].mxu0
      %v2957 = vpop.f32.mrb[0].mxu0
      %v2958 = vadd.f32 0.0, %v2957
      %v2959 = vpop.f32.mrb[0].mxu0
      %2960 = vmatprep.mubr.bf16.mxu0 %v2545
      %2961 = vmatmul.mubr.bf16.gmra.mrb[0].mxu0 %v2543
      %v2962 = vpop.f32.mrb[0].mxu0
      %v2963 = vadd.f32 0.0, %v2962
      %v2964 = vpop.f32.mrb[0].mxu0
      %v2965 = vpop.f32.mrb[0].mxu0
      %v2966 = vadd.f32 0.0, %v2965
      %v2967 = vpop.f32.mrb[0].mxu0
      %2968 = vmatprep.mubr.bf16.mxu0 %v2551
      %2969 = vmatmul.mubr.bf16.gmra.mrb[0].mxu0 %v2549
      %v2970 = vpop.f32.mrb[0].mxu0
      %v2971 = vadd.f32 0.0, %v2970
      %v2972 = vpop.f32.mrb[0].mxu0
      %v2973 = vpop.f32.mrb[0].mxu0
      %v2974 = vadd.f32 0.0, %v2973
      %v2975 = vpop.f32.mrb[0].mxu0
      %2976 = vmatprep.mubr.bf16.mxu0 %v2557
      %2977 = vmatmul.mubr.bf16.gmra.mrb[0].mxu0 %v2555
      %v2978 = vpop.f32.mrb[0].mxu0
      %v2979 = vadd.f32 0.0, %v2978
      %v2980 = vpop.f32.mrb[0].mxu0
      %v2981 = vpop.f32.mrb[0].mxu0
      %v2982 = vadd.f32 0.0, %v2981
      %v2983 = vpop.f32.mrb[0].mxu0
      %2984 = vmatprep.mubr.bf16.mxu0 %v2563
      %2985 = vmatmul.mubr.bf16.gmra.mrb[0].mxu0 %v2561
      %v2986 = vpop.f32.mrb[0].mxu0
      %v2987 = vadd.f32 0.0, %v2986
      %v2988 = vpop.f32.mrb[0].mxu0
      %v2989 = vpop.f32.mrb[0].mxu0
      %v2990 = vadd.f32 0.0, %v2989
      %v2991 = vpop.f32.mrb[0].mxu0
      %2992 = vmatprep.mubr.bf16.mxu0 %v2569
      %2993 = vmatmul.mubr.bf16.gmra.mrb[0].mxu0 %v2567
      %v2994 = vpop.f32.mrb[0].mxu0
      %v2995 = vadd.f32 0.0, %v2994
      %v2996 = vpop.f32.mrb[0].mxu0
      %v2997 = vpop.f32.mrb[0].mxu0
      %v2998 = vadd.f32 0.0, %v2997
      %v2999 = vpop.f32.mrb[0].mxu0
      %3000 = vmatprep.mubr.bf16.mxu0 %v2575
      %3001 = vmatmul.mubr.bf16.gmra.mrb[0].mxu0 %v2573
      %v3002 = vpop.f32.mrb[0].mxu0
      %v3003 = vadd.f32 0.0, %v3002
      %v3004 = vpop.f32.mrb[0].mxu0
      %v3005 = vpop.f32.mrb[0].mxu0
      %v3006 = vadd.f32 0.0, %v3005
      %v3007 = vpop.f32.mrb[0].mxu0
      %3008 = vmatprep.mubr.bf16.mxu0 %v2581
      %3009 = vmatmul.mubr.bf16.gmra.mrb[0].mxu0 %v2579
      %v3010 = vpop.f32.mrb[0].mxu0
      %v3011 = vadd.f32 0.0, %v3010
      %v3012 = vpop.f32.mrb[0].mxu0
      %v3013 = vpop.f32.mrb[0].mxu0
      %v3014 = vadd.f32 0.0, %v3013
      %v3015 = vpop.f32.mrb[0].mxu0
      %3016 = vmatprep.mubr.bf16.mxu0 %v2587
      %3017 = vmatmul.mubr.bf16.gmra.mrb[0].mxu0 %v2585
      %v3018 = vpop.f32.mrb[0].mxu0
      %v3019 = vadd.f32 0.0, %v3018
      %v3020 = vpop.f32.mrb[0].mxu0
      %v3021 = vpop.f32.mrb[0].mxu0
      %v3022 = vadd.f32 0.0, %v3021
      %v3023 = vpop.f32.mrb[0].mxu0
      %3024 = vmatprep.mubr.bf16.mxu0 %v2593
      %3025 = vmatmul.mubr.bf16.gmra.mrb[0].mxu0 %v2591
      %v3026 = vpop.f32.mrb[0].mxu0
      %v3027 = vadd.f32 0.0, %v3026
      %v3028 = vpop.f32.mrb[0].mxu0
      %v3029 = vpop.f32.mrb[0].mxu0
      %v3030 = vadd.f32 0.0, %v3029
      %v3031 = vpop.f32.mrb[0].mxu0
      %3032 = vmatprep.mubr.bf16.mxu0 %v2599
      %3033 = vmatmul.mubr.bf16.gmra.mrb[0].mxu0 %v2597
      %v3034 = vpop.f32.mrb[0].mxu0
      %v3035 = vadd.f32 0.0, %v3034
      %v3036 = vpop.f32.mrb[0].mxu0
      %v3037 = vpop.f32.mrb[0].mxu0
      %v3038 = vadd.f32 0.0, %v3037
      %v3039 = vpop.f32.mrb[0].mxu0
      %3040 = vmatprep.mubr.bf16.mxu0 %v2605
      %3041 = vmatmul.mubr.bf16.gmra.mrb[0].mxu0 %v2603
      %v3042 = vpop.f32.mrb[0].mxu0
      %v3043 = vadd.f32 0.0, %v3042
      %v3044 = vpop.f32.mrb[0].mxu0
      %v3045 = vpop.f32.mrb[0].mxu0
      %v3046 = vadd.f32 0.0, %v3045
      %v3047 = vpop.f32.mrb[0].mxu0
      %3048 = vdwg.mxu0
      %3049 = vmatprep.subr.bf16.mxu0 0
      %3050 = vmatpush1.bf16.msra.mxu0 %v2792
      %3051 = vmatprep.subr.bf16.mxu0 0
      %3052 = vmatpush1.bf16.msra.mxu0 %v2793
      %3053 = vmatprep.subr.bf16.mxu0 0
      %3054 = vmatpush1.bf16.msra.mxu0 %v2794
      %3055 = vmatprep.subr.bf16.mxu0 0
      %3056 = vmatpush1.bf16.msra.mxu0 %v2795
      %3057 = vmatprep.subr.bf16.mxu0 0
      %3058 = vmatpush1.bf16.msra.mxu0 %v2796
      %3059 = vmatprep.subr.bf16.mxu0 0
      %3060 = vmatpush1.bf16.msra.mxu0 %v2797
      %3061 = vmatprep.subr.bf16.mxu0 0
      %3062 = vmatpush1.bf16.msra.mxu0 %v2798
      %3063 = vmatprep.subr.bf16.mxu0 0
      %3064 = vmatpush1.bf16.msra.mxu0 %v2799
      %3065 = vmatprep.subr.bf16.mxu0 0
      %3066 = vmatpush1.bf16.msra.mxu0 0
      %3067 = vmatprep.subr.bf16.mxu0 0
      %3068 = vmatpush1.bf16.msra.mxu0 0
      %3069 = vmatprep.subr.bf16.mxu0 0
      %3070 = vmatpush1.bf16.msra.mxu0 0
      %3071 = vmatprep.subr.bf16.mxu0 0
      %3072 = vmatpush1.bf16.msra.mxu0 0
      %3073 = vmatprep.subr.bf16.mxu0 0
      %3074 = vmatpush1.bf16.msra.mxu0 0
      %3075 = vmatprep.subr.bf16.mxu0 0
      %3076 = vmatpush1.bf16.msra.mxu0 0
      %3077 = vmatprep.subr.bf16.mxu0 0
      %3078 = vmatpush1.bf16.msra.mxu0 0
      %3079 = vmatprep.subr.bf16.mxu0 0
      %3080 = vmatpush1.bf16.msra.mxu0 0
      %3081 = vmatprep.mubr.bf16.mxu0 0
      %3082 = vmatmul.mubr.bf16.gmra.mrb[0].mxu0 %v2469
      %v3083 = vpop.f32.mrb[0].mxu0
      %v3084 = vadd.f32 %v2859, %v3083
      %v3085 = vpop.f32.mrb[0].mxu0
      %v3086 = vpop.f32.mrb[0].mxu0
      %v3087 = vadd.f32 %v2862, %v3086
      %v3088 = vpop.f32.mrb[0].mxu0
      %3089 = vmatprep.mubr.bf16.mxu0 0
      %3090 = vmatmul.mubr.bf16.gmra.mrb[0].mxu0 %v2475
      %v3091 = vpop.f32.mrb[0].mxu0
      %v3092 = vadd.f32 %v2867, %v3091
      %v3093 = vpop.f32.mrb[0].mxu0
      %v3094 = vpop.f32.mrb[0].mxu0
      %v3095 = vadd.f32 %v2870, %v3094
      %v3096 = vpop.f32.mrb[0].mxu0
      %3097 = vmatprep.mubr.bf16.mxu0 0
      %3098 = vmatmul.mubr.bf16.gmra.mrb[0].mxu0 %v2481
      %v3099 = vpop.f32.mrb[0].mxu0
      %v3100 = vadd.f32 %v2875, %v3099
      %v3101 = vpop.f32.mrb[0].mxu0
      %v3102 = vpop.f32.mrb[0].mxu0
      %v3103 = vadd.f32 %v2878, %v3102
      %v3104 = vpop.f32.mrb[0].mxu0
      %3105 = vmatprep.mubr.bf16.mxu0 0
      %3106 = vmatmul.mubr.bf16.gmra.mrb[0].mxu0 %v2487
      %v3107 = vpop.f32.mrb[0].mxu0
      %v3108 = vadd.f32 %v2883, %v3107
      %v3109 = vpop.f32.mrb[0].mxu0
      %v3110 = vpop.f32.mrb[0].mxu0
      %v3111 = vadd.f32 %v2886, %v3110
      %v3112 = vpop.f32.mrb[0].mxu0
      %3113 = vmatprep.mubr.bf16.mxu0 0
      %3114 = vmatmul.mubr.bf16.gmra.mrb[0].mxu0 %v2493
      %v3115 = vpop.f32.mrb[0].mxu0
      %v3116 = vadd.f32 %v2891, %v3115
      %v3117 = vpop.f32.mrb[0].mxu0
      %v3118 = vpop.f32.mrb[0].mxu0
      %v3119 = vadd.f32 %v2894, %v3118
      %v3120 = vpop.f32.mrb[0].mxu0
      %3121 = vmatprep.mubr.bf16.mxu0 0
      %3122 = vmatmul.mubr.bf16.gmra.mrb[0].mxu0 %v2499
      %v3123 = vpop.f32.mrb[0].mxu0
      %v3124 = vadd.f32 %v2899, %v3123
      %v3125 = vpop.f32.mrb[0].mxu0
      %v3126 = vpop.f32.mrb[0].mxu0
      %v3127 = vadd.f32 %v2902, %v3126
      %v3128 = vpop.f32.mrb[0].mxu0
      %3129 = vmatprep.mubr.bf16.mxu0 0
      %3130 = vmatmul.mubr.bf16.gmra.mrb[0].mxu0 %v2505
      %v3131 = vpop.f32.mrb[0].mxu0
      %v3132 = vadd.f32 %v2907, %v3131
      %v3133 = vpop.f32.mrb[0].mxu0
      %v3134 = vpop.f32.mrb[0].mxu0
      %v3135 = vadd.f32 %v2910, %v3134
      %v3136 = vpop.f32.mrb[0].mxu0
      %3137 = vmatprep.mubr.bf16.mxu0 0
      %3138 = vmatmul.mubr.bf16.gmra.mrb[0].mxu0 %v2511
      %v3139 = vpop.f32.mrb[0].mxu0
      %v3140 = vadd.f32 %v2915, %v3139
      %v3141 = vpop.f32.mrb[0].mxu0
      %v3142 = vpop.f32.mrb[0].mxu0
      %v3143 = vadd.f32 %v2918, %v3142
      %v3144 = vpop.f32.mrb[0].mxu0
      %3145 = vmatprep.mubr.bf16.mxu0 0
      %3146 = vmatmul.mubr.bf16.gmra.mrb[0].mxu0 %v2517
      %v3147 = vpop.f32.mrb[0].mxu0
      %v3148 = vadd.f32 %v2923, %v3147
      %v3149 = vpop.f32.mrb[0].mxu0
      %v3150 = vpop.f32.mrb[0].mxu0
      %v3151 = vadd.f32 %v2926, %v3150
      %v3152 = vpop.f32.mrb[0].mxu0
      %3153 = vmatprep.mubr.bf16.mxu0 0
      %3154 = vmatmul.mubr.bf16.gmra.mrb[0].mxu0 %v2523
      %v3155 = vpop.f32.mrb[0].mxu0
      %v3156 = vadd.f32 %v2931, %v3155
      %v3157 = vpop.f32.mrb[0].mxu0
      %v3158 = vpop.f32.mrb[0].mxu0
      %v3159 = vadd.f32 %v2934, %v3158
      %v3160 = vpop.f32.mrb[0].mxu0
      %3161 = vmatprep.mubr.bf16.mxu0 0
      %3162 = vmatmul.mubr.bf16.gmra.mrb[0].mxu0 %v2529
      %v3163 = vpop.f32.mrb[0].mxu0
      %v3164 = vadd.f32 %v2939, %v3163
      %v3165 = vpop.f32.mrb[0].mxu0
      %v3166 = vpop.f32.mrb[0].mxu0
      %v3167 = vadd.f32 %v2942, %v3166
      %v3168 = vpop.f32.mrb[0].mxu0
      %3169 = vmatprep.mubr.bf16.mxu0 0
      %3170 = vmatmul.mubr.bf16.gmra.mrb[0].mxu0 %v2535
      %v3171 = vpop.f32.mrb[0].mxu0
      %v3172 = vadd.f32 %v2947, %v3171
      %v3173 = vpop.f32.mrb[0].mxu0
      %v3174 = vpop.f32.mrb[0].mxu0
      %v3175 = vadd.f32 %v2950, %v3174
      %v3176 = vpop.f32.mrb[0].mxu0
      %3177 = vmatprep.mubr.bf16.mxu0 0
      %3178 = vmatmul.mubr.bf16.gmra.mrb[0].mxu0 %v2541
      %v3179 = vpop.f32.mrb[0].mxu0
      %v3180 = vadd.f32 %v2955, %v3179
      %v3181 = vpop.f32.mrb[0].mxu0
      %v3182 = vpop.f32.mrb[0].mxu0
      %v3183 = vadd.f32 %v2958, %v3182
      %v3184 = vpop.f32.mrb[0].mxu0
      %3185 = vmatprep.mubr.bf16.mxu0 0
      %3186 = vmatmul.mubr.bf16.gmra.mrb[0].mxu0 %v2547
      %v3187 = vpop.f32.mrb[0].mxu0
      %v3188 = vadd.f32 %v2963, %v3187
      %v3189 = vpop.f32.mrb[0].mxu0
      %v3190 = vpop.f32.mrb[0].mxu0
      %v3191 = vadd.f32 %v2966, %v3190
      %v3192 = vpop.f32.mrb[0].mxu0
      %3193 = vmatprep.mubr.bf16.mxu0 0
      %3194 = vmatmul.mubr.bf16.gmra.mrb[0].mxu0 %v2553
      %v3195 = vpop.f32.mrb[0].mxu0
      %v3196 = vadd.f32 %v2971, %v3195
      %v3197 = vpop.f32.mrb[0].mxu0
      %v3198 = vpop.f32.mrb[0].mxu0
      %v3199 = vadd.f32 %v2974, %v3198
      %v3200 = vpop.f32.mrb[0].mxu0
      %3201 = vmatprep.mubr.bf16.mxu0 0
      %3202 = vmatmul.mubr.bf16.gmra.mrb[0].mxu0 %v2559
      %v3203 = vpop.f32.mrb[0].mxu0
      %v3204 = vadd.f32 %v2979, %v3203
      %v3205 = vpop.f32.mrb[0].mxu0
      %v3206 = vpop.f32.mrb[0].mxu0
      %v3207 = vadd.f32 %v2982, %v3206
      %v3208 = vpop.f32.mrb[0].mxu0
      %3209 = vmatprep.mubr.bf16.mxu0 0
      %3210 = vmatmul.mubr.bf16.gmra.mrb[0].mxu0 %v2565
      %v3211 = vpop.f32.mrb[0].mxu0
      %v3212 = vadd.f32 %v2987, %v3211
      %v3213 = vpop.f32.mrb[0].mxu0
      %v3214 = vpop.f32.mrb[0].mxu0
      %v3215 = vadd.f32 %v2990, %v3214
      %v3216 = vpop.f32.mrb[0].mxu0
      %3217 = vmatprep.mubr.bf16.mxu0 0
      %3218 = vmatmul.mubr.bf16.gmra.mrb[0].mxu0 %v2571
      %v3219 = vpop.f32.mrb[0].mxu0
      %v3220 = vadd.f32 %v2995, %v3219
      %v3221 = vpop.f32.mrb[0].mxu0
      %v3222 = vpop.f32.mrb[0].mxu0
      %v3223 = vadd.f32 %v2998, %v3222
      %v3224 = vpop.f32.mrb[0].mxu0
      %3225 = vmatprep.mubr.bf16.mxu0 0
      %3226 = vmatmul.mubr.bf16.gmra.mrb[0].mxu0 %v2577
      %v3227 = vpop.f32.mrb[0].mxu0
      %v3228 = vadd.f32 %v3003, %v3227
      %v3229 = vpop.f32.mrb[0].mxu0
      %v3230 = vpop.f32.mrb[0].mxu0
      %v3231 = vadd.f32 %v3006, %v3230
      %v3232 = vpop.f32.mrb[0].mxu0
      %3233 = vmatprep.mubr.bf16.mxu0 0
      %3234 = vmatmul.mubr.bf16.gmra.mrb[0].mxu0 %v2583
      %v3235 = vpop.f32.mrb[0].mxu0
      %v3236 = vadd.f32 %v3011, %v3235
      %v3237 = vpop.f32.mrb[0].mxu0
      %v3238 = vpop.f32.mrb[0].mxu0
      %v3239 = vadd.f32 %v3014, %v3238
      %v3240 = vpop.f32.mrb[0].mxu0
      %3241 = vmatprep.mubr.bf16.mxu0 0
      %3242 = vmatmul.mubr.bf16.gmra.mrb[0].mxu0 %v2589
      %v3243 = vpop.f32.mrb[0].mxu0
      %v3244 = vadd.f32 %v3019, %v3243
      %v3245 = vpop.f32.mrb[0].mxu0
      %v3246 = vpop.f32.mrb[0].mxu0
      %v3247 = vadd.f32 %v3022, %v3246
      %v3248 = vpop.f32.mrb[0].mxu0
      %3249 = vmatprep.mubr.bf16.mxu0 0
      %3250 = vmatmul.mubr.bf16.gmra.mrb[0].mxu0 %v2595
      %v3251 = vpop.f32.mrb[0].mxu0
      %v3252 = vadd.f32 %v3027, %v3251
      %v3253 = vpop.f32.mrb[0].mxu0
      %v3254 = vpop.f32.mrb[0].mxu0
      %v3255 = vadd.f32 %v3030, %v3254
      %v3256 = vpop.f32.mrb[0].mxu0
      %3257 = vmatprep.mubr.bf16.mxu0 0
      %3258 = vmatmul.mubr.bf16.gmra.mrb[0].mxu0 %v2601
      %v3259 = vpop.f32.mrb[0].mxu0
      %v3260 = vadd.f32 %v3035, %v3259
      %v3261 = vpop.f32.mrb[0].mxu0
      %v3262 = vpop.f32.mrb[0].mxu0
      %v3263 = vadd.f32 %v3038, %v3262
      %v3264 = vpop.f32.mrb[0].mxu0
      %3265 = vmatprep.mubr.bf16.mxu0 0
      %3266 = vmatmul.mubr.bf16.gmra.mrb[0].mxu0 %v2607
      %v3267 = vpop.f32.mrb[0].mxu0
      %v3268 = vadd.f32 %v3043, %v3267
      %v3269 = vpop.f32.mrb[0].mxu0
      %v3270 = vpop.f32.mrb[0].mxu0
      %v3271 = vadd.f32 %v3046, %v3270
      %v3272 = vpop.f32.mrb[0].mxu0
      %3273 = vdwg.mxu0
      %v3274 = vadd.f32 %v2363, %v3084
      %v3275 = vadd.f32 %v2364, %v3087
      %v3276 = vadd.f32 %v2365, %v3092
      %v3277 = vadd.f32 %v2366, %v3095
      %v3278 = vadd.f32 %v2367, %v3100
      %v3279 = vadd.f32 %v2368, %v3103
      %v3280 = vadd.f32 %v2369, %v3108
      %v3281 = vadd.f32 %v2370, %v3111
      %v3282 = vadd.f32 %v2371, %v3116
      %v3283 = vadd.f32 %v2372, %v3119
      %v3284 = vadd.f32 %v2373, %v3124
      %v3285 = vadd.f32 %v2374, %v3127
      %v3286 = vadd.f32 %v2375, %v3132
      %v3287 = vadd.f32 %v2376, %v3135
      %v3288 = vadd.f32 %v2377, %v3140
      %v3289 = vadd.f32 %v2378, %v3143
      %v3290 = vadd.f32 %v2379, %v3148
      %v3291 = vadd.f32 %v2380, %v3151
      %v3292 = vadd.f32 %v2381, %v3156
      %v3293 = vadd.f32 %v2382, %v3159
      %v3294 = vadd.f32 %v2383, %v3164
      %v3295 = vadd.f32 %v2384, %v3167
      %v3296 = vadd.f32 %v2385, %v3172
      %v3297 = vadd.f32 %v2386, %v3175
      %v3298 = vadd.f32 %v2387, %v3180
      %v3299 = vadd.f32 %v2388, %v3183
      %v3300 = vadd.f32 %v2389, %v3188
      %v3301 = vadd.f32 %v2390, %v3191
      %v3302 = vadd.f32 %v2391, %v3196
      %v3303 = vadd.f32 %v2392, %v3199
      %v3304 = vadd.f32 %v2393, %v3204
      %v3305 = vadd.f32 %v2394, %v3207
      %v3306 = vadd.f32 %v2395, %v3212
      %v3307 = vadd.f32 %v2396, %v3215
      %v3308 = vadd.f32 %v2397, %v3220
      %v3309 = vadd.f32 %v2398, %v3223
      %v3310 = vadd.f32 %v2399, %v3228
      %v3311 = vadd.f32 %v2400, %v3231
      %v3312 = vadd.f32 %v2401, %v3236
      %v3313 = vadd.f32 %v2402, %v3239
      %v3314 = vadd.f32 %v2403, %v3244
      %v3315 = vadd.f32 %v2404, %v3247
      %v3316 = vadd.f32 %v2405, %v3252
      %v3317 = vadd.f32 %v2406, %v3255
      %v3318 = vadd.f32 %v2407, %v3260
      %v3319 = vadd.f32 %v2408, %v3263
      %v3320 = vadd.f32 %v2409, %v3268
      %v3321 = vadd.f32 %v2410, %v3271
      %s3322 = scalar_lea.vmem %s291, 384
      %v3323 = vld [vmem:[%s3322] sm:$0xf]
      %v3324 = vld [vmem:[%s3322 + $0x4] sm:$0xf]
      %v3325 = vld [vmem:[%s3322 + $0x8] sm:$0xf]
      %v3326 = vld [vmem:[%s3322 + $0xc] sm:$0xf]
      %v3327 = vld [vmem:[%s3322 + $0x10] sm:$0xf]
      %v3328 = vld [vmem:[%s3322 + $0x14] sm:$0xf]
      %v3329 = vld [vmem:[%s3322 + $0x18] sm:$0xf]
      %v3330 = vld [vmem:[%s3322 + $0x1c] sm:$0xf]
      %v3331 = vld [vmem:[%s3322 + $0x20] sm:$0xf]
      %v3332 = vld [vmem:[%s3322 + $0x24] sm:$0xf]
      %v3333 = vld [vmem:[%s3322 + $0x28] sm:$0xf]
      %v3334 = vld [vmem:[%s3322 + $0x2c] sm:$0xf]
      %v3335 = vld [vmem:[%s3322 + $0x30] sm:$0xf]
      %v3336 = vld [vmem:[%s3322 + $0x34] sm:$0xf]
      %v3337 = vld [vmem:[%s3322 + $0x38] sm:$0xf]
      %v3338 = vld [vmem:[%s3322 + $0x3c] sm:$0xf]
      %v3339 = vld [vmem:[%s3322 + $0x40] sm:$0xf]
      %v3340 = vld [vmem:[%s3322 + $0x44] sm:$0xf]
      %v3341 = vld [vmem:[%s3322 + $0x48] sm:$0xf]
      %v3342 = vld [vmem:[%s3322 + $0x4c] sm:$0xf]
      %v3343 = vld [vmem:[%s3322 + $0x50] sm:$0xf]
      %v3344 = vld [vmem:[%s3322 + $0x54] sm:$0xf]
      %v3345 = vld [vmem:[%s3322 + $0x58] sm:$0xf]
      %v3346 = vld [vmem:[%s3322 + $0x5c] sm:$0xf]
      %v3347 = vld [vmem:[%s3322 + $0x60] sm:$0xf]
      %v3348 = vld [vmem:[%s3322 + $0x64] sm:$0xf]
      %v3349 = vld [vmem:[%s3322 + $0x68] sm:$0xf]
      %v3350 = vld [vmem:[%s3322 + $0x6c] sm:$0xf]
      %v3351 = vld [vmem:[%s3322 + $0x70] sm:$0xf]
      %v3352 = vld [vmem:[%s3322 + $0x74] sm:$0xf]
      %v3353 = vld [vmem:[%s3322 + $0x78] sm:$0xf]
      %v3354 = vld [vmem:[%s3322 + $0x7c] sm:$0xf]
      %v3355 = vld [vmem:[%s3322 + $0x80] sm:$0xf]
      %v3356 = vld [vmem:[%s3322 + $0x84] sm:$0xf]
      %v3357 = vld [vmem:[%s3322 + $0x88] sm:$0xf]
      %v3358 = vld [vmem:[%s3322 + $0x8c] sm:$0xf]
      %v3359 = vld [vmem:[%s3322 + $0x90] sm:$0xf]
      %v3360 = vld [vmem:[%s3322 + $0x94] sm:$0xf]
      %v3361 = vld [vmem:[%s3322 + $0x98] sm:$0xf]
      %v3362 = vld [vmem:[%s3322 + $0x9c] sm:$0xf]
      %v3363 = vld [vmem:[%s3322 + $0xa0] sm:$0xf]
      %v3364 = vld [vmem:[%s3322 + $0xa4] sm:$0xf]
      %v3365 = vld [vmem:[%s3322 + $0xa8] sm:$0xf]
      %v3366 = vld [vmem:[%s3322 + $0xac] sm:$0xf]
      %v3367 = vld [vmem:[%s3322 + $0xb0] sm:$0xf]
      %v3368 = vld [vmem:[%s3322 + $0xb4] sm:$0xf]
      %v3369 = vld [vmem:[%s3322 + $0xb8] sm:$0xf]
      %v3370 = vld [vmem:[%s3322 + $0xbc] sm:$0xf]
      %v3419 = vunpack.c.l.b16 %v3323
      %v3420 = vunpack.c.l.b16 %v3324
      %v3421 = vunpack.c.l.b16 %v3325
      %v3422 = vunpack.c.l.b16 %v3326
      %v3423 = vunpack.c.l.b16 %v3327
      %v3424 = vunpack.c.l.b16 %v3328
      %v3425 = vunpack.c.l.b16 %v3329
      %v3426 = vunpack.c.l.b16 %v3330
      %v3427 = vunpack.c.l.b16 %v3331
      %v3428 = vunpack.c.l.b16 %v3332
      %v3429 = vunpack.c.l.b16 %v3333
      %v3430 = vunpack.c.l.b16 %v3334
      %v3431 = vunpack.c.l.b16 %v3335
      %v3432 = vunpack.c.l.b16 %v3336
      %v3433 = vunpack.c.l.b16 %v3337
      %v3434 = vunpack.c.l.b16 %v3338
      %v3435 = vunpack.c.l.b16 %v3339
      %v3436 = vunpack.c.l.b16 %v3340
      %v3437 = vunpack.c.l.b16 %v3341
      %v3438 = vunpack.c.l.b16 %v3342
      %v3439 = vunpack.c.l.b16 %v3343
      %v3440 = vunpack.c.l.b16 %v3344
      %v3441 = vunpack.c.l.b16 %v3345
      %v3442 = vunpack.c.l.b16 %v3346
      %v3443 = vunpack.c.l.b16 %v3347
      %v3444 = vunpack.c.l.b16 %v3348
      %v3445 = vunpack.c.l.b16 %v3349
      %v3446 = vunpack.c.l.b16 %v3350
      %v3447 = vunpack.c.l.b16 %v3351
      %v3448 = vunpack.c.l.b16 %v3352
      %v3449 = vunpack.c.l.b16 %v3353
      %v3450 = vunpack.c.l.b16 %v3354
      %v3451 = vunpack.c.l.b16 %v3355
      %v3452 = vunpack.c.l.b16 %v3356
      %v3453 = vunpack.c.l.b16 %v3357
      %v3454 = vunpack.c.l.b16 %v3358
      %v3455 = vunpack.c.l.b16 %v3359
      %v3456 = vunpack.c.l.b16 %v3360
      %v3457 = vunpack.c.l.b16 %v3361
      %v3458 = vunpack.c.l.b16 %v3362
      %v3459 = vunpack.c.l.b16 %v3363
      %v3460 = vunpack.c.l.b16 %v3364
      %v3461 = vunpack.c.l.b16 %v3365
      %v3462 = vunpack.c.l.b16 %v3366
      %v3463 = vunpack.c.l.b16 %v3367
      %v3464 = vunpack.c.l.b16 %v3368
      %v3465 = vunpack.c.l.b16 %v3369
      %v3466 = vunpack.c.l.b16 %v3370
      %v3467 = vpack.c.b16 %v3420, %v3419
      %v3468 = vpack.c.b16 %v3422, %v3421
      %v3469 = vpack.c.b16 %v3424, %v3423
      %v3470 = vpack.c.b16 %v3426, %v3425
      %v3471 = vpack.c.b16 %v3428, %v3427
      %v3472 = vpack.c.b16 %v3430, %v3429
      %v3473 = vpack.c.b16 %v3432, %v3431
      %v3474 = vpack.c.b16 %v3434, %v3433
      %v3475 = vpack.c.b16 %v3436, %v3435
      %v3476 = vpack.c.b16 %v3438, %v3437
      %v3477 = vpack.c.b16 %v3440, %v3439
      %v3478 = vpack.c.b16 %v3442, %v3441
      %v3479 = vpack.c.b16 %v3444, %v3443
      %v3480 = vpack.c.b16 %v3446, %v3445
      %v3481 = vpack.c.b16 %v3448, %v3447
      %v3482 = vpack.c.b16 %v3450, %v3449
      %v3483 = vpack.c.b16 %v3452, %v3451
      %v3484 = vpack.c.b16 %v3454, %v3453
      %v3485 = vpack.c.b16 %v3456, %v3455
      %v3486 = vpack.c.b16 %v3458, %v3457
      %v3487 = vpack.c.b16 %v3460, %v3459
      %v3488 = vpack.c.b16 %v3462, %v3461
      %v3489 = vpack.c.b16 %v3464, %v3463
      %v3490 = vpack.c.b16 %v3466, %v3465
      %3515 = vmatprep.subr.bf16.mxu0 0
      %3516 = vmatpush1.bf16.msra.mxu0 %v3467
      %3517 = vmatprep.subr.bf16.mxu0 0
      %3518 = vmatpush1.bf16.msra.mxu0 %v3468
      %3519 = vmatprep.subr.bf16.mxu0 0
      %3520 = vmatpush1.bf16.msra.mxu0 %v3469
      %3521 = vmatprep.subr.bf16.mxu0 0
      %3522 = vmatpush1.bf16.msra.mxu0 %v3470
      %3523 = vmatprep.subr.bf16.mxu0 0
      %3524 = vmatpush1.bf16.msra.mxu0 %v3471
      %3525 = vmatprep.subr.bf16.mxu0 0
      %3526 = vmatpush1.bf16.msra.mxu0 %v3472
      %3527 = vmatprep.subr.bf16.mxu0 0
      %3528 = vmatpush1.bf16.msra.mxu0 %v3473
      %3529 = vmatprep.subr.bf16.mxu0 0
      %3530 = vmatpush1.bf16.msra.mxu0 %v3474
      %3531 = vmatprep.subr.bf16.mxu0 0
      %3532 = vmatpush1.bf16.msra.mxu0 %v3475
      %3533 = vmatprep.subr.bf16.mxu0 0
      %3534 = vmatpush1.bf16.msra.mxu0 %v3476
      %3535 = vmatprep.subr.bf16.mxu0 0
      %3536 = vmatpush1.bf16.msra.mxu0 %v3477
      %3537 = vmatprep.subr.bf16.mxu0 0
      %3538 = vmatpush1.bf16.msra.mxu0 %v3478
      %3539 = vmatprep.subr.bf16.mxu0 0
      %3540 = vmatpush1.bf16.msra.mxu0 %v3479
      %3541 = vmatprep.subr.bf16.mxu0 0
      %3542 = vmatpush1.bf16.msra.mxu0 %v3480
      %3543 = vmatprep.subr.bf16.mxu0 0
      %3544 = vmatpush1.bf16.msra.mxu0 %v3481
      %3545 = vmatprep.subr.bf16.mxu0 0
      %3546 = vmatpush1.bf16.msra.mxu0 %v3482
      %3547 = vmatprep.mubr.bf16.mxu0 %v1390
      %3548 = vmatmul.mubr.bf16.gmra.mrb[0].mxu0 %v1329
      %v3549 = vpop.f32.mrb[0].mxu0
      %v3550 = vadd.f32 0.0, %v3549
      %v3551 = vpop.f32.mrb[0].mxu0
      %v3552 = vpop.f32.mrb[0].mxu0
      %v3553 = vadd.f32 0.0, %v3552
      %v3554 = vpop.f32.mrb[0].mxu0
      %3555 = vmatprep.mubr.bf16.mxu0 %v1398
      %3556 = vmatmul.mubr.bf16.gmra.mrb[0].mxu0 %v1330
      %v3557 = vpop.f32.mrb[0].mxu0
      %v3558 = vadd.f32 0.0, %v3557
      %v3559 = vpop.f32.mrb[0].mxu0
      %v3560 = vpop.f32.mrb[0].mxu0
      %v3561 = vadd.f32 0.0, %v3560
      %v3562 = vpop.f32.mrb[0].mxu0
      %3563 = vmatprep.mubr.bf16.mxu0 %v1406
      %3564 = vmatmul.mubr.bf16.gmra.mrb[0].mxu0 %v1331
      %v3565 = vpop.f32.mrb[0].mxu0
      %v3566 = vadd.f32 0.0, %v3565
      %v3567 = vpop.f32.mrb[0].mxu0
      %v3568 = vpop.f32.mrb[0].mxu0
      %v3569 = vadd.f32 0.0, %v3568
      %v3570 = vpop.f32.mrb[0].mxu0
      %3571 = vmatprep.mubr.bf16.mxu0 %v1414
      %3572 = vmatmul.mubr.bf16.gmra.mrb[0].mxu0 %v1332
      %v3573 = vpop.f32.mrb[0].mxu0
      %v3574 = vadd.f32 0.0, %v3573
      %v3575 = vpop.f32.mrb[0].mxu0
      %v3576 = vpop.f32.mrb[0].mxu0
      %v3577 = vadd.f32 0.0, %v3576
      %v3578 = vpop.f32.mrb[0].mxu0
      %3579 = vmatprep.mubr.bf16.mxu0 %v1422
      %3580 = vmatmul.mubr.bf16.gmra.mrb[0].mxu0 %v1333
      %v3581 = vpop.f32.mrb[0].mxu0
      %v3582 = vadd.f32 0.0, %v3581
      %v3583 = vpop.f32.mrb[0].mxu0
      %v3584 = vpop.f32.mrb[0].mxu0
      %v3585 = vadd.f32 0.0, %v3584
      %v3586 = vpop.f32.mrb[0].mxu0
      %3587 = vmatprep.mubr.bf16.mxu0 %v1430
      %3588 = vmatmul.mubr.bf16.gmra.mrb[0].mxu0 %v1334
      %v3589 = vpop.f32.mrb[0].mxu0
      %v3590 = vadd.f32 0.0, %v3589
      %v3591 = vpop.f32.mrb[0].mxu0
      %v3592 = vpop.f32.mrb[0].mxu0
      %v3593 = vadd.f32 0.0, %v3592
      %v3594 = vpop.f32.mrb[0].mxu0
      %3595 = vmatprep.mubr.bf16.mxu0 %v1438
      %3596 = vmatmul.mubr.bf16.gmra.mrb[0].mxu0 %v1335
      %v3597 = vpop.f32.mrb[0].mxu0
      %v3598 = vadd.f32 0.0, %v3597
      %v3599 = vpop.f32.mrb[0].mxu0
      %v3600 = vpop.f32.mrb[0].mxu0
      %v3601 = vadd.f32 0.0, %v3600
      %v3602 = vpop.f32.mrb[0].mxu0
      %3603 = vmatprep.mubr.bf16.mxu0 %v1446
      %3604 = vmatmul.mubr.bf16.gmra.mrb[0].mxu0 %v1336
      %v3605 = vpop.f32.mrb[0].mxu0
      %v3606 = vadd.f32 0.0, %v3605
      %v3607 = vpop.f32.mrb[0].mxu0
      %v3608 = vpop.f32.mrb[0].mxu0
      %v3609 = vadd.f32 0.0, %v3608
      %v3610 = vpop.f32.mrb[0].mxu0
      %3611 = vmatprep.mubr.bf16.mxu0 %v1454
      %3612 = vmatmul.mubr.bf16.gmra.mrb[0].mxu0 %v1337
      %v3613 = vpop.f32.mrb[0].mxu0
      %v3614 = vadd.f32 0.0, %v3613
      %v3615 = vpop.f32.mrb[0].mxu0
      %v3616 = vpop.f32.mrb[0].mxu0
      %v3617 = vadd.f32 0.0, %v3616
      %v3618 = vpop.f32.mrb[0].mxu0
      %3619 = vmatprep.mubr.bf16.mxu0 %v1462
      %3620 = vmatmul.mubr.bf16.gmra.mrb[0].mxu0 %v1338
      %v3621 = vpop.f32.mrb[0].mxu0
      %v3622 = vadd.f32 0.0, %v3621
      %v3623 = vpop.f32.mrb[0].mxu0
      %v3624 = vpop.f32.mrb[0].mxu0
      %v3625 = vadd.f32 0.0, %v3624
      %v3626 = vpop.f32.mrb[0].mxu0
      %3627 = vmatprep.mubr.bf16.mxu0 %v1470
      %3628 = vmatmul.mubr.bf16.gmra.mrb[0].mxu0 %v1339
      %v3629 = vpop.f32.mrb[0].mxu0
      %v3630 = vadd.f32 0.0, %v3629
      %v3631 = vpop.f32.mrb[0].mxu0
      %v3632 = vpop.f32.mrb[0].mxu0
      %v3633 = vadd.f32 0.0, %v3632
      %v3634 = vpop.f32.mrb[0].mxu0
      %3635 = vmatprep.mubr.bf16.mxu0 %v1478
      %3636 = vmatmul.mubr.bf16.gmra.mrb[0].mxu0 %v1340
      %v3637 = vpop.f32.mrb[0].mxu0
      %v3638 = vadd.f32 0.0, %v3637
      %v3639 = vpop.f32.mrb[0].mxu0
      %v3640 = vpop.f32.mrb[0].mxu0
      %v3641 = vadd.f32 0.0, %v3640
      %v3642 = vpop.f32.mrb[0].mxu0
      %3643 = vmatprep.mubr.bf16.mxu0 %v1486
      %3644 = vmatmul.mubr.bf16.gmra.mrb[0].mxu0 %v1341
      %v3645 = vpop.f32.mrb[0].mxu0
      %v3646 = vadd.f32 0.0, %v3645
      %v3647 = vpop.f32.mrb[0].mxu0
      %v3648 = vpop.f32.mrb[0].mxu0
      %v3649 = vadd.f32 0.0, %v3648
      %v3650 = vpop.f32.mrb[0].mxu0
      %3651 = vmatprep.mubr.bf16.mxu0 %v1494
      %3652 = vmatmul.mubr.bf16.gmra.mrb[0].mxu0 %v1342
      %v3653 = vpop.f32.mrb[0].mxu0
      %v3654 = vadd.f32 0.0, %v3653
      %v3655 = vpop.f32.mrb[0].mxu0
      %v3656 = vpop.f32.mrb[0].mxu0
      %v3657 = vadd.f32 0.0, %v3656
      %v3658 = vpop.f32.mrb[0].mxu0
      %3659 = vmatprep.mubr.bf16.mxu0 %v1502
      %3660 = vmatmul.mubr.bf16.gmra.mrb[0].mxu0 %v1343
      %v3661 = vpop.f32.mrb[0].mxu0
      %v3662 = vadd.f32 0.0, %v3661
      %v3663 = vpop.f32.mrb[0].mxu0
      %v3664 = vpop.f32.mrb[0].mxu0
      %v3665 = vadd.f32 0.0, %v3664
      %v3666 = vpop.f32.mrb[0].mxu0
      %3667 = vmatprep.mubr.bf16.mxu0 %v1510
      %3668 = vmatmul.mubr.bf16.gmra.mrb[0].mxu0 %v1344
      %v3669 = vpop.f32.mrb[0].mxu0
      %v3670 = vadd.f32 0.0, %v3669
      %v3671 = vpop.f32.mrb[0].mxu0
      %v3672 = vpop.f32.mrb[0].mxu0
      %v3673 = vadd.f32 0.0, %v3672
      %v3674 = vpop.f32.mrb[0].mxu0
      %3675 = vmatprep.mubr.bf16.mxu0 %v1518
      %3676 = vmatmul.mubr.bf16.gmra.mrb[0].mxu0 %v1345
      %v3677 = vpop.f32.mrb[0].mxu0
      %v3678 = vadd.f32 0.0, %v3677
      %v3679 = vpop.f32.mrb[0].mxu0
      %v3680 = vpop.f32.mrb[0].mxu0
      %v3681 = vadd.f32 0.0, %v3680
      %v3682 = vpop.f32.mrb[0].mxu0
      %3683 = vmatprep.mubr.bf16.mxu0 %v1526
      %3684 = vmatmul.mubr.bf16.gmra.mrb[0].mxu0 %v1346
      %v3685 = vpop.f32.mrb[0].mxu0
      %v3686 = vadd.f32 0.0, %v3685
      %v3687 = vpop.f32.mrb[0].mxu0
      %v3688 = vpop.f32.mrb[0].mxu0
      %v3689 = vadd.f32 0.0, %v3688
      %v3690 = vpop.f32.mrb[0].mxu0
      %3691 = vmatprep.mubr.bf16.mxu0 %v1534
      %3692 = vmatmul.mubr.bf16.gmra.mrb[0].mxu0 %v1347
      %v3693 = vpop.f32.mrb[0].mxu0
      %v3694 = vadd.f32 0.0, %v3693
      %v3695 = vpop.f32.mrb[0].mxu0
      %v3696 = vpop.f32.mrb[0].mxu0
      %v3697 = vadd.f32 0.0, %v3696
      %v3698 = vpop.f32.mrb[0].mxu0
      %3699 = vmatprep.mubr.bf16.mxu0 %v1542
      %3700 = vmatmul.mubr.bf16.gmra.mrb[0].mxu0 %v1348
      %v3701 = vpop.f32.mrb[0].mxu0
      %v3702 = vadd.f32 0.0, %v3701
      %v3703 = vpop.f32.mrb[0].mxu0
      %v3704 = vpop.f32.mrb[0].mxu0
      %v3705 = vadd.f32 0.0, %v3704
      %v3706 = vpop.f32.mrb[0].mxu0
      %3707 = vmatprep.mubr.bf16.mxu0 %v1550
      %3708 = vmatmul.mubr.bf16.gmra.mrb[0].mxu0 %v1349
      %v3709 = vpop.f32.mrb[0].mxu0
      %v3710 = vadd.f32 0.0, %v3709
      %v3711 = vpop.f32.mrb[0].mxu0
      %v3712 = vpop.f32.mrb[0].mxu0
      %v3713 = vadd.f32 0.0, %v3712
      %v3714 = vpop.f32.mrb[0].mxu0
      %3715 = vmatprep.mubr.bf16.mxu0 %v1558
      %3716 = vmatmul.mubr.bf16.gmra.mrb[0].mxu0 %v1350
      %v3717 = vpop.f32.mrb[0].mxu0
      %v3718 = vadd.f32 0.0, %v3717
      %v3719 = vpop.f32.mrb[0].mxu0
      %v3720 = vpop.f32.mrb[0].mxu0
      %v3721 = vadd.f32 0.0, %v3720
      %v3722 = vpop.f32.mrb[0].mxu0
      %3723 = vmatprep.mubr.bf16.mxu0 %v1566
      %3724 = vmatmul.mubr.bf16.gmra.mrb[0].mxu0 %v1351
      %v3725 = vpop.f32.mrb[0].mxu0
      %v3726 = vadd.f32 0.0, %v3725
      %v3727 = vpop.f32.mrb[0].mxu0
      %v3728 = vpop.f32.mrb[0].mxu0
      %v3729 = vadd.f32 0.0, %v3728
      %v3730 = vpop.f32.mrb[0].mxu0
      %3731 = vmatprep.mubr.bf16.mxu0 %v1574
      %3732 = vmatmul.mubr.bf16.gmra.mrb[0].mxu0 %v1352
      %v3733 = vpop.f32.mrb[0].mxu0
      %v3734 = vadd.f32 0.0, %v3733
      %v3735 = vpop.f32.mrb[0].mxu0
      %v3736 = vpop.f32.mrb[0].mxu0
      %v3737 = vadd.f32 0.0, %v3736
      %v3738 = vpop.f32.mrb[0].mxu0
      %3739 = vdwg.mxu0
      %3740 = vmatprep.subr.bf16.mxu0 0
      %3741 = vmatpush1.bf16.msra.mxu0 %v3483
      %3742 = vmatprep.subr.bf16.mxu0 0
      %3743 = vmatpush1.bf16.msra.mxu0 %v3484
      %3744 = vmatprep.subr.bf16.mxu0 0
      %3745 = vmatpush1.bf16.msra.mxu0 %v3485
      %3746 = vmatprep.subr.bf16.mxu0 0
      %3747 = vmatpush1.bf16.msra.mxu0 %v3486
      %3748 = vmatprep.subr.bf16.mxu0 0
      %3749 = vmatpush1.bf16.msra.mxu0 %v3487
      %3750 = vmatprep.subr.bf16.mxu0 0
      %3751 = vmatpush1.bf16.msra.mxu0 %v3488
      %3752 = vmatprep.subr.bf16.mxu0 0
      %3753 = vmatpush1.bf16.msra.mxu0 %v3489
      %3754 = vmatprep.subr.bf16.mxu0 0
      %3755 = vmatpush1.bf16.msra.mxu0 %v3490
      %3756 = vmatprep.subr.bf16.mxu0 0
      %3757 = vmatpush1.bf16.msra.mxu0 0
      %3758 = vmatprep.subr.bf16.mxu0 0
      %3759 = vmatpush1.bf16.msra.mxu0 0
      %3760 = vmatprep.subr.bf16.mxu0 0
      %3761 = vmatpush1.bf16.msra.mxu0 0
      %3762 = vmatprep.subr.bf16.mxu0 0
      %3763 = vmatpush1.bf16.msra.mxu0 0
      %3764 = vmatprep.subr.bf16.mxu0 0
      %3765 = vmatpush1.bf16.msra.mxu0 0
      %3766 = vmatprep.subr.bf16.mxu0 0
      %3767 = vmatpush1.bf16.msra.mxu0 0
      %3768 = vmatprep.subr.bf16.mxu0 0
      %3769 = vmatpush1.bf16.msra.mxu0 0
      %3770 = vmatprep.subr.bf16.mxu0 0
      %3771 = vmatpush1.bf16.msra.mxu0 0
      %3772 = vmatprep.mubr.bf16.mxu0 0
      %3773 = vmatmul.mubr.bf16.gmra.mrb[0].mxu0 %v1639
      %v3774 = vpop.f32.mrb[0].mxu0
      %v3775 = vadd.f32 %v3550, %v3774
      %v3776 = vpop.f32.mrb[0].mxu0
      %v3777 = vpop.f32.mrb[0].mxu0
      %v3778 = vadd.f32 %v3553, %v3777
      %v3779 = vpop.f32.mrb[0].mxu0
      %3780 = vmatprep.mubr.bf16.mxu0 0
      %3781 = vmatmul.mubr.bf16.gmra.mrb[0].mxu0 %v1641
      %v3782 = vpop.f32.mrb[0].mxu0
      %v3783 = vadd.f32 %v3558, %v3782
      %v3784 = vpop.f32.mrb[0].mxu0
      %v3785 = vpop.f32.mrb[0].mxu0
      %v3786 = vadd.f32 %v3561, %v3785
      %v3787 = vpop.f32.mrb[0].mxu0
      %3788 = vmatprep.mubr.bf16.mxu0 0
      %3789 = vmatmul.mubr.bf16.gmra.mrb[0].mxu0 %v1643
      %v3790 = vpop.f32.mrb[0].mxu0
      %v3791 = vadd.f32 %v3566, %v3790
      %v3792 = vpop.f32.mrb[0].mxu0
      %v3793 = vpop.f32.mrb[0].mxu0
      %v3794 = vadd.f32 %v3569, %v3793
      %v3795 = vpop.f32.mrb[0].mxu0
      %3796 = vmatprep.mubr.bf16.mxu0 0
      %3797 = vmatmul.mubr.bf16.gmra.mrb[0].mxu0 %v1645
      %v3798 = vpop.f32.mrb[0].mxu0
      %v3799 = vadd.f32 %v3574, %v3798
      %v3800 = vpop.f32.mrb[0].mxu0
      %v3801 = vpop.f32.mrb[0].mxu0
      %v3802 = vadd.f32 %v3577, %v3801
      %v3803 = vpop.f32.mrb[0].mxu0
      %3804 = vmatprep.mubr.bf16.mxu0 0
      %3805 = vmatmul.mubr.bf16.gmra.mrb[0].mxu0 %v1647
      %v3806 = vpop.f32.mrb[0].mxu0
      %v3807 = vadd.f32 %v3582, %v3806
      %v3808 = vpop.f32.mrb[0].mxu0
      %v3809 = vpop.f32.mrb[0].mxu0
      %v3810 = vadd.f32 %v3585, %v3809
      %v3811 = vpop.f32.mrb[0].mxu0
      %3812 = vmatprep.mubr.bf16.mxu0 0
      %3813 = vmatmul.mubr.bf16.gmra.mrb[0].mxu0 %v1649
      %v3814 = vpop.f32.mrb[0].mxu0
      %v3815 = vadd.f32 %v3590, %v3814
      %v3816 = vpop.f32.mrb[0].mxu0
      %v3817 = vpop.f32.mrb[0].mxu0
      %v3818 = vadd.f32 %v3593, %v3817
      %v3819 = vpop.f32.mrb[0].mxu0
      %3820 = vmatprep.mubr.bf16.mxu0 0
      %3821 = vmatmul.mubr.bf16.gmra.mrb[0].mxu0 %v1651
      %v3822 = vpop.f32.mrb[0].mxu0
      %v3823 = vadd.f32 %v3598, %v3822
      %v3824 = vpop.f32.mrb[0].mxu0
      %v3825 = vpop.f32.mrb[0].mxu0
      %v3826 = vadd.f32 %v3601, %v3825
      %v3827 = vpop.f32.mrb[0].mxu0
      %3828 = vmatprep.mubr.bf16.mxu0 0
      %3829 = vmatmul.mubr.bf16.gmra.mrb[0].mxu0 %v1653
      %v3830 = vpop.f32.mrb[0].mxu0
      %v3831 = vadd.f32 %v3606, %v3830
      %v3832 = vpop.f32.mrb[0].mxu0
      %v3833 = vpop.f32.mrb[0].mxu0
      %v3834 = vadd.f32 %v3609, %v3833
      %v3835 = vpop.f32.mrb[0].mxu0
      %3836 = vmatprep.mubr.bf16.mxu0 0
      %3837 = vmatmul.mubr.bf16.gmra.mrb[0].mxu0 %v1655
      %v3838 = vpop.f32.mrb[0].mxu0
      %v3839 = vadd.f32 %v3614, %v3838
      %v3840 = vpop.f32.mrb[0].mxu0
      %v3841 = vpop.f32.mrb[0].mxu0
      %v3842 = vadd.f32 %v3617, %v3841
      %v3843 = vpop.f32.mrb[0].mxu0
      %3844 = vmatprep.mubr.bf16.mxu0 0
      %3845 = vmatmul.mubr.bf16.gmra.mrb[0].mxu0 %v1657
      %v3846 = vpop.f32.mrb[0].mxu0
      %v3847 = vadd.f32 %v3622, %v3846
      %v3848 = vpop.f32.mrb[0].mxu0
      %v3849 = vpop.f32.mrb[0].mxu0
      %v3850 = vadd.f32 %v3625, %v3849
      %v3851 = vpop.f32.mrb[0].mxu0
      %3852 = vmatprep.mubr.bf16.mxu0 0
      %3853 = vmatmul.mubr.bf16.gmra.mrb[0].mxu0 %v1659
      %v3854 = vpop.f32.mrb[0].mxu0
      %v3855 = vadd.f32 %v3630, %v3854
      %v3856 = vpop.f32.mrb[0].mxu0
      %v3857 = vpop.f32.mrb[0].mxu0
      %v3858 = vadd.f32 %v3633, %v3857
      %v3859 = vpop.f32.mrb[0].mxu0
      %3860 = vmatprep.mubr.bf16.mxu0 0
      %3861 = vmatmul.mubr.bf16.gmra.mrb[0].mxu0 %v1661
      %v3862 = vpop.f32.mrb[0].mxu0
      %v3863 = vadd.f32 %v3638, %v3862
      %v3864 = vpop.f32.mrb[0].mxu0
      %v3865 = vpop.f32.mrb[0].mxu0
      %v3866 = vadd.f32 %v3641, %v3865
      %v3867 = vpop.f32.mrb[0].mxu0
      %3868 = vmatprep.mubr.bf16.mxu0 0
      %3869 = vmatmul.mubr.bf16.gmra.mrb[0].mxu0 %v1663
      %v3870 = vpop.f32.mrb[0].mxu0
      %v3871 = vadd.f32 %v3646, %v3870
      %v3872 = vpop.f32.mrb[0].mxu0
      %v3873 = vpop.f32.mrb[0].mxu0
      %v3874 = vadd.f32 %v3649, %v3873
      %v3875 = vpop.f32.mrb[0].mxu0
      %3876 = vmatprep.mubr.bf16.mxu0 0
      %3877 = vmatmul.mubr.bf16.gmra.mrb[0].mxu0 %v1665
      %v3878 = vpop.f32.mrb[0].mxu0
      %v3879 = vadd.f32 %v3654, %v3878
      %v3880 = vpop.f32.mrb[0].mxu0
      %v3881 = vpop.f32.mrb[0].mxu0
      %v3882 = vadd.f32 %v3657, %v3881
      %v3883 = vpop.f32.mrb[0].mxu0
      %3884 = vmatprep.mubr.bf16.mxu0 0
      %3885 = vmatmul.mubr.bf16.gmra.mrb[0].mxu0 %v1667
      %v3886 = vpop.f32.mrb[0].mxu0
      %v3887 = vadd.f32 %v3662, %v3886
      %v3888 = vpop.f32.mrb[0].mxu0
      %v3889 = vpop.f32.mrb[0].mxu0
      %v3890 = vadd.f32 %v3665, %v3889
      %v3891 = vpop.f32.mrb[0].mxu0
      %3892 = vmatprep.mubr.bf16.mxu0 0
      %3893 = vmatmul.mubr.bf16.gmra.mrb[0].mxu0 %v1669
      %v3894 = vpop.f32.mrb[0].mxu0
      %v3895 = vadd.f32 %v3670, %v3894
      %v3896 = vpop.f32.mrb[0].mxu0
      %v3897 = vpop.f32.mrb[0].mxu0
      %v3898 = vadd.f32 %v3673, %v3897
      %v3899 = vpop.f32.mrb[0].mxu0
      %3900 = vmatprep.mubr.bf16.mxu0 0
      %3901 = vmatmul.mubr.bf16.gmra.mrb[0].mxu0 %v1671
      %v3902 = vpop.f32.mrb[0].mxu0
      %v3903 = vadd.f32 %v3678, %v3902
      %v3904 = vpop.f32.mrb[0].mxu0
      %v3905 = vpop.f32.mrb[0].mxu0
      %v3906 = vadd.f32 %v3681, %v3905
      %v3907 = vpop.f32.mrb[0].mxu0
      %3908 = vmatprep.mubr.bf16.mxu0 0
      %3909 = vmatmul.mubr.bf16.gmra.mrb[0].mxu0 %v1673
      %v3910 = vpop.f32.mrb[0].mxu0
      %v3911 = vadd.f32 %v3686, %v3910
      %v3912 = vpop.f32.mrb[0].mxu0
      %v3913 = vpop.f32.mrb[0].mxu0
      %v3914 = vadd.f32 %v3689, %v3913
      %v3915 = vpop.f32.mrb[0].mxu0
      %3916 = vmatprep.mubr.bf16.mxu0 0
      %3917 = vmatmul.mubr.bf16.gmra.mrb[0].mxu0 %v1675
      %v3918 = vpop.f32.mrb[0].mxu0
      %v3919 = vadd.f32 %v3694, %v3918
      %v3920 = vpop.f32.mrb[0].mxu0
      %v3921 = vpop.f32.mrb[0].mxu0
      %v3922 = vadd.f32 %v3697, %v3921
      %v3923 = vpop.f32.mrb[0].mxu0
      %3924 = vmatprep.mubr.bf16.mxu0 0
      %3925 = vmatmul.mubr.bf16.gmra.mrb[0].mxu0 %v1677
      %v3926 = vpop.f32.mrb[0].mxu0
      %v3927 = vadd.f32 %v3702, %v3926
      %v3928 = vpop.f32.mrb[0].mxu0
      %v3929 = vpop.f32.mrb[0].mxu0
      %v3930 = vadd.f32 %v3705, %v3929
      %v3931 = vpop.f32.mrb[0].mxu0
      %3932 = vmatprep.mubr.bf16.mxu0 0
      %3933 = vmatmul.mubr.bf16.gmra.mrb[0].mxu0 %v1679
      %v3934 = vpop.f32.mrb[0].mxu0
      %v3935 = vadd.f32 %v3710, %v3934
      %v3936 = vpop.f32.mrb[0].mxu0
      %v3937 = vpop.f32.mrb[0].mxu0
      %v3938 = vadd.f32 %v3713, %v3937
      %v3939 = vpop.f32.mrb[0].mxu0
      %3940 = vmatprep.mubr.bf16.mxu0 0
      %3941 = vmatmul.mubr.bf16.gmra.mrb[0].mxu0 %v1681
      %v3942 = vpop.f32.mrb[0].mxu0
      %v3943 = vadd.f32 %v3718, %v3942
      %v3944 = vpop.f32.mrb[0].mxu0
      %v3945 = vpop.f32.mrb[0].mxu0
      %v3946 = vadd.f32 %v3721, %v3945
      %v3947 = vpop.f32.mrb[0].mxu0
      %3948 = vmatprep.mubr.bf16.mxu0 0
      %3949 = vmatmul.mubr.bf16.gmra.mrb[0].mxu0 %v1683
      %v3950 = vpop.f32.mrb[0].mxu0
      %v3951 = vadd.f32 %v3726, %v3950
      %v3952 = vpop.f32.mrb[0].mxu0
      %v3953 = vpop.f32.mrb[0].mxu0
      %v3954 = vadd.f32 %v3729, %v3953
      %v3955 = vpop.f32.mrb[0].mxu0
      %3956 = vmatprep.mubr.bf16.mxu0 0
      %3957 = vmatmul.mubr.bf16.gmra.mrb[0].mxu0 %v1685
      %v3958 = vpop.f32.mrb[0].mxu0
      %v3959 = vadd.f32 %v3734, %v3958
      %v3960 = vpop.f32.mrb[0].mxu0
      %v3961 = vpop.f32.mrb[0].mxu0
      %v3962 = vadd.f32 %v3737, %v3961
      %v3963 = vpop.f32.mrb[0].mxu0
      %3964 = vdwg.mxu0
      %v3965 = vadd.f32 %v3274, %v3775
      %v3966 = vadd.f32 %v3275, %v3778
      %v3967 = vadd.f32 %v3276, %v3783
      %v3968 = vadd.f32 %v3277, %v3786
      %v3969 = vadd.f32 %v3278, %v3791
      %v3970 = vadd.f32 %v3279, %v3794
      %v3971 = vadd.f32 %v3280, %v3799
      %v3972 = vadd.f32 %v3281, %v3802
      %v3973 = vadd.f32 %v3282, %v3807
      %v3974 = vadd.f32 %v3283, %v3810
      %v3975 = vadd.f32 %v3284, %v3815
      %v3976 = vadd.f32 %v3285, %v3818
      %v3977 = vadd.f32 %v3286, %v3823
      %v3978 = vadd.f32 %v3287, %v3826
      %v3979 = vadd.f32 %v3288, %v3831
      %v3980 = vadd.f32 %v3289, %v3834
      %v3981 = vadd.f32 %v3290, %v3839
      %v3982 = vadd.f32 %v3291, %v3842
      %v3983 = vadd.f32 %v3292, %v3847
      %v3984 = vadd.f32 %v3293, %v3850
      %v3985 = vadd.f32 %v3294, %v3855
      %v3986 = vadd.f32 %v3295, %v3858
      %v3987 = vadd.f32 %v3296, %v3863
      %v3988 = vadd.f32 %v3297, %v3866
      %v3989 = vadd.f32 %v3298, %v3871
      %v3990 = vadd.f32 %v3299, %v3874
      %v3991 = vadd.f32 %v3300, %v3879
      %v3992 = vadd.f32 %v3301, %v3882
      %v3993 = vadd.f32 %v3302, %v3887
      %v3994 = vadd.f32 %v3303, %v3890
      %v3995 = vadd.f32 %v3304, %v3895
      %v3996 = vadd.f32 %v3305, %v3898
      %v3997 = vadd.f32 %v3306, %v3903
      %v3998 = vadd.f32 %v3307, %v3906
      %v3999 = vadd.f32 %v3308, %v3911
      %v4000 = vadd.f32 %v3309, %v3914
      %v4001 = vadd.f32 %v3310, %v3919
      %v4002 = vadd.f32 %v3311, %v3922
      %v4003 = vadd.f32 %v3312, %v3927
      %v4004 = vadd.f32 %v3313, %v3930
      %v4005 = vadd.f32 %v3314, %v3935
      %v4006 = vadd.f32 %v3315, %v3938
      %v4007 = vadd.f32 %v3316, %v3943
      %v4008 = vadd.f32 %v3317, %v3946
      %v4009 = vadd.f32 %v3318, %v3951
      %v4010 = vadd.f32 %v3319, %v3954
      %v4011 = vadd.f32 %v3320, %v3959
      %v4012 = vadd.f32 %v3321, %v3962
      %v4013 = vpack.c.bf16 %v3966, %v3965
      %v4014 = vpack.c.bf16 %v3968, %v3967
      %v4015 = vpack.c.bf16 %v3970, %v3969
      %v4016 = vpack.c.bf16 %v3972, %v3971
      %v4017 = vpack.c.bf16 %v3974, %v3973
      %v4018 = vpack.c.bf16 %v3976, %v3975
      %v4019 = vpack.c.bf16 %v3978, %v3977
      %v4020 = vpack.c.bf16 %v3980, %v3979
      %v4021 = vpack.c.bf16 %v3982, %v3981
      %v4022 = vpack.c.bf16 %v3984, %v3983
      %v4023 = vpack.c.bf16 %v3986, %v3985
      %v4024 = vpack.c.bf16 %v3988, %v3987
      %v4025 = vpack.c.bf16 %v3990, %v3989
      %v4026 = vpack.c.bf16 %v3992, %v3991
      %v4027 = vpack.c.bf16 %v3994, %v3993
      %v4028 = vpack.c.bf16 %v3996, %v3995
      %v4029 = vpack.c.bf16 %v3998, %v3997
      %v4030 = vpack.c.bf16 %v4000, %v3999
      %v4031 = vpack.c.bf16 %v4002, %v4001
      %v4032 = vpack.c.bf16 %v4004, %v4003
      %v4033 = vpack.c.bf16 %v4006, %v4005
      %v4034 = vpack.c.bf16 %v4008, %v4007
      %v4035 = vpack.c.bf16 %v4010, %v4009
      %v4036 = vpack.c.bf16 %v4012, %v4011
      %v4061 = vunpack.c.l.b16 %v4013
      %v4062 = vunpack.c.h.b16 %v4013
      %v4063 = vunpack.c.l.b16 %v4014
      %v4064 = vunpack.c.h.b16 %v4014
      %v4065 = vunpack.c.l.b16 %v4015
      %v4066 = vunpack.c.h.b16 %v4015
      %v4067 = vunpack.c.l.b16 %v4016
      %v4068 = vunpack.c.h.b16 %v4016
      %v4069 = vunpack.c.l.b16 %v4017
      %v4070 = vunpack.c.h.b16 %v4017
      %v4071 = vunpack.c.l.b16 %v4018
      %v4072 = vunpack.c.h.b16 %v4018
      %v4073 = vunpack.c.l.b16 %v4019
      %v4074 = vunpack.c.h.b16 %v4019
      %v4075 = vunpack.c.l.b16 %v4020
      %v4076 = vunpack.c.h.b16 %v4020
      %v4077 = vunpack.c.l.b16 %v4021
      %v4078 = vunpack.c.h.b16 %v4021
      %v4079 = vunpack.c.l.b16 %v4022
      %v4080 = vunpack.c.h.b16 %v4022
      %v4081 = vunpack.c.l.b16 %v4023
      %v4082 = vunpack.c.h.b16 %v4023
      %v4083 = vunpack.c.l.b16 %v4024
      %v4084 = vunpack.c.h.b16 %v4024
      %v4085 = vunpack.c.l.b16 %v4025
      %v4086 = vunpack.c.h.b16 %v4025
      %v4087 = vunpack.c.l.b16 %v4026
      %v4088 = vunpack.c.h.b16 %v4026
      %v4089 = vunpack.c.l.b16 %v4027
      %v4090 = vunpack.c.h.b16 %v4027
      %v4091 = vunpack.c.l.b16 %v4028
      %v4092 = vunpack.c.h.b16 %v4028
      %v4093 = vunpack.c.l.b16 %v4029
      %v4094 = vunpack.c.h.b16 %v4029
      %v4095 = vunpack.c.l.b16 %v4030
      %v4096 = vunpack.c.h.b16 %v4030
      %v4097 = vunpack.c.l.b16 %v4031
      %v4098 = vunpack.c.h.b16 %v4031
      %v4099 = vunpack.c.l.b16 %v4032
      %v4100 = vunpack.c.h.b16 %v4032
      %v4101 = vunpack.c.l.b16 %v4033
      %v4102 = vunpack.c.h.b16 %v4033
      %v4103 = vunpack.c.l.b16 %v4034
      %v4104 = vunpack.c.h.b16 %v4034
      %v4105 = vunpack.c.l.b16 %v4035
      %v4106 = vunpack.c.h.b16 %v4035
      %v4107 = vunpack.c.l.b16 %v4036
      %v4108 = vunpack.c.h.b16 %v4036
      %v4109 = vpack.c.b16 %v4061, %v4061
      %v4110 = vpack.c.b16 %v4062, %v4062
      %v4111 = vpack.c.b16 %v4063, %v4063
      %v4112 = vpack.c.b16 %v4064, %v4064
      %v4113 = vpack.c.b16 %v4065, %v4065
      %v4114 = vpack.c.b16 %v4066, %v4066
      %v4115 = vpack.c.b16 %v4067, %v4067
      %v4116 = vpack.c.b16 %v4068, %v4068
      %v4117 = vpack.c.b16 %v4069, %v4069
      %v4118 = vpack.c.b16 %v4070, %v4070
      %v4119 = vpack.c.b16 %v4071, %v4071
      %v4120 = vpack.c.b16 %v4072, %v4072
      %v4121 = vpack.c.b16 %v4073, %v4073
      %v4122 = vpack.c.b16 %v4074, %v4074
      %v4123 = vpack.c.b16 %v4075, %v4075
      %v4124 = vpack.c.b16 %v4076, %v4076
      %v4125 = vpack.c.b16 %v4077, %v4077
      %v4126 = vpack.c.b16 %v4078, %v4078
      %v4127 = vpack.c.b16 %v4079, %v4079
      %v4128 = vpack.c.b16 %v4080, %v4080
      %v4129 = vpack.c.b16 %v4081, %v4081
      %v4130 = vpack.c.b16 %v4082, %v4082
      %v4131 = vpack.c.b16 %v4083, %v4083
      %v4132 = vpack.c.b16 %v4084, %v4084
      %v4133 = vpack.c.b16 %v4085, %v4085
      %v4134 = vpack.c.b16 %v4086, %v4086
      %v4135 = vpack.c.b16 %v4087, %v4087
      %v4136 = vpack.c.b16 %v4088, %v4088
      %v4137 = vpack.c.b16 %v4089, %v4089
      %v4138 = vpack.c.b16 %v4090, %v4090
      %v4139 = vpack.c.b16 %v4091, %v4091
      %v4140 = vpack.c.b16 %v4092, %v4092
      %v4141 = vpack.c.b16 %v4093, %v4093
      %v4142 = vpack.c.b16 %v4094, %v4094
      %v4143 = vpack.c.b16 %v4095, %v4095
      %v4144 = vpack.c.b16 %v4096, %v4096
      %v4145 = vpack.c.b16 %v4097, %v4097
      %v4146 = vpack.c.b16 %v4098, %v4098
      %v4147 = vpack.c.b16 %v4099, %v4099
      %v4148 = vpack.c.b16 %v4100, %v4100
      %v4149 = vpack.c.b16 %v4101, %v4101
      %v4150 = vpack.c.b16 %v4102, %v4102
      %v4151 = vpack.c.b16 %v4103, %v4103
      %v4152 = vpack.c.b16 %v4104, %v4104
      %v4153 = vpack.c.b16 %v4105, %v4105
      %v4154 = vpack.c.b16 %v4106, %v4106
      %v4155 = vpack.c.b16 %v4107, %v4107
      %v4156 = vpack.c.b16 %v4108, %v4108
      %4205 = vst [vmem:[%s302] sm:$0xf] %v4109
      %4206 = vst [vmem:[%s302 + $0x4] sm:$0xf] %v4110
      %4207 = vst [vmem:[%s302 + $0x8] sm:$0xf] %v4111
      %4208 = vst [vmem:[%s302 + $0xc] sm:$0xf] %v4112
      %4209 = vst [vmem:[%s302 + $0x10] sm:$0xf] %v4113
      %4210 = vst [vmem:[%s302 + $0x14] sm:$0xf] %v4114
      %4211 = vst [vmem:[%s302 + $0x18] sm:$0xf] %v4115
      %4212 = vst [vmem:[%s302 + $0x1c] sm:$0xf] %v4116
      %4213 = vst [vmem:[%s302 + $0x20] sm:$0xf] %v4117
      %4214 = vst [vmem:[%s302 + $0x24] sm:$0xf] %v4118
      %4215 = vst [vmem:[%s302 + $0x28] sm:$0xf] %v4119
      %4216 = vst [vmem:[%s302 + $0x2c] sm:$0xf] %v4120
      %4217 = vst [vmem:[%s302 + $0x30] sm:$0xf] %v4121
      %4218 = vst [vmem:[%s302 + $0x34] sm:$0xf] %v4122
      %4219 = vst [vmem:[%s302 + $0x38] sm:$0xf] %v4123
      %4220 = vst [vmem:[%s302 + $0x3c] sm:$0xf] %v4124
      %4221 = vst [vmem:[%s302 + $0x40] sm:$0xf] %v4125
      %4222 = vst [vmem:[%s302 + $0x44] sm:$0xf] %v4126
      %4223 = vst [vmem:[%s302 + $0x48] sm:$0xf] %v4127
      %4224 = vst [vmem:[%s302 + $0x4c] sm:$0xf] %v4128
      %4225 = vst [vmem:[%s302 + $0x50] sm:$0xf] %v4129
      %4226 = vst [vmem:[%s302 + $0x54] sm:$0xf] %v4130
      %4227 = vst [vmem:[%s302 + $0x58] sm:$0xf] %v4131
      %4228 = vst [vmem:[%s302 + $0x5c] sm:$0xf] %v4132
      %4229 = vst [vmem:[%s302 + $0x60] sm:$0xf] %v4133
      %4230 = vst [vmem:[%s302 + $0x64] sm:$0xf] %v4134
      %4231 = vst [vmem:[%s302 + $0x68] sm:$0xf] %v4135
      %4232 = vst [vmem:[%s302 + $0x6c] sm:$0xf] %v4136
      %4233 = vst [vmem:[%s302 + $0x70] sm:$0xf] %v4137
      %4234 = vst [vmem:[%s302 + $0x74] sm:$0xf] %v4138
      %4235 = vst [vmem:[%s302 + $0x78] sm:$0xf] %v4139
      %4236 = vst [vmem:[%s302 + $0x7c] sm:$0xf] %v4140
      %4237 = vst [vmem:[%s302 + $0x80] sm:$0xf] %v4141
      %4238 = vst [vmem:[%s302 + $0x84] sm:$0xf] %v4142
      %4239 = vst [vmem:[%s302 + $0x88] sm:$0xf] %v4143
      %4240 = vst [vmem:[%s302 + $0x8c] sm:$0xf] %v4144
      %4241 = vst [vmem:[%s302 + $0x90] sm:$0xf] %v4145
      %4242 = vst [vmem:[%s302 + $0x94] sm:$0xf] %v4146
      %4243 = vst [vmem:[%s302 + $0x98] sm:$0xf] %v4147
      %4244 = vst [vmem:[%s302 + $0x9c] sm:$0xf] %v4148
      %4245 = vst [vmem:[%s302 + $0xa0] sm:$0xf] %v4149
      %4246 = vst [vmem:[%s302 + $0xa4] sm:$0xf] %v4150
      %4247 = vst [vmem:[%s302 + $0xa8] sm:$0xf] %v4151
      %4248 = vst [vmem:[%s302 + $0xac] sm:$0xf] %v4152
      %4249 = vst [vmem:[%s302 + $0xb0] sm:$0xf] %v4153
      %4250 = vst [vmem:[%s302 + $0xb4] sm:$0xf] %v4154
      %4251 = vst [vmem:[%s302 + $0xb8] sm:$0xf] %v4155
      %4252 = vst [vmem:[%s302 + $0xbc] sm:$0xf] %v4156
      %p4253 = scmp.lt.s32.totalorder %s21, 1
      %s4254 = scalar_select %p4253, %s21, 1
      %p4255 = scmp.lt.s32.totalorder %s22, 0
      %s4256 = scalar_select %p4255, %s22, 0
      %s4257 = smul.addr %s4254, 48
      %s4258 = sadd.s32 %s4256, %s4257
      %s4259 = smul.addr %s4258, 4
      %s4260 = scalar_lea.vmem %s6, %s4259
      // Predicated region
      $region45: #{spade_forward.4} parent=43 // pred_check
        %p4261 = pneg %p190
      $region46: #{spade_forward.4} parent=43 // pred_check_branch
        %4263 = sbr.rel (%p4261) target = $region48
      $region47: #{spade_forward.4} parent=43 // pred_region
        _
      $region48: #{spade_forward.4} parent=43 // pred_fallthru
        _
    $region44: #{spade_forward.4} parent=5 // pred_fallthru
      _
    %p4264 = scmp.le.s32.totalorder 2, %s12
    // Predicated region
    $region49: #{spade_forward.4} parent=5 // pred_check
      %p4265 = pneg %p4264
    $region50: #{spade_forward.4} parent=5 // pred_check_branch
      %4267 = sbr.rel (%p4265) target = $region52
    $region51: #{spade_forward.4} parent=5 // pred_region
      %s4268 = ssub.s32 %s12, 2
      // Predicated region
      $region53: #{spade_forward.4} parent=51 // pred_check
        %p4269 = pneg %p196
      $region54: #{spade_forward.4} parent=51 // pred_check_branch
        %4271 = sbr.rel (%p4269) target = $region56
      $region55: #{spade_forward.4} parent=51 // pred_region
        %p4272 = scmp.lt.s32.totalorder %s23, 1
        %s4273 = scalar_select %p4272, %s23, 1
        %p4274 = scmp.lt.s32.totalorder %s24, 0
        %s4275 = scalar_select %p4274, %s24, 0
        %s4276 = smul.addr %s4273, 48
        %s4277 = sadd.s32 %s4275, %s4276
        %s4278 = smul.addr %s4277, 4
        %s4279 = scalar_lea.vmem %s6, %s4278
      $region56: #{spade_forward.4} parent=51 // pred_fallthru
        _
    $region52: #{spade_forward.4} parent=5 // pred_fallthru
      _
  $region6: #{spade_forward.4} parent=0 // loop_footer
    %s16 = sadd.s32 1, %s12
  $region7: #{spade_forward.4} parent=0 // loop_footer_branch
    %11 = sbr.rel target = $region3
  $region8: #{spade_forward.4} parent=0 // loop_exit
    _

</llo_original>
